<compile_context>
chip_gen: v6e
topology: v6e:2x2x1
jax: 0.10.0
libtpu: 0.0.40
codegen_flags: <defaults>
</compile_context>

<pallas_src>
from functools import partial

import jax
import jax.numpy as jnp
from jax import lax
from jax.experimental import pallas as pl
from jax.experimental.pallas import tpu as pltpu

EPS = 1e-5


def _round_up(x, m):
    return (x + m - 1) // m * m


def _vmem_budget_bytes():
    # ~80% of physical VMEM leaves headroom for Mosaic internal scratch and the
    # double-buffered pipeline (v7x: ~51/64 MiB; v5e/v6e: ~102/128 MiB).
    try:
        cap = pltpu.get_tpu_info().vmem_capacity_bytes
        return int(cap * 0.8)
    except Exception:
        return 48 * 1024 * 1024


def _resblock_kernel(mask_ref, x_ref, w13_ref, w2_ref, o_ref,
                     p1_ref, p2_ref, y1e_ref, *, offsets, margin, inv_v):
    """Fused ResBlock forward for one sample.

    q-frame: q in [0, Vq) indexes the flattened zero-padded volume (row-major
    Dp*Hp*Wp, lane-padded to a multiple of 128). `mask` is 1.0 exactly at the
    V = D*H*W interior voxels. A 3x3x3 conv tap at (kd,kh,kw) is a flat shift
    by `offsets[t]`, so im2col is 27 lane-shifted slices of the extended input.
    """
    cout = o_ref.shape[1]
    cin = w13_ref.shape[1] // 27
    vq = o_ref.shape[2]
    lext = y1e_ref.shape[1]
    mask = mask_ref[...]                                  # (1, Vq) f32

    # Clear only the halo regions of the padded intermediate (front margin and
    # tail); the interior [margin, margin+vq) is fully overwritten below.
    # Done every step (cheap: Cout x ~2*128 bf16) so it is correct even when
    # the "parallel" grid axis is sharded across TensorCores with per-core
    # scratch (a program_id==0 one-shot would be skipped on the second core).
    y1e_ref[:, :margin] = jnp.zeros((cout, margin), y1e_ref.dtype)
    y1e_ref[:, margin + vq:] = jnp.zeros((cout, lext - margin - vq),
                                         y1e_ref.dtype)

    def in_relu(y):                                       # y: (R, Vq) f32
        # One-pass InstanceNorm statistics (biased variance over the V interior
        # voxels), then a single fused normalize+ReLU+mask pass.  Output is
        # zero outside the interior (required before it feeds conv2).
        ym = y * mask
        s1 = jnp.sum(ym, axis=1, keepdims=True)
        s2 = jnp.sum(ym * y, axis=1, keepdims=True)
        mean = s1 * inv_v
        var = jnp.maximum(s2 * inv_v - mean * mean, 0.0)
        scale = lax.rsqrt(var + EPS)
        return jnp.maximum((y - mean) * scale, 0.0) * mask

    # ---- conv1 (3x3x3) + channel_expand (1x1x1) in ONE MXU matmul -----------
    # w13 rows [0:Cout] are the 27-tap conv1 weights; rows [Cout:2Cout] are the
    # 1x1x1 branch placed on the centre-tap columns of the same im2col RHS.
    for t, off in enumerate(offsets):
        p1_ref[t * cin:(t + 1) * cin, :] = \
            x_ref[0, :, margin + off:margin + off + vq]
    y13 = in_relu(jnp.dot(w13_ref[...], p1_ref[...],
                          preferred_element_type=jnp.float32))
    y1 = y13[:cout]          # IN+ReLU(conv1(x))
    y3 = y13[cout:]          # IN+ReLU(channel_expand(x))

    # Zero-padded intermediate stays in VMEM scratch (no HBM round trip).
    y1e_ref[:, margin:margin + vq] = y1.astype(y1e_ref.dtype)

    # ---- conv2 (3x3x3, pad 1) on the intermediate ----------------------------
    for t, off in enumerate(offsets):
        p2_ref[t * cout:(t + 1) * cout, :] = \
            y1e_ref[:, margin + off:margin + off + vq]
    y2 = in_relu(jnp.dot(w2_ref[...], p2_ref[...],
                         preferred_element_type=jnp.float32))

    # ---- residual add --------------------------------------------------------
    o_ref[...] = (y2 + y3).reshape(1, cout, vq)


def res_block_pallas(x_ncdhw, params):
    """ResBlock forward. x_ncdhw: (N, Cin, D, H, W) -> (N, Cout, D, H, W)."""
    w1, b1, w2, b2, w3, b3 = params
    # Biases are mathematically dead: non-affine InstanceNorm removes any
    # per-channel constant added by the preceding conv. Drop them.
    del b1, b2, b3

    N, Cin, D, H, W = x_ncdhw.shape
    Cout = w1.shape[0]
    Dp, Hp, Wp = D + 2, H + 2, W + 2
    Vp = Dp * Hp * Wp                      # flattened padded volume
    V = D * H * W                          # interior voxel count (IN denominator)
    M = Hp * Wp + Wp + 1                   # max |flat offset| of a 3x3x3 tap
    Vq = _round_up(Vp, 128)                # lane-dense compute width
    margin = _round_up(M, 128)             # front margin (aligned) for negative taps
    Lext = _round_up(margin + M + Vq, 128)

    offsets = tuple((kd - 1) * Hp * Wp + (kh - 1) * Wp + (kw - 1)
                    for kd in range(3) for kh in range(3) for kw in range(3))

    # Channel-major, flat, zero-extended input. Cast to bf16 BEFORE padding so
    # the XLA-side pad/reshape chain moves half the bytes.
    xb = x_ncdhw.astype(jnp.bfloat16)
    xp = jnp.pad(xb, ((0, 0), (0, 0), (1, 1), (1, 1), (1, 1)))
    x_ext = jnp.pad(xp.reshape(N, Cin, Vp),
                    ((0, 0), (0, 0), (margin, Lext - margin - Vp)))

    # Interior-voxel mask over the q-frame [0, Vq).
    q = jnp.arange(Vq)
    d = q // (Hp * Wp)
    r = q % (Hp * Wp)
    h = r // Wp
    w = r % Wp
    interior = ((q < Vp) & (d >= 1) & (d <= Dp - 2) &
                (h >= 1) & (h <= Hp - 2) & (w >= 1) & (w <= Wp - 2))
    mask = interior.astype(jnp.float32).reshape(1, Vq)

    # conv1 taps flattened to (Cout, 27*Cin), K index = tap*Cin + c with
    # tap = kd*9 + kh*3 + kw (matches `offsets`). The 1x1x1 branch is stacked
    # below it on the centre-tap (tap 13) columns -> one fused matmul LHS.
    w1m = jnp.transpose(w1, (0, 2, 3, 4, 1)).reshape(Cout, 27 * Cin)
    w3m = w3.reshape(Cout, Cin)
    w3row = jnp.zeros((Cout, 27 * Cin), w1m.dtype)
    w3row = w3row.at[:, 13 * Cin:14 * Cin].set(w3m)
    w13 = jnp.concatenate([w1m, w3row], axis=0).astype(jnp.bfloat16)  # (2Cout, 27Cin)
    w2m = jnp.transpose(w2, (0, 2, 3, 4, 1)).reshape(Cout, 27 * Cout).astype(jnp.bfloat16)

    kernel = partial(_resblock_kernel, offsets=offsets, margin=margin,
                     inv_v=1.0 / float(V))

    flops = int(N * Vq * 2 * ((2 * Cout) * 27 * Cin + Cout * 27 * Cout))
    transcendentals = int(N * 3 * Cout)
    bytes_accessed = int(x_ext.size * 2 + mask.size * 4 + w13.size * 2
                         + w2m.size * 2 + N * Cout * Vq * 4)

    out_q = pl.pallas_call(
        kernel,
        out_shape=jax.ShapeDtypeStruct((N, Cout, Vq), jnp.float32),
        grid=(N,),
        in_specs=[
            pl.BlockSpec((1, Vq), lambda n: (0, 0)),                    # mask
            pl.BlockSpec((1, Cin, Lext), lambda n: (n, 0, 0)),          # x_ext
            pl.BlockSpec((2 * Cout, 27 * Cin), lambda n: (0, 0)),       # w1 + w3
            pl.BlockSpec((Cout, 27 * Cout), lambda n: (0, 0)),          # w2
        ],
        out_specs=pl.BlockSpec((1, Cout, Vq), lambda n: (n, 0, 0)),
        scratch_shapes=[
            pltpu.VMEM((27 * Cin, Vq), jnp.bfloat16),    # im2col for conv1/expand
            pltpu.VMEM((27 * Cout, Vq), jnp.bfloat16),   # im2col for conv2
            pltpu.VMEM((Cout, Lext), jnp.bfloat16),      # zero-padded intermediate
        ],
        compiler_params=pltpu.CompilerParams(
            dimension_semantics=("parallel",),
            vmem_limit_bytes=_vmem_budget_bytes(),
        ),
        cost_estimate=pl.CostEstimate(flops=flops,
                                      transcendentals=transcendentals,
                                      bytes_accessed=bytes_accessed),
    )(mask, x_ext, w13, w2m)

    # Drop the lane padding + zero ring; result is already channel-major NCDHW.
    # (When chaining ResBlocks, keep the padded q-layout instead and only
    # unpad at network boundaries.)
    out = out_q[:, :, :Vp].reshape(N, Cout, Dp, Hp, Wp)
    return out[:, :, 1:-1, 1:-1, 1:-1]


def res_block_ref(x, params):
    """Pure-JAX f32 reference mirroring the PyTorch module (NCDHW)."""
    w1, b1, w2, b2, w3, b3 = params
    dn = ('NCDHW', 'OIDHW', 'NCDHW')

    def conv(a, w, b, pad):
        y = lax.conv_general_dilated(a, w, (1, 1, 1), ((pad, pad),) * 3,
                                     dimension_numbers=dn)
        return y + b.reshape(1, -1, 1, 1, 1)

    def in_relu(y):
        mean = jnp.mean(y, axis=(2, 3, 4), keepdims=True)
        var = jnp.mean((y - mean) ** 2, axis=(2, 3, 4), keepdims=True)
        return jnp.maximum((y - mean) * lax.rsqrt(var + EPS), 0.0)

    y = in_relu(conv(x, w1, b1, 1))
    y = in_relu(conv(y, w2, b2, 1))
    z = in_relu(conv(x, w3, b3, 0))
    return y + z


if __name__ == "__main__":
    N, Cin, Cout = 2, 4, 8
    D = H = W = 8

    key = jax.random.PRNGKey(0)
    kx, k1, k2, k3, k4, k5, k6 = jax.random.split(key, 7)

    x = jax.random.normal(kx, (N, Cin, D, H, W), dtype=jnp.float32)

    # Deterministic synthetic parameters (PyTorch Conv3d layouts).
    w1 = 0.1 * jax.random.normal(k1, (Cout, Cin, 3, 3, 3), dtype=jnp.float32)
    b1 = 0.1 * jax.random.normal(k2, (Cout,), dtype=jnp.float32)
    w2 = 0.1 * jax.random.normal(k3, (Cout, Cout, 3, 3, 3), dtype=jnp.float32)
    b2 = 0.1 * jax.random.normal(k4, (Cout,), dtype=jnp.float32)
    w3 = 0.1 * jax.random.normal(k5, (Cout, Cin, 1, 1, 1), dtype=jnp.float32)
    b3 = 0.1 * jax.random.normal(k6, (Cout,), dtype=jnp.float32)
    params = (w1, b1, w2, b2, w3, b3)

    out = jax.block_until_ready(res_block_pallas(x, params))
    ref = jax.block_until_ready(res_block_ref(x, params))

    assert out.shape == (N, Cout, D, H, W), out.shape
    # bf16 matmul operands / bf16 intermediate -> looser tolerance vs f32 ref.
    if not jnp.allclose(out, ref, atol=5e-2, rtol=5e-2):
        raise AssertionError(
            f"mismatch vs reference, max abs err = {jnp.max(jnp.abs(out - ref))}")

    print("KERNEL_OK")
</pallas_src>

<mosaic_0001>
module attributes {stable_mosaic.version = 11 : i64} {
  func.func @_resblock_kernel(%arg0: i32, %arg1: memref<1x1024xf32, #tpu.memory_space<vmem>>, %arg2: memref<1x4x1280xbf16, #tpu.memory_space<vmem>>, %arg3: memref<16x108xbf16, #tpu.memory_space<vmem>>, %arg4: memref<8x216xbf16, #tpu.memory_space<vmem>>, %arg5: memref<1x8x1024xf32, #tpu.memory_space<vmem>>, %arg6: memref<108x1024xbf16, #tpu.memory_space<vmem>>, %arg7: memref<216x1024xbf16, #tpu.memory_space<vmem>>, %arg8: memref<8x1280xbf16, #tpu.memory_space<vmem>>) attributes {dimension_semantics = [#tpu.dimension_semantics<parallel>], iteration_bounds = array<i64: 2>, scalar_prefetch = 0 : i64, scratch_operands = 3 : i64, tpu.core_type = #tpu.core_type<tc>, window_params = [{pipeline_mode = #tpu.pipeline_mode<synchronous>, transform_indices = @transform_0, window_bounds = array<i64: 1, 1024>}, {transform_indices = @transform_1, window_bounds = array<i64: 1, 4, 1280>}, {pipeline_mode = #tpu.pipeline_mode<synchronous>, transform_indices = @transform_2, window_bounds = array<i64: 16, 108>}, {pipeline_mode = #tpu.pipeline_mode<synchronous>, transform_indices = @transform_3, window_bounds = array<i64: 8, 216>}, {transform_indices = @transform_4, window_bounds = array<i64: 1, 8, 1024>}]} {
    %c0 = arith.constant 0 : index
    %c0_0 = arith.constant 0 : index
    %0 = vector.load %arg1[%c0, %c0_0] : memref<1x1024xf32, #tpu.memory_space<vmem>>, vector<1x1024xf32>
    %cst = arith.constant 0.000000e+00 : bf16
    %1 = vector.broadcast %cst : bf16 to vector<8x128xbf16>
    %c0_1 = arith.constant 0 : index
    %c0_2 = arith.constant 0 : index
    %2 = vector.load %arg8[%c0_1, %c0_2] : memref<8x1280xbf16, #tpu.memory_space<vmem>>, vector<8x128xbf16>
    tpu.vector_store %arg8[%c0_1, %c0_2], %1 {strides = array<i32>} : memref<8x1280xbf16, #tpu.memory_space<vmem>>, vector<8x128xbf16>,
    %cst_3 = arith.constant 0.000000e+00 : bf16
    %3 = vector.broadcast %cst_3 : bf16 to vector<8x128xbf16>
    %c0_4 = arith.constant 0 : index
    %c1152 = arith.constant 1152 : index
    %4 = vector.load %arg8[%c0_4, %c1152] : memref<8x1280xbf16, #tpu.memory_space<vmem>>, vector<8x128xbf16>
    tpu.vector_store %arg8[%c0_4, %c1152], %3 {strides = array<i32>} : memref<8x1280xbf16, #tpu.memory_space<vmem>>, vector<8x128xbf16>,
    %c0_5 = arith.constant 0 : index
    %c0_6 = arith.constant 0 : index
    %c17 = arith.constant 17 : index
    %5 = vector.load %arg2[%c0_5, %c0_6, %c17] : memref<1x4x1280xbf16, #tpu.memory_space<vmem>>, vector<1x4x1024xbf16>
    %6 = vector.shape_cast %5 : vector<1x4x1024xbf16> to vector<4x1024xbf16>
    %c0_7 = arith.constant 0 : index
    %c0_8 = arith.constant 0 : index
    %7 = vector.load %arg6[%c0_7, %c0_8] : memref<108x1024xbf16, #tpu.memory_space<vmem>>, vector<4x1024xbf16>
    tpu.vector_store %arg6[%c0_7, %c0_8], %6 {strides = array<i32>} : memref<108x1024xbf16, #tpu.memory_space<vmem>>, vector<4x1024xbf16>,
    %c0_9 = arith.constant 0 : index
    %c0_10 = arith.constant 0 : index
    %c18 = arith.constant 18 : index
    %8 = vector.load %arg2[%c0_9, %c0_10, %c18] : memref<1x4x1280xbf16, #tpu.memory_space<vmem>>, vector<1x4x1024xbf16>
    %9 = vector.shape_cast %8 : vector<1x4x1024xbf16> to vector<4x1024xbf16>
    %c4 = arith.constant 4 : index
    %c0_11 = arith.constant 0 : index
    %10 = vector.load %arg6[%c4, %c0_11] : memref<108x1024xbf16, #tpu.memory_space<vmem>>, vector<4x1024xbf16>
    tpu.vector_store %arg6[%c4, %c0_11], %9 {strides = array<i32>} : memref<108x1024xbf16, #tpu.memory_space<vmem>>, vector<4x1024xbf16>,
    %c0_12 = arith.constant 0 : index
    %c0_13 = arith.constant 0 : index
    %c19 = arith.constant 19 : index
    %11 = vector.load %arg2[%c0_12, %c0_13, %c19] : memref<1x4x1280xbf16, #tpu.memory_space<vmem>>, vector<1x4x1024xbf16>
    %12 = vector.shape_cast %11 : vector<1x4x1024xbf16> to vector<4x1024xbf16>
    %c8 = arith.constant 8 : index
    %c0_14 = arith.constant 0 : index
    %13 = vector.load %arg6[%c8, %c0_14] : memref<108x1024xbf16, #tpu.memory_space<vmem>>, vector<4x1024xbf16>
    tpu.vector_store %arg6[%c8, %c0_14], %12 {strides = array<i32>} : memref<108x1024xbf16, #tpu.memory_space<vmem>>, vector<4x1024xbf16>,
    %c0_15 = arith.constant 0 : index
    %c0_16 = arith.constant 0 : index
    %c27 = arith.constant 27 : index
    %14 = vector.load %arg2[%c0_15, %c0_16, %c27] : memref<1x4x1280xbf16, #tpu.memory_space<vmem>>, vector<1x4x1024xbf16>
    %15 = vector.shape_cast %14 : vector<1x4x1024xbf16> to vector<4x1024xbf16>
    %c12 = arith.constant 12 : index
    %c0_17 = arith.constant 0 : index
    %16 = vector.load %arg6[%c12, %c0_17] : memref<108x1024xbf16, #tpu.memory_space<vmem>>, vector<4x1024xbf16>
    tpu.vector_store %arg6[%c12, %c0_17], %15 {strides = array<i32>} : memref<108x1024xbf16, #tpu.memory_space<vmem>>, vector<4x1024xbf16>,
    %c0_18 = arith.constant 0 : index
    %c0_19 = arith.constant 0 : index
    %c28 = arith.constant 28 : index
    %17 = vector.load %arg2[%c0_18, %c0_19, %c28] : memref<1x4x1280xbf16, #tpu.memory_space<vmem>>, vector<1x4x1024xbf16>
    %18 = vector.shape_cast %17 : vector<1x4x1024xbf16> to vector<4x1024xbf16>
    %c16 = arith.constant 16 : index
    %c0_20 = arith.constant 0 : index
    %19 = vector.load %arg6[%c16, %c0_20] : memref<108x1024xbf16, #tpu.memory_space<vmem>>, vector<4x1024xbf16>
    tpu.vector_store %arg6[%c16, %c0_20], %18 {strides = array<i32>} : memref<108x1024xbf16, #tpu.memory_space<vmem>>, vector<4x1024xbf16>,
    %c0_21 = arith.constant 0 : index
    %c0_22 = arith.constant 0 : index
    %c29 = arith.constant 29 : index
    %20 = vector.load %arg2[%c0_21, %c0_22, %c29] : memref<1x4x1280xbf16, #tpu.memory_space<vmem>>, vector<1x4x1024xbf16>
    %21 = vector.shape_cast %20 : vector<1x4x1024xbf16> to vector<4x1024xbf16>
    %c20 = arith.constant 20 : index
    %c0_23 = arith.constant 0 : index
    %22 = vector.load %arg6[%c20, %c0_23] : memref<108x1024xbf16, #tpu.memory_space<vmem>>, vector<4x1024xbf16>
    tpu.vector_store %arg6[%c20, %c0_23], %21 {strides = array<i32>} : memref<108x1024xbf16, #tpu.memory_space<vmem>>, vector<4x1024xbf16>,
    %c0_24 = arith.constant 0 : index
    %c0_25 = arith.constant 0 : index
    %c37 = arith.constant 37 : index
    %23 = vector.load %arg2[%c0_24, %c0_25, %c37] : memref<1x4x1280xbf16, #tpu.memory_space<vmem>>, vector<1x4x1024xbf16>
    %24 = vector.shape_cast %23 : vector<1x4x1024xbf16> to vector<4x1024xbf16>
    %c24 = arith.constant 24 : index
    %c0_26 = arith.constant 0 : index
    %25 = vector.load %arg6[%c24, %c0_26] : memref<108x1024xbf16, #tpu.memory_space<vmem>>, vector<4x1024xbf16>
    tpu.vector_store %arg6[%c24, %c0_26], %24 {strides = array<i32>} : memref<108x1024xbf16, #tpu.memory_space<vmem>>, vector<4x1024xbf16>,
    %c0_27 = arith.constant 0 : index
    %c0_28 = arith.constant 0 : index
    %c38 = arith.constant 38 : index
    %26 = vector.load %arg2[%c0_27, %c0_28, %c38] : memref<1x4x1280xbf16, #tpu.memory_space<vmem>>, vector<1x4x1024xbf16>
    %27 = vector.shape_cast %26 : vector<1x4x1024xbf16> to vector<4x1024xbf16>
    %c28_29 = arith.constant 28 : index
    %c0_30 = arith.constant 0 : index
    %28 = vector.load %arg6[%c28_29, %c0_30] : memref<108x1024xbf16, #tpu.memory_space<vmem>>, vector<4x1024xbf16>
    tpu.vector_store %arg6[%c28_29, %c0_30], %27 {strides = array<i32>} : memref<108x1024xbf16, #tpu.memory_space<vmem>>, vector<4x1024xbf16>,
    %c0_31 = arith.constant 0 : index
    %c0_32 = arith.constant 0 : index
    %c39 = arith.constant 39 : index
    %29 = vector.load %arg2[%c0_31, %c0_32, %c39] : memref<1x4x1280xbf16, #tpu.memory_space<vmem>>, vector<1x4x1024xbf16>
    %30 = vector.shape_cast %29 : vector<1x4x1024xbf16> to vector<4x1024xbf16>
    %c32 = arith.constant 32 : index
    %c0_33 = arith.constant 0 : index
    %31 = vector.load %arg6[%c32, %c0_33] : memref<108x1024xbf16, #tpu.memory_space<vmem>>, vector<4x1024xbf16>
    tpu.vector_store %arg6[%c32, %c0_33], %30 {strides = array<i32>} : memref<108x1024xbf16, #tpu.memory_space<vmem>>, vector<4x1024xbf16>,
    %c0_34 = arith.constant 0 : index
    %c0_35 = arith.constant 0 : index
    %c117 = arith.constant 117 : index
    %32 = vector.load %arg2[%c0_34, %c0_35, %c117] : memref<1x4x1280xbf16, #tpu.memory_space<vmem>>, vector<1x4x1024xbf16>
    %33 = vector.shape_cast %32 : vector<1x4x1024xbf16> to vector<4x1024xbf16>
    %c36 = arith.constant 36 : index
    %c0_36 = arith.constant 0 : index
    %34 = vector.load %arg6[%c36, %c0_36] : memref<108x1024xbf16, #tpu.memory_space<vmem>>, vector<4x1024xbf16>
    tpu.vector_store %arg6[%c36, %c0_36], %33 {strides = array<i32>} : memref<108x1024xbf16, #tpu.memory_space<vmem>>, vector<4x1024xbf16>,
    %c0_37 = arith.constant 0 : index
    %c0_38 = arith.constant 0 : index
    %c118 = arith.constant 118 : index
    %35 = vector.load %arg2[%c0_37, %c0_38, %c118] : memref<1x4x1280xbf16, #tpu.memory_space<vmem>>, vector<1x4x1024xbf16>
    %36 = vector.shape_cast %35 : vector<1x4x1024xbf16> to vector<4x1024xbf16>
    %c40 = arith.constant 40 : index
    %c0_39 = arith.constant 0 : index
    %37 = vector.load %arg6[%c40, %c0_39] : memref<108x1024xbf16, #tpu.memory_space<vmem>>, vector<4x1024xbf16>
    tpu.vector_store %arg6[%c40, %c0_39], %36 {strides = array<i32>} : memref<108x1024xbf16, #tpu.memory_space<vmem>>, vector<4x1024xbf16>,
    %c0_40 = arith.constant 0 : index
    %c0_41 = arith.constant 0 : index
    %c119 = arith.constant 119 : index
    %38 = vector.load %arg2[%c0_40, %c0_41, %c119] : memref<1x4x1280xbf16, #tpu.memory_space<vmem>>, vector<1x4x1024xbf16>
    %39 = vector.shape_cast %38 : vector<1x4x1024xbf16> to vector<4x1024xbf16>
    %c44 = arith.constant 44 : index
    %c0_42 = arith.constant 0 : index
    %40 = vector.load %arg6[%c44, %c0_42] : memref<108x1024xbf16, #tpu.memory_space<vmem>>, vector<4x1024xbf16>
    tpu.vector_store %arg6[%c44, %c0_42], %39 {strides = array<i32>} : memref<108x1024xbf16, #tpu.memory_space<vmem>>, vector<4x1024xbf16>,
    %c0_43 = arith.constant 0 : index
    %c0_44 = arith.constant 0 : index
    %c127 = arith.constant 127 : index
    %41 = vector.load %arg2[%c0_43, %c0_44, %c127] : memref<1x4x1280xbf16, #tpu.memory_space<vmem>>, vector<1x4x1024xbf16>
    %42 = vector.shape_cast %41 : vector<1x4x1024xbf16> to vector<4x1024xbf16>
    %c48 = arith.constant 48 : index
    %c0_45 = arith.constant 0 : index
    %43 = vector.load %arg6[%c48, %c0_45] : memref<108x1024xbf16, #tpu.memory_space<vmem>>, vector<4x1024xbf16>
    tpu.vector_store %arg6[%c48, %c0_45], %42 {strides = array<i32>} : memref<108x1024xbf16, #tpu.memory_space<vmem>>, vector<4x1024xbf16>,
    %c0_46 = arith.constant 0 : index
    %c0_47 = arith.constant 0 : index
    %c128 = arith.constant 128 : index
    %44 = vector.load %arg2[%c0_46, %c0_47, %c128] : memref<1x4x1280xbf16, #tpu.memory_space<vmem>>, vector<1x4x1024xbf16>
    %45 = vector.shape_cast %44 : vector<1x4x1024xbf16> to vector<4x1024xbf16>
    %c52 = arith.constant 52 : index
    %c0_48 = arith.constant 0 : index
    %46 = vector.load %arg6[%c52, %c0_48] : memref<108x1024xbf16, #tpu.memory_space<vmem>>, vector<4x1024xbf16>
    tpu.vector_store %arg6[%c52, %c0_48], %45 {strides = array<i32>} : memref<108x1024xbf16, #tpu.memory_space<vmem>>, vector<4x1024xbf16>,
    %c0_49 = arith.constant 0 : index
    %c0_50 = arith.constant 0 : index
    %c129 = arith.constant 129 : index
    %47 = vector.load %arg2[%c0_49, %c0_50, %c129] : memref<1x4x1280xbf16, #tpu.memory_space<vmem>>, vector<1x4x1024xbf16>
    %48 = vector.shape_cast %47 : vector<1x4x1024xbf16> to vector<4x1024xbf16>
    %c56 = arith.constant 56 : index
    %c0_51 = arith.constant 0 : index
    %49 = vector.load %arg6[%c56, %c0_51] : memref<108x1024xbf16, #tpu.memory_space<vmem>>, vector<4x1024xbf16>
    tpu.vector_store %arg6[%c56, %c0_51], %48 {strides = array<i32>} : memref<108x1024xbf16, #tpu.memory_space<vmem>>, vector<4x1024xbf16>,
    %c0_52 = arith.constant 0 : index
    %c0_53 = arith.constant 0 : index
    %c137 = arith.constant 137 : index
    %50 = vector.load %arg2[%c0_52, %c0_53, %c137] : memref<1x4x1280xbf16, #tpu.memory_space<vmem>>, vector<1x4x1024xbf16>
    %51 = vector.shape_cast %50 : vector<1x4x1024xbf16> to vector<4x1024xbf16>
    %c60 = arith.constant 60 : index
    %c0_54 = arith.constant 0 : index
    %52 = vector.load %arg6[%c60, %c0_54] : memref<108x1024xbf16, #tpu.memory_space<vmem>>, vector<4x1024xbf16>
    tpu.vector_store %arg6[%c60, %c0_54], %51 {strides = array<i32>} : memref<108x1024xbf16, #tpu.memory_space<vmem>>, vector<4x1024xbf16>,
    %c0_55 = arith.constant 0 : index
    %c0_56 = arith.constant 0 : index
    %c138 = arith.constant 138 : index
    %53 = vector.load %arg2[%c0_55, %c0_56, %c138] : memref<1x4x1280xbf16, #tpu.memory_space<vmem>>, vector<1x4x1024xbf16>
    %54 = vector.shape_cast %53 : vector<1x4x1024xbf16> to vector<4x1024xbf16>
    %c64 = arith.constant 64 : index
    %c0_57 = arith.constant 0 : index
    %55 = vector.load %arg6[%c64, %c0_57] : memref<108x1024xbf16, #tpu.memory_space<vmem>>, vector<4x1024xbf16>
    tpu.vector_store %arg6[%c64, %c0_57], %54 {strides = array<i32>} : memref<108x1024xbf16, #tpu.memory_space<vmem>>, vector<4x1024xbf16>,
    %c0_58 = arith.constant 0 : index
    %c0_59 = arith.constant 0 : index
    %c139 = arith.constant 139 : index
    %56 = vector.load %arg2[%c0_58, %c0_59, %c139] : memref<1x4x1280xbf16, #tpu.memory_space<vmem>>, vector<1x4x1024xbf16>
    %57 = vector.shape_cast %56 : vector<1x4x1024xbf16> to vector<4x1024xbf16>
    %c68 = arith.constant 68 : index
    %c0_60 = arith.constant 0 : index
    %58 = vector.load %arg6[%c68, %c0_60] : memref<108x1024xbf16, #tpu.memory_space<vmem>>, vector<4x1024xbf16>
    tpu.vector_store %arg6[%c68, %c0_60], %57 {strides = array<i32>} : memref<108x1024xbf16, #tpu.memory_space<vmem>>, vector<4x1024xbf16>,
    %c0_61 = arith.constant 0 : index
    %c0_62 = arith.constant 0 : index
    %c217 = arith.constant 217 : index
    %59 = vector.load %arg2[%c0_61, %c0_62, %c217] : memref<1x4x1280xbf16, #tpu.memory_space<vmem>>, vector<1x4x1024xbf16>
    %60 = vector.shape_cast %59 : vector<1x4x1024xbf16> to vector<4x1024xbf16>
    %c72 = arith.constant 72 : index
    %c0_63 = arith.constant 0 : index
    %61 = vector.load %arg6[%c72, %c0_63] : memref<108x1024xbf16, #tpu.memory_space<vmem>>, vector<4x1024xbf16>
    tpu.vector_store %arg6[%c72, %c0_63], %60 {strides = array<i32>} : memref<108x1024xbf16, #tpu.memory_space<vmem>>, vector<4x1024xbf16>,
    %c0_64 = arith.constant 0 : index
    %c0_65 = arith.constant 0 : index
    %c218 = arith.constant 218 : index
    %62 = vector.load %arg2[%c0_64, %c0_65, %c218] : memref<1x4x1280xbf16, #tpu.memory_space<vmem>>, vector<1x4x1024xbf16>
    %63 = vector.shape_cast %62 : vector<1x4x1024xbf16> to vector<4x1024xbf16>
    %c76 = arith.constant 76 : index
    %c0_66 = arith.constant 0 : index
    %64 = vector.load %arg6[%c76, %c0_66] : memref<108x1024xbf16, #tpu.memory_space<vmem>>, vector<4x1024xbf16>
    tpu.vector_store %arg6[%c76, %c0_66], %63 {strides = array<i32>} : memref<108x1024xbf16, #tpu.memory_space<vmem>>, vector<4x1024xbf16>,
    %c0_67 = arith.constant 0 : index
    %c0_68 = arith.constant 0 : index
    %c219 = arith.constant 219 : index
    %65 = vector.load %arg2[%c0_67, %c0_68, %c219] : memref<1x4x1280xbf16, #tpu.memory_space<vmem>>, vector<1x4x1024xbf16>
    %66 = vector.shape_cast %65 : vector<1x4x1024xbf16> to vector<4x1024xbf16>
    %c80 = arith.constant 80 : index
    %c0_69 = arith.constant 0 : index
    %67 = vector.load %arg6[%c80, %c0_69] : memref<108x1024xbf16, #tpu.memory_space<vmem>>, vector<4x1024xbf16>
    tpu.vector_store %arg6[%c80, %c0_69], %66 {strides = array<i32>} : memref<108x1024xbf16, #tpu.memory_space<vmem>>, vector<4x1024xbf16>,
    %c0_70 = arith.constant 0 : index
    %c0_71 = arith.constant 0 : index
    %c227 = arith.constant 227 : index
    %68 = vector.load %arg2[%c0_70, %c0_71, %c227] : memref<1x4x1280xbf16, #tpu.memory_space<vmem>>, vector<1x4x1024xbf16>
    %69 = vector.shape_cast %68 : vector<1x4x1024xbf16> to vector<4x1024xbf16>
    %c84 = arith.constant 84 : index
    %c0_72 = arith.constant 0 : index
    %70 = vector.load %arg6[%c84, %c0_72] : memref<108x1024xbf16, #tpu.memory_space<vmem>>, vector<4x1024xbf16>
    tpu.vector_store %arg6[%c84, %c0_72], %69 {strides = array<i32>} : memref<108x1024xbf16, #tpu.memory_space<vmem>>, vector<4x1024xbf16>,
    %c0_73 = arith.constant 0 : index
    %c0_74 = arith.constant 0 : index
    %c228 = arith.constant 228 : index
    %71 = vector.load %arg2[%c0_73, %c0_74, %c228] : memref<1x4x1280xbf16, #tpu.memory_space<vmem>>, vector<1x4x1024xbf16>
    %72 = vector.shape_cast %71 : vector<1x4x1024xbf16> to vector<4x1024xbf16>
    %c88 = arith.constant 88 : index
    %c0_75 = arith.constant 0 : index
    %73 = vector.load %arg6[%c88, %c0_75] : memref<108x1024xbf16, #tpu.memory_space<vmem>>, vector<4x1024xbf16>
    tpu.vector_store %arg6[%c88, %c0_75], %72 {strides = array<i32>} : memref<108x1024xbf16, #tpu.memory_space<vmem>>, vector<4x1024xbf16>,
    %c0_76 = arith.constant 0 : index
    %c0_77 = arith.constant 0 : index
    %c229 = arith.constant 229 : index
    %74 = vector.load %arg2[%c0_76, %c0_77, %c229] : memref<1x4x1280xbf16, #tpu.memory_space<vmem>>, vector<1x4x1024xbf16>
    %75 = vector.shape_cast %74 : vector<1x4x1024xbf16> to vector<4x1024xbf16>
    %c92 = arith.constant 92 : index
    %c0_78 = arith.constant 0 : index
    %76 = vector.load %arg6[%c92, %c0_78] : memref<108x1024xbf16, #tpu.memory_space<vmem>>, vector<4x1024xbf16>
    tpu.vector_store %arg6[%c92, %c0_78], %75 {strides = array<i32>} : memref<108x1024xbf16, #tpu.memory_space<vmem>>, vector<4x1024xbf16>,
    %c0_79 = arith.constant 0 : index
    %c0_80 = arith.constant 0 : index
    %c237 = arith.constant 237 : index
    %77 = vector.load %arg2[%c0_79, %c0_80, %c237] : memref<1x4x1280xbf16, #tpu.memory_space<vmem>>, vector<1x4x1024xbf16>
    %78 = vector.shape_cast %77 : vector<1x4x1024xbf16> to vector<4x1024xbf16>
    %c96 = arith.constant 96 : index
    %c0_81 = arith.constant 0 : index
    %79 = vector.load %arg6[%c96, %c0_81] : memref<108x1024xbf16, #tpu.memory_space<vmem>>, vector<4x1024xbf16>
    tpu.vector_store %arg6[%c96, %c0_81], %78 {strides = array<i32>} : memref<108x1024xbf16, #tpu.memory_space<vmem>>, vector<4x1024xbf16>,
    %c0_82 = arith.constant 0 : index
    %c0_83 = arith.constant 0 : index
    %c238 = arith.constant 238 : index
    %80 = vector.load %arg2[%c0_82, %c0_83, %c238] : memref<1x4x1280xbf16, #tpu.memory_space<vmem>>, vector<1x4x1024xbf16>
    %81 = vector.shape_cast %80 : vector<1x4x1024xbf16> to vector<4x1024xbf16>
    %c100 = arith.constant 100 : index
    %c0_84 = arith.constant 0 : index
    %82 = vector.load %arg6[%c100, %c0_84] : memref<108x1024xbf16, #tpu.memory_space<vmem>>, vector<4x1024xbf16>
    tpu.vector_store %arg6[%c100, %c0_84], %81 {strides = array<i32>} : memref<108x1024xbf16, #tpu.memory_space<vmem>>, vector<4x1024xbf16>,
    %c0_85 = arith.constant 0 : index
    %c0_86 = arith.constant 0 : index
    %c239 = arith.constant 239 : index
    %83 = vector.load %arg2[%c0_85, %c0_86, %c239] : memref<1x4x1280xbf16, #tpu.memory_space<vmem>>, vector<1x4x1024xbf16>
    %84 = vector.shape_cast %83 : vector<1x4x1024xbf16> to vector<4x1024xbf16>
    %c104 = arith.constant 104 : index
    %c0_87 = arith.constant 0 : index
    %85 = vector.load %arg6[%c104, %c0_87] : memref<108x1024xbf16, #tpu.memory_space<vmem>>, vector<4x1024xbf16>
    tpu.vector_store %arg6[%c104, %c0_87], %84 {strides = array<i32>} : memref<108x1024xbf16, #tpu.memory_space<vmem>>, vector<4x1024xbf16>,
    %c0_88 = arith.constant 0 : index
    %c0_89 = arith.constant 0 : index
    %86 = vector.load %arg3[%c0_88, %c0_89] : memref<16x108xbf16, #tpu.memory_space<vmem>>, vector<16x108xbf16>
    %c0_90 = arith.constant 0 : index
    %c0_91 = arith.constant 0 : index
    %87 = vector.load %arg6[%c0_90, %c0_91] : memref<108x1024xbf16, #tpu.memory_space<vmem>>, vector<108x1024xbf16>
    %cst_92 = arith.constant dense<0.000000e+00> : vector<16x1024xf32>
    %88 = tpu.matmul %86, %87, %cst_92 {dimension_numbers = #tpu.dot_dimension_numbers<[1], [0], [0], [1], [0, 0, 1, 1], [], []>} : vector<16x108xbf16>, vector<108x1024xbf16>, vector<16x1024xf32> -> vector<16x1024xf32>
    %89 = vector.broadcast %0 : vector<1x1024xf32> to vector<16x1024xf32>
    %90 = arith.mulf %88, %89 : vector<16x1024xf32>
    %cst_93 = arith.constant dense<0.000000e+00> : vector<16xf32>
    %91 = vector.multi_reduction <add>, %90, %cst_93 [1] : vector<16x1024xf32> to vector<16xf32>
    %92 = vector.shape_cast %91 : vector<16xf32> to vector<16x1xf32>
    %93 = arith.mulf %90, %88 : vector<16x1024xf32>
    %cst_94 = arith.constant dense<0.000000e+00> : vector<16xf32>
    %94 = vector.multi_reduction <add>, %93, %cst_94 [1] : vector<16x1024xf32> to vector<16xf32>
    %95 = vector.shape_cast %94 : vector<16xf32> to vector<16x1xf32>
    %cst_95 = arith.constant 0.001953125 : f32
    %96 = vector.broadcast %cst_95 : f32 to vector<16x1xf32>
    %97 = arith.mulf %92, %96 : vector<16x1xf32>
    %cst_96 = arith.constant 0.001953125 : f32
    %98 = vector.broadcast %cst_96 : f32 to vector<16x1xf32>
    %99 = arith.mulf %95, %98 : vector<16x1xf32>
    %100 = arith.mulf %97, %97 : vector<16x1xf32>
    %101 = arith.subf %99, %100 : vector<16x1xf32>
    %cst_97 = arith.constant 0.000000e+00 : f32
    %102 = vector.broadcast %cst_97 : f32 to vector<16x1xf32>
    %103 = arith.maximumf %101, %102 : vector<16x1xf32>
    %cst_98 = arith.constant 9.99999974E-6 : f32
    %104 = vector.broadcast %cst_98 : f32 to vector<16x1xf32>
    %105 = arith.addf %103, %104 : vector<16x1xf32>
    %106 = math.rsqrt %105 : vector<16x1xf32>
    %107 = vector.broadcast %97 : vector<16x1xf32> to vector<16x1024xf32>
    %108 = arith.subf %88, %107 : vector<16x1024xf32>
    %109 = vector.broadcast %106 : vector<16x1xf32> to vector<16x1024xf32>
    %110 = arith.mulf %108, %109 : vector<16x1024xf32>
    %cst_99 = arith.constant 0.000000e+00 : f32
    %111 = vector.broadcast %cst_99 : f32 to vector<16x1024xf32>
    %112 = arith.maximumf %110, %111 : vector<16x1024xf32>
    %113 = vector.broadcast %0 : vector<1x1024xf32> to vector<16x1024xf32>
    %114 = arith.mulf %112, %113 : vector<16x1024xf32>
    %115 = vector.extract_strided_slice %114 {offsets = [0, 0], sizes = [8, 1024], strides = [1, 1]} : vector<16x1024xf32> to vector<8x1024xf32>
    %116 = vector.extract_strided_slice %114 {offsets = [8, 0], sizes = [8, 1024], strides = [1, 1]} : vector<16x1024xf32> to vector<8x1024xf32>
    %117 = arith.truncf %115 : vector<8x1024xf32> to vector<8x1024xbf16>
    %c0_100 = arith.constant 0 : index
    %c128_101 = arith.constant 128 : index
    %118 = vector.load %arg8[%c0_100, %c128_101] : memref<8x1280xbf16, #tpu.memory_space<vmem>>, vector<8x1024xbf16>
    tpu.vector_store %arg8[%c0_100, %c128_101], %117 {strides = array<i32>} : memref<8x1280xbf16, #tpu.memory_space<vmem>>, vector<8x1024xbf16>,
    %c0_102 = arith.constant 0 : index
    %c17_103 = arith.constant 17 : index
    %119 = vector.load %arg8[%c0_102, %c17_103] : memref<8x1280xbf16, #tpu.memory_space<vmem>>, vector<8x1024xbf16>
    %c0_104 = arith.constant 0 : index
    %c0_105 = arith.constant 0 : index
    %120 = vector.load %arg7[%c0_104, %c0_105] : memref<216x1024xbf16, #tpu.memory_space<vmem>>, vector<8x1024xbf16>
    tpu.vector_store %arg7[%c0_104, %c0_105], %119 {strides = array<i32>} : memref<216x1024xbf16, #tpu.memory_space<vmem>>, vector<8x1024xbf16>,
    %c0_106 = arith.constant 0 : index
    %c18_107 = arith.constant 18 : index
    %121 = vector.load %arg8[%c0_106, %c18_107] : memref<8x1280xbf16, #tpu.memory_space<vmem>>, vector<8x1024xbf16>
    %c8_108 = arith.constant 8 : index
    %c0_109 = arith.constant 0 : index
    %122 = vector.load %arg7[%c8_108, %c0_109] : memref<216x1024xbf16, #tpu.memory_space<vmem>>, vector<8x1024xbf16>
    tpu.vector_store %arg7[%c8_108, %c0_109], %121 {strides = array<i32>} : memref<216x1024xbf16, #tpu.memory_space<vmem>>, vector<8x1024xbf16>,
    %c0_110 = arith.constant 0 : index
    %c19_111 = arith.constant 19 : index
    %123 = vector.load %arg8[%c0_110, %c19_111] : memref<8x1280xbf16, #tpu.memory_space<vmem>>, vector<8x1024xbf16>
    %c16_112 = arith.constant 16 : index
    %c0_113 = arith.constant 0 : index
    %124 = vector.load %arg7[%c16_112, %c0_113] : memref<216x1024xbf16, #tpu.memory_space<vmem>>, vector<8x1024xbf16>
    tpu.vector_store %arg7[%c16_112, %c0_113], %123 {strides = array<i32>} : memref<216x1024xbf16, #tpu.memory_space<vmem>>, vector<8x1024xbf16>,
    %c0_114 = arith.constant 0 : index
    %c27_115 = arith.constant 27 : index
    %125 = vector.load %arg8[%c0_114, %c27_115] : memref<8x1280xbf16, #tpu.memory_space<vmem>>, vector<8x1024xbf16>
    %c24_116 = arith.constant 24 : index
    %c0_117 = arith.constant 0 : index
    %126 = vector.load %arg7[%c24_116, %c0_117] : memref<216x1024xbf16, #tpu.memory_space<vmem>>, vector<8x1024xbf16>
    tpu.vector_store %arg7[%c24_116, %c0_117], %125 {strides = array<i32>} : memref<216x1024xbf16, #tpu.memory_space<vmem>>, vector<8x1024xbf16>,
    %c0_118 = arith.constant 0 : index
    %c28_119 = arith.constant 28 : index
    %127 = vector.load %arg8[%c0_118, %c28_119] : memref<8x1280xbf16, #tpu.memory_space<vmem>>, vector<8x1024xbf16>
    %c32_120 = arith.constant 32 : index
    %c0_121 = arith.constant 0 : index
    %128 = vector.load %arg7[%c32_120, %c0_121] : memref<216x1024xbf16, #tpu.memory_space<vmem>>, vector<8x1024xbf16>
    tpu.vector_store %arg7[%c32_120, %c0_121], %127 {strides = array<i32>} : memref<216x1024xbf16, #tpu.memory_space<vmem>>, vector<8x1024xbf16>,
    %c0_122 = arith.constant 0 : index
    %c29_123 = arith.constant 29 : index
    %129 = vector.load %arg8[%c0_122, %c29_123] : memref<8x1280xbf16, #tpu.memory_space<vmem>>, vector<8x1024xbf16>
    %c40_124 = arith.constant 40 : index
    %c0_125 = arith.constant 0 : index
    %130 = vector.load %arg7[%c40_124, %c0_125] : memref<216x1024xbf16, #tpu.memory_space<vmem>>, vector<8x1024xbf16>
    tpu.vector_store %arg7[%c40_124, %c0_125], %129 {strides = array<i32>} : memref<216x1024xbf16, #tpu.memory_space<vmem>>, vector<8x1024xbf16>,
    %c0_126 = arith.constant 0 : index
    %c37_127 = arith.constant 37 : index
    %131 = vector.load %arg8[%c0_126, %c37_127] : memref<8x1280xbf16, #tpu.memory_space<vmem>>, vector<8x1024xbf16>
    %c48_128 = arith.constant 48 : index
    %c0_129 = arith.constant 0 : index
    %132 = vector.load %arg7[%c48_128, %c0_129] : memref<216x1024xbf16, #tpu.memory_space<vmem>>, vector<8x1024xbf16>
    tpu.vector_store %arg7[%c48_128, %c0_129], %131 {strides = array<i32>} : memref<216x1024xbf16, #tpu.memory_space<vmem>>, vector<8x1024xbf16>,
    %c0_130 = arith.constant 0 : index
    %c38_131 = arith.constant 38 : index
    %133 = vector.load %arg8[%c0_130, %c38_131] : memref<8x1280xbf16, #tpu.memory_space<vmem>>, vector<8x1024xbf16>
    %c56_132 = arith.constant 56 : index
    %c0_133 = arith.constant 0 : index
    %134 = vector.load %arg7[%c56_132, %c0_133] : memref<216x1024xbf16, #tpu.memory_space<vmem>>, vector<8x1024xbf16>
    tpu.vector_store %arg7[%c56_132, %c0_133], %133 {strides = array<i32>} : memref<216x1024xbf16, #tpu.memory_space<vmem>>, vector<8x1024xbf16>,
    %c0_134 = arith.constant 0 : index
    %c39_135 = arith.constant 39 : index
    %135 = vector.load %arg8[%c0_134, %c39_135] : memref<8x1280xbf16, #tpu.memory_space<vmem>>, vector<8x1024xbf16>
    %c64_136 = arith.constant 64 : index
    %c0_137 = arith.constant 0 : index
    %136 = vector.load %arg7[%c64_136, %c0_137] : memref<216x1024xbf16, #tpu.memory_space<vmem>>, vector<8x1024xbf16>
    tpu.vector_store %arg7[%c64_136, %c0_137], %135 {strides = array<i32>} : memref<216x1024xbf16, #tpu.memory_space<vmem>>, vector<8x1024xbf16>,
    %c0_138 = arith.constant 0 : index
    %c117_139 = arith.constant 117 : index
    %137 = vector.load %arg8[%c0_138, %c117_139] : memref<8x1280xbf16, #tpu.memory_space<vmem>>, vector<8x1024xbf16>
    %c72_140 = arith.constant 72 : index
    %c0_141 = arith.constant 0 : index
    %138 = vector.load %arg7[%c72_140, %c0_141] : memref<216x1024xbf16, #tpu.memory_space<vmem>>, vector<8x1024xbf16>
    tpu.vector_store %arg7[%c72_140, %c0_141], %137 {strides = array<i32>} : memref<216x1024xbf16, #tpu.memory_space<vmem>>, vector<8x1024xbf16>,
    %c0_142 = arith.constant 0 : index
    %c118_143 = arith.constant 118 : index
    %139 = vector.load %arg8[%c0_142, %c118_143] : memref<8x1280xbf16, #tpu.memory_space<vmem>>, vector<8x1024xbf16>
    %c80_144 = arith.constant 80 : index
    %c0_145 = arith.constant 0 : index
    %140 = vector.load %arg7[%c80_144, %c0_145] : memref<216x1024xbf16, #tpu.memory_space<vmem>>, vector<8x1024xbf16>
    tpu.vector_store %arg7[%c80_144, %c0_145], %139 {strides = array<i32>} : memref<216x1024xbf16, #tpu.memory_space<vmem>>, vector<8x1024xbf16>,
    %c0_146 = arith.constant 0 : index
    %c119_147 = arith.constant 119 : index
    %141 = vector.load %arg8[%c0_146, %c119_147] : memref<8x1280xbf16, #tpu.memory_space<vmem>>, vector<8x1024xbf16>
    %c88_148 = arith.constant 88 : index
    %c0_149 = arith.constant 0 : index
    %142 = vector.load %arg7[%c88_148, %c0_149] : memref<216x1024xbf16, #tpu.memory_space<vmem>>, vector<8x1024xbf16>
    tpu.vector_store %arg7[%c88_148, %c0_149], %141 {strides = array<i32>} : memref<216x1024xbf16, #tpu.memory_space<vmem>>, vector<8x1024xbf16>,
    %c0_150 = arith.constant 0 : index
    %c127_151 = arith.constant 127 : index
    %143 = vector.load %arg8[%c0_150, %c127_151] : memref<8x1280xbf16, #tpu.memory_space<vmem>>, vector<8x1024xbf16>
    %c96_152 = arith.constant 96 : index
    %c0_153 = arith.constant 0 : index
    %144 = vector.load %arg7[%c96_152, %c0_153] : memref<216x1024xbf16, #tpu.memory_space<vmem>>, vector<8x1024xbf16>
    tpu.vector_store %arg7[%c96_152, %c0_153], %143 {strides = array<i32>} : memref<216x1024xbf16, #tpu.memory_space<vmem>>, vector<8x1024xbf16>,
    %c0_154 = arith.constant 0 : index
    %c128_155 = arith.constant 128 : index
    %145 = vector.load %arg8[%c0_154, %c128_155] : memref<8x1280xbf16, #tpu.memory_space<vmem>>, vector<8x1024xbf16>
    %c104_156 = arith.constant 104 : index
    %c0_157 = arith.constant 0 : index
    %146 = vector.load %arg7[%c104_156, %c0_157] : memref<216x1024xbf16, #tpu.memory_space<vmem>>, vector<8x1024xbf16>
    tpu.vector_store %arg7[%c104_156, %c0_157], %145 {strides = array<i32>} : memref<216x1024xbf16, #tpu.memory_space<vmem>>, vector<8x1024xbf16>,
    %c0_158 = arith.constant 0 : index
    %c129_159 = arith.constant 129 : index
    %147 = vector.load %arg8[%c0_158, %c129_159] : memref<8x1280xbf16, #tpu.memory_space<vmem>>, vector<8x1024xbf16>
    %c112 = arith.constant 112 : index
    %c0_160 = arith.constant 0 : index
    %148 = vector.load %arg7[%c112, %c0_160] : memref<216x1024xbf16, #tpu.memory_space<vmem>>, vector<8x1024xbf16>
    tpu.vector_store %arg7[%c112, %c0_160], %147 {strides = array<i32>} : memref<216x1024xbf16, #tpu.memory_space<vmem>>, vector<8x1024xbf16>,
    %c0_161 = arith.constant 0 : index
    %c137_162 = arith.constant 137 : index
    %149 = vector.load %arg8[%c0_161, %c137_162] : memref<8x1280xbf16, #tpu.memory_space<vmem>>, vector<8x1024xbf16>
    %c120 = arith.constant 120 : index
    %c0_163 = arith.constant 0 : index
    %150 = vector.load %arg7[%c120, %c0_163] : memref<216x1024xbf16, #tpu.memory_space<vmem>>, vector<8x1024xbf16>
    tpu.vector_store %arg7[%c120, %c0_163], %149 {strides = array<i32>} : memref<216x1024xbf16, #tpu.memory_space<vmem>>, vector<8x1024xbf16>,
    %c0_164 = arith.constant 0 : index
    %c138_165 = arith.constant 138 : index
    %151 = vector.load %arg8[%c0_164, %c138_165] : memref<8x1280xbf16, #tpu.memory_space<vmem>>, vector<8x1024xbf16>
    %c128_166 = arith.constant 128 : index
    %c0_167 = arith.constant 0 : index
    %152 = vector.load %arg7[%c128_166, %c0_167] : memref<216x1024xbf16, #tpu.memory_space<vmem>>, vector<8x1024xbf16>
    tpu.vector_store %arg7[%c128_166, %c0_167], %151 {strides = array<i32>} : memref<216x1024xbf16, #tpu.memory_space<vmem>>, vector<8x1024xbf16>,
    %c0_168 = arith.constant 0 : index
    %c139_169 = arith.constant 139 : index
    %153 = vector.load %arg8[%c0_168, %c139_169] : memref<8x1280xbf16, #tpu.memory_space<vmem>>, vector<8x1024xbf16>
    %c136 = arith.constant 136 : index
    %c0_170 = arith.constant 0 : index
    %154 = vector.load %arg7[%c136, %c0_170] : memref<216x1024xbf16, #tpu.memory_space<vmem>>, vector<8x1024xbf16>
    tpu.vector_store %arg7[%c136, %c0_170], %153 {strides = array<i32>} : memref<216x1024xbf16, #tpu.memory_space<vmem>>, vector<8x1024xbf16>,
    %c0_171 = arith.constant 0 : index
    %c217_172 = arith.constant 217 : index
    %155 = vector.load %arg8[%c0_171, %c217_172] : memref<8x1280xbf16, #tpu.memory_space<vmem>>, vector<8x1024xbf16>
    %c144 = arith.constant 144 : index
    %c0_173 = arith.constant 0 : index
    %156 = vector.load %arg7[%c144, %c0_173] : memref<216x1024xbf16, #tpu.memory_space<vmem>>, vector<8x1024xbf16>
    tpu.vector_store %arg7[%c144, %c0_173], %155 {strides = array<i32>} : memref<216x1024xbf16, #tpu.memory_space<vmem>>, vector<8x1024xbf16>,
    %c0_174 = arith.constant 0 : index
    %c218_175 = arith.constant 218 : index
    %157 = vector.load %arg8[%c0_174, %c218_175] : memref<8x1280xbf16, #tpu.memory_space<vmem>>, vector<8x1024xbf16>
    %c152 = arith.constant 152 : index
    %c0_176 = arith.constant 0 : index
    %158 = vector.load %arg7[%c152, %c0_176] : memref<216x1024xbf16, #tpu.memory_space<vmem>>, vector<8x1024xbf16>
    tpu.vector_store %arg7[%c152, %c0_176], %157 {strides = array<i32>} : memref<216x1024xbf16, #tpu.memory_space<vmem>>, vector<8x1024xbf16>,
    %c0_177 = arith.constant 0 : index
    %c219_178 = arith.constant 219 : index
    %159 = vector.load %arg8[%c0_177, %c219_178] : memref<8x1280xbf16, #tpu.memory_space<vmem>>, vector<8x1024xbf16>
    %c160 = arith.constant 160 : index
    %c0_179 = arith.constant 0 : index
    %160 = vector.load %arg7[%c160, %c0_179] : memref<216x1024xbf16, #tpu.memory_space<vmem>>, vector<8x1024xbf16>
    tpu.vector_store %arg7[%c160, %c0_179], %159 {strides = array<i32>} : memref<216x1024xbf16, #tpu.memory_space<vmem>>, vector<8x1024xbf16>,
    %c0_180 = arith.constant 0 : index
    %c227_181 = arith.constant 227 : index
    %161 = vector.load %arg8[%c0_180, %c227_181] : memref<8x1280xbf16, #tpu.memory_space<vmem>>, vector<8x1024xbf16>
    %c168 = arith.constant 168 : index
    %c0_182 = arith.constant 0 : index
    %162 = vector.load %arg7[%c168, %c0_182] : memref<216x1024xbf16, #tpu.memory_space<vmem>>, vector<8x1024xbf16>
    tpu.vector_store %arg7[%c168, %c0_182], %161 {strides = array<i32>} : memref<216x1024xbf16, #tpu.memory_space<vmem>>, vector<8x1024xbf16>,
    %c0_183 = arith.constant 0 : index
    %c228_184 = arith.constant 228 : index
    %163 = vector.load %arg8[%c0_183, %c228_184] : memref<8x1280xbf16, #tpu.memory_space<vmem>>, vector<8x1024xbf16>
    %c176 = arith.constant 176 : index
    %c0_185 = arith.constant 0 : index
    %164 = vector.load %arg7[%c176, %c0_185] : memref<216x1024xbf16, #tpu.memory_space<vmem>>, vector<8x1024xbf16>
    tpu.vector_store %arg7[%c176, %c0_185], %163 {strides = array<i32>} : memref<216x1024xbf16, #tpu.memory_space<vmem>>, vector<8x1024xbf16>,
    %c0_186 = arith.constant 0 : index
    %c229_187 = arith.constant 229 : index
    %165 = vector.load %arg8[%c0_186, %c229_187] : memref<8x1280xbf16, #tpu.memory_space<vmem>>, vector<8x1024xbf16>
    %c184 = arith.constant 184 : index
    %c0_188 = arith.constant 0 : index
    %166 = vector.load %arg7[%c184, %c0_188] : memref<216x1024xbf16, #tpu.memory_space<vmem>>, vector<8x1024xbf16>
    tpu.vector_store %arg7[%c184, %c0_188], %165 {strides = array<i32>} : memref<216x1024xbf16, #tpu.memory_space<vmem>>, vector<8x1024xbf16>,
    %c0_189 = arith.constant 0 : index
    %c237_190 = arith.constant 237 : index
    %167 = vector.load %arg8[%c0_189, %c237_190] : memref<8x1280xbf16, #tpu.memory_space<vmem>>, vector<8x1024xbf16>
    %c192 = arith.constant 192 : index
    %c0_191 = arith.constant 0 : index
    %168 = vector.load %arg7[%c192, %c0_191] : memref<216x1024xbf16, #tpu.memory_space<vmem>>, vector<8x1024xbf16>
    tpu.vector_store %arg7[%c192, %c0_191], %167 {strides = array<i32>} : memref<216x1024xbf16, #tpu.memory_space<vmem>>, vector<8x1024xbf16>,
    %c0_192 = arith.constant 0 : index
    %c238_193 = arith.constant 238 : index
    %169 = vector.load %arg8[%c0_192, %c238_193] : memref<8x1280xbf16, #tpu.memory_space<vmem>>, vector<8x1024xbf16>
    %c200 = arith.constant 200 : index
    %c0_194 = arith.constant 0 : index
    %170 = vector.load %arg7[%c200, %c0_194] : memref<216x1024xbf16, #tpu.memory_space<vmem>>, vector<8x1024xbf16>
    tpu.vector_store %arg7[%c200, %c0_194], %169 {strides = array<i32>} : memref<216x1024xbf16, #tpu.memory_space<vmem>>, vector<8x1024xbf16>,
    %c0_195 = arith.constant 0 : index
    %c239_196 = arith.constant 239 : index
    %171 = vector.load %arg8[%c0_195, %c239_196] : memref<8x1280xbf16, #tpu.memory_space<vmem>>, vector<8x1024xbf16>
    %c208 = arith.constant 208 : index
    %c0_197 = arith.constant 0 : index
    %172 = vector.load %arg7[%c208, %c0_197] : memref<216x1024xbf16, #tpu.memory_space<vmem>>, vector<8x1024xbf16>
    tpu.vector_store %arg7[%c208, %c0_197], %171 {strides = array<i32>} : memref<216x1024xbf16, #tpu.memory_space<vmem>>, vector<8x1024xbf16>,
    %c0_198 = arith.constant 0 : index
    %c0_199 = arith.constant 0 : index
    %173 = vector.load %arg4[%c0_198, %c0_199] : memref<8x216xbf16, #tpu.memory_space<vmem>>, vector<8x216xbf16>
    %c0_200 = arith.constant 0 : index
    %c0_201 = arith.constant 0 : index
    %174 = vector.load %arg7[%c0_200, %c0_201] : memref<216x1024xbf16, #tpu.memory_space<vmem>>, vector<216x1024xbf16>
    %cst_202 = arith.constant dense<0.000000e+00> : vector<8x1024xf32>
    %175 = tpu.matmul %173, %174, %cst_202 {dimension_numbers = #tpu.dot_dimension_numbers<[1], [0], [0], [1], [0, 0, 1, 1], [], []>} : vector<8x216xbf16>, vector<216x1024xbf16>, vector<8x1024xf32> -> vector<8x1024xf32>
    %176 = vector.broadcast %0 : vector<1x1024xf32> to vector<8x1024xf32>
    %177 = arith.mulf %175, %176 : vector<8x1024xf32>
    %cst_203 = arith.constant dense<0.000000e+00> : vector<8xf32>
    %178 = vector.multi_reduction <add>, %177, %cst_203 [1] : vector<8x1024xf32> to vector<8xf32>
    %179 = vector.shape_cast %178 : vector<8xf32> to vector<8x1xf32>
    %180 = arith.mulf %177, %175 : vector<8x1024xf32>
    %cst_204 = arith.constant dense<0.000000e+00> : vector<8xf32>
    %181 = vector.multi_reduction <add>, %180, %cst_204 [1] : vector<8x1024xf32> to vector<8xf32>
    %182 = vector.shape_cast %181 : vector<8xf32> to vector<8x1xf32>
    %cst_205 = arith.constant 0.001953125 : f32
    %183 = vector.broadcast %cst_205 : f32 to vector<8x1xf32>
    %184 = arith.mulf %179, %183 : vector<8x1xf32>
    %cst_206 = arith.constant 0.001953125 : f32
    %185 = vector.broadcast %cst_206 : f32 to vector<8x1xf32>
    %186 = arith.mulf %182, %185 : vector<8x1xf32>
    %187 = arith.mulf %184, %184 : vector<8x1xf32>
    %188 = arith.subf %186, %187 : vector<8x1xf32>
    %cst_207 = arith.constant 0.000000e+00 : f32
    %189 = vector.broadcast %cst_207 : f32 to vector<8x1xf32>
    %190 = arith.maximumf %188, %189 : vector<8x1xf32>
    %cst_208 = arith.constant 9.99999974E-6 : f32
    %191 = vector.broadcast %cst_208 : f32 to vector<8x1xf32>
    %192 = arith.addf %190, %191 : vector<8x1xf32>
    %193 = math.rsqrt %192 : vector<8x1xf32>
    %194 = vector.broadcast %184 : vector<8x1xf32> to vector<8x1024xf32>
    %195 = arith.subf %175, %194 : vector<8x1024xf32>
    %196 = vector.broadcast %193 : vector<8x1xf32> to vector<8x1024xf32>
    %197 = arith.mulf %195, %196 : vector<8x1024xf32>
    %cst_209 = arith.constant 0.000000e+00 : f32
    %198 = vector.broadcast %cst_209 : f32 to vector<8x1024xf32>
    %199 = arith.maximumf %197, %198 : vector<8x1024xf32>
    %200 = vector.broadcast %0 : vector<1x1024xf32> to vector<8x1024xf32>
    %201 = arith.mulf %199, %200 : vector<8x1024xf32>
    %202 = arith.addf %201, %116 : vector<8x1024xf32>
    %203 = vector.shape_cast %202 : vector<8x1024xf32> to vector<1x8x1024xf32>
    %c0_210 = arith.constant 0 : index
    %c0_211 = arith.constant 0 : index
    %c0_212 = arith.constant 0 : index
    %204 = vector.load %arg5[%c0_210, %c0_211, %c0_212] : memref<1x8x1024xf32, #tpu.memory_space<vmem>>, vector<1x8x1024xf32>
    tpu.vector_store %arg5[%c0_210, %c0_211, %c0_212], %203 {strides = array<i32>} : memref<1x8x1024xf32, #tpu.memory_space<vmem>>, vector<1x8x1024xf32>,
    return
  }
  func.func @transform_0(%arg0: i32) -> (i32, i32) {
    %c0_i32 = arith.constant 0 : i32
    %c0_i32_0 = arith.constant 0 : i32
    %c0_i32_1 = arith.constant 0 : i32
    return %c0_i32, %c0_i32_0 : i32, i32
  }
  func.func @transform_1(%arg0: i32) -> (i32, i32, i32) {
    %c0_i32 = arith.constant 0 : i32
    %c0_i32_0 = arith.constant 0 : i32
    %c0_i32_1 = arith.constant 0 : i32
    return %arg0, %c0_i32, %c0_i32_0 : i32, i32, i32
  }
  func.func @transform_2(%arg0: i32) -> (i32, i32) {
    %c0_i32 = arith.constant 0 : i32
    %c0_i32_0 = arith.constant 0 : i32
    %c0_i32_1 = arith.constant 0 : i32
    return %c0_i32, %c0_i32_0 : i32, i32
  }
  func.func @transform_3(%arg0: i32) -> (i32, i32) {
    %c0_i32 = arith.constant 0 : i32
    %c0_i32_0 = arith.constant 0 : i32
    %c0_i32_1 = arith.constant 0 : i32
    return %c0_i32, %c0_i32_0 : i32, i32
  }
  func.func @transform_4(%arg0: i32) -> (i32, i32, i32) {
    %c0_i32 = arith.constant 0 : i32
    %c0_i32_0 = arith.constant 0 : i32
    %c0_i32_1 = arith.constant 0 : i32
    return %arg0, %c0_i32, %c0_i32_0 : i32, i32, i32
  }
}

</mosaic_0001>

<llo_original>
// kernel: tpu_custom_call.1
$region0: #{tpu_custom_call.1}
  #allocation0 [shape = 'u32[]', space=smem, size = 0x4, offset = 0x4, fixed_abs, tag = 'smem constant byte address 0x4 - core index']
  #allocation1 [shape = 'u32[144,128]{1,0:T(1,128)}', space=vmem, size = 0x12000, scoped, tag = 'internal scratch']
  #allocation2 [shape = 'bf16[108,1024]{1,0:T(8,128)(2,1)}', space=vmem, size = 0x38000, scoped, tag = 'scratch operand']
  #allocation3 [shape = 'bf16[216,1024]{1,0:T(8,128)(2,1)}', space=vmem, size = 0x6c000, scoped, tag = 'scratch operand']
  #allocation4 [shape = 'bf16[8,1280]{1,0:T(8,128)(2,1)}', space=vmem, size = 0x5000, scoped, tag = 'scratch operand']
  %s0 = inlined_call_operand.hbm [shape: f32[1,1024], index: 0, kind: input, shape index: {}]
  %s1 = inlined_call_operand.hbm [shape: bf16[2,4,1280], index: 1, kind: input, shape index: {}]
  %s2 = inlined_call_operand.hbm [shape: bf16[16,108], index: 2, kind: input, shape index: {}]
  %s3 = inlined_call_operand.hbm [shape: bf16[8,216], index: 3, kind: input, shape index: {}]
  %s4 = inlined_call_operand.hbm [shape: f32[2,8,1024], index: 4, kind: output, shape index: {}]
  %s5 = sld [smem:[#allocation0]]
  $region65: #{tpu_custom_call.1} parent=0
    _
  %s7 = ssub.s32 1, %s5
  %s8 = scalar_select 0, %s7, %s5
  $region1: #{tpu_custom_call.1} parent=0
    #allocation5 [shape = 'u8[4096]{0}', space=vmem, size = 0x1000, scoped, tag = 'input window, operand 0, single buffered']
    #allocation6 [shape = 's32[2]{0}', space=sflag, size = 0x8, scoped, tag = 'scoped memory for tpu_custom_call.1']
    #allocation7 [shape = 's32[2]{0}', space=sflag, size = 0x8, scoped, tag = 'scoped memory for tpu_custom_call.1']
    #allocation8 [shape = 'u8[20480]{0}', space=vmem, size = 0x5000, scoped, tag = 'input window, operand 1']
    #allocation9 [shape = 's32[2]{0}', space=sflag, size = 0x8, scoped, tag = 'scoped memory for tpu_custom_call.1']
    #allocation10 [shape = 'u8[4096]{0}', space=vmem, size = 0x1000, scoped, tag = 'input window, operand 2, single buffered']
    #allocation11 [shape = 'u8[4096]{0}', space=vmem, size = 0x1000, scoped, tag = 'input window, operand 3, single buffered']
    #allocation12 [shape = 's32[1]{0}', space=sflag, size = 0x4, scoped, tag = 'scoped memory for tpu_custom_call.1']
    #allocation13 [shape = 'u8[65536]{0}', space=vmem, size = 0x10000, scoped, tag = 'output window, operand 0']
    %9 = vsyncpa [#allocation6], 0
    %10 = vsyncpa [#allocation9], 0
    %s11 = scalar_lea.sflag [#allocation9], 1
    %12 = vsyncpa %s11, 0
    %13 = vsyncpa [#allocation12], 0
    %14 = vsyncpa [#allocation7], 0
    %s15 = scalar_lea.sflag [#allocation7], 1
    %16 = vsyncpa %s15, 0
    loop: start=0, step=1, limit=4
    $region2: #{tpu_custom_call.1} parent=1 // loop_pre_header
      _
    $region3: #{tpu_custom_call.1} parent=1 // loop_header
      %s18 = sphi 0, %s22
      %p19 = scmp.ge.s32.totalorder %s18, 4
      %s26 = sphi 0, %s26
      %s28 = sphi 0, %s26
      %s29 = sphi 0, %s28
      %s43 = sphi 0, %s29
      %s49 = sphi 0, %s51
      %s52 = sphi 0, %s49
      %s53 = sphi 0, %s52
      %s69 = sphi 0, %s53
      %s73 = sphi 0, %s73
      %s75 = sphi 0, %s73
      %s76 = sphi 0, %s75
      %s90 = sphi 0, %s76
      %s94 = sphi 0, %s94
      %s96 = sphi 0, %s94
      %s97 = sphi 0, %s96
      %s111 = sphi 0, %s97
      %s117 = sphi 0, %s119
      %s120 = sphi 0, %s117
      %s121 = sphi 0, %s120
      %s137 = sphi 0, %s121
    $region4: #{tpu_custom_call.1} parent=1 // loop_header_branch
      %21 = sbr.rel (%p19) target = $region8
    $region5: #{tpu_custom_call.1} parent=1 // loop_body
      %s23 = ssub.s32 %s18, 1
      %s24 = ssub.s32 %s18, 2
      %s25 = sadd.s32 %s18, 1
      %s27 = sadd.s32 %s26, 1
      %p30 = scmp.eq.s32.totalorder %s18, 1
      %p31 = scmp.ne.s32.totalorder %s26, %s28
      %p32 = scmp.eq.s32.totalorder %s18, 0
      %p33 = por %p31, %p32
      %p34 = scmp.ne.s32.totalorder %s26, %s28
      %p35 = scmp.eq.s32.totalorder %s23, 1
      %p36 = por %p34, %p35
      %p37 = scmp.ne.s32.totalorder %s28, %s29
      %p38 = scmp.eq.s32.totalorder %s23, 0
      %p39 = por %p37, %p38
      %p40 = scmp.ne.s32.totalorder %s28, %s29
      %p41 = scmp.eq.s32.totalorder %s24, 1
      %p42 = por %p40, %p41
      %p44 = scmp.ne.s32.totalorder %s29, %s43
      %p45 = scmp.eq.s32.totalorder %s24, 0
      %p46 = por %p44, %p45
      %s47 = ssub.s32 %s18, %s25
      %p48 = scmp.eq.s32.totalorder %s47, 0
      %s50 = sadd.s32 %s49, 1
      %s51 = scalar_select %p48, %s49, %s50
      %p54 = pneg %p48
      %p55 = scmp.eq.s32.totalorder %s18, 1
      %p56 = por %p54, %p55
      %p57 = scmp.ne.s32.totalorder %s49, %s52
      %p58 = scmp.eq.s32.totalorder %s18, 0
      %p59 = por %p57, %p58
      %p60 = scmp.ne.s32.totalorder %s49, %s52
      %p61 = scmp.eq.s32.totalorder %s23, 1
      %p62 = por %p60, %p61
      %p63 = scmp.ne.s32.totalorder %s52, %s53
      %p64 = scmp.eq.s32.totalorder %s23, 0
      %p65 = por %p63, %p64
      %p66 = scmp.ne.s32.totalorder %s52, %s53
      %p67 = scmp.eq.s32.totalorder %s24, 1
      %p68 = por %p66, %p67
      %p70 = scmp.ne.s32.totalorder %s53, %s69
      %p71 = scmp.eq.s32.totalorder %s24, 0
      %p72 = por %p70, %p71
      %s74 = sadd.s32 %s73, 1
      %p77 = scmp.eq.s32.totalorder %s18, 1
      %p78 = scmp.ne.s32.totalorder %s73, %s75
      %p79 = scmp.eq.s32.totalorder %s18, 0
      %p80 = por %p78, %p79
      %p81 = scmp.ne.s32.totalorder %s73, %s75
      %p82 = scmp.eq.s32.totalorder %s23, 1
      %p83 = por %p81, %p82
      %p84 = scmp.ne.s32.totalorder %s75, %s76
      %p85 = scmp.eq.s32.totalorder %s23, 0
      %p86 = por %p84, %p85
      %p87 = scmp.ne.s32.totalorder %s75, %s76
      %p88 = scmp.eq.s32.totalorder %s24, 1
      %p89 = por %p87, %p88
      %p91 = scmp.ne.s32.totalorder %s76, %s90
      %p92 = scmp.eq.s32.totalorder %s24, 0
      %p93 = por %p91, %p92
      %s95 = sadd.s32 %s94, 1
      %p98 = scmp.eq.s32.totalorder %s18, 1
      %p99 = scmp.ne.s32.totalorder %s94, %s96
      %p100 = scmp.eq.s32.totalorder %s18, 0
      %p101 = por %p99, %p100
      %p102 = scmp.ne.s32.totalorder %s94, %s96
      %p103 = scmp.eq.s32.totalorder %s23, 1
      %p104 = por %p102, %p103
      %p105 = scmp.ne.s32.totalorder %s96, %s97
      %p106 = scmp.eq.s32.totalorder %s23, 0
      %p107 = por %p105, %p106
      %p108 = scmp.ne.s32.totalorder %s96, %s97
      %p109 = scmp.eq.s32.totalorder %s24, 1
      %p110 = por %p108, %p109
      %p112 = scmp.ne.s32.totalorder %s97, %s111
      %p113 = scmp.eq.s32.totalorder %s24, 0
      %p114 = por %p112, %p113
      %s115 = ssub.s32 %s18, %s25
      %p116 = scmp.eq.s32.totalorder %s115, 0
      %s118 = sadd.s32 %s117, 1
      %s119 = scalar_select %p116, %s117, %s118
      %p122 = pneg %p116
      %p123 = scmp.eq.s32.totalorder %s18, 1
      %p124 = por %p122, %p123
      %p125 = scmp.ne.s32.totalorder %s117, %s120
      %p126 = scmp.eq.s32.totalorder %s18, 0
      %p127 = por %p125, %p126
      %p128 = scmp.ne.s32.totalorder %s117, %s120
      %p129 = scmp.eq.s32.totalorder %s23, 1
      %p130 = por %p128, %p129
      %p131 = scmp.ne.s32.totalorder %s120, %s121
      %p132 = scmp.eq.s32.totalorder %s23, 0
      %p133 = por %p131, %p132
      %p134 = scmp.ne.s32.totalorder %s120, %s121
      %p135 = scmp.eq.s32.totalorder %s24, 1
      %p136 = por %p134, %p135
      %p138 = scmp.ne.s32.totalorder %s121, %s137
      %p139 = scmp.eq.s32.totalorder %s24, 0
      %p140 = por %p138, %p139
      %p141 = scmp.le.s32.totalorder 1, %s18
      %p142 = scmp.lt.s32.totalorder %s18, 3
      %p143 = pnand %p141, %p142
      %p144 = pneg %p143
      // Predicated region
      $region9: #{tpu_custom_call.1} parent=5 // pred_check
        _
      $region10: #{tpu_custom_call.1} parent=5 // pred_check_branch
        %146 = sbr.rel (%p143) target = $region12
      $region11: #{tpu_custom_call.1} parent=5 // pred_region
        %s147 = ssub.s32 %s18, 1
        // Predicated region
        $region13: #{tpu_custom_call.1} parent=11 // pred_check
          %p148 = pneg %p39
        $region14: #{tpu_custom_call.1} parent=11 // pred_check_branch
          %150 = sbr.rel (%p148) target = $region16
        $region15: #{tpu_custom_call.1} parent=11 // pred_region
          %s152 = ssub.s32 128, 128
          %153 = vsyncadd [#allocation6], %s152
          %s155 = sshll.u32 [#allocation5], 4
          %s156 = int_to_ptr.vmem [resolvable:$true] %s155
          %158 = dma.hbm_to_vmem [thread:$0]  %s0, 128, %s156, [#allocation6]
        $region16: #{tpu_custom_call.1} parent=11 // pred_fallthru
          _
        // Predicated region
        $region17: #{tpu_custom_call.1} parent=11 // pred_check
          %p159 = pneg %p86
        $region18: #{tpu_custom_call.1} parent=11 // pred_check_branch
          %161 = sbr.rel (%p159) target = $region20
        $region19: #{tpu_custom_call.1} parent=11 // pred_region
          %s163 = ssub.s32 128, 128
          %164 = vsyncadd [#allocation9], %s163
          %s165 = sshll.u32 [#allocation10], 4
          %s166 = int_to_ptr.vmem [resolvable:$true] %s165
          %171 = dma.hbm_to_vmem [thread:$0]  %s2, 128, %s166, [#allocation9], 64, 64, 4
        $region20: #{tpu_custom_call.1} parent=11 // pred_fallthru
          _
        // Predicated region
        $region21: #{tpu_custom_call.1} parent=11 // pred_check
          %p172 = pneg %p107
        $region22: #{tpu_custom_call.1} parent=11 // pred_check_branch
          %174 = sbr.rel (%p172) target = $region24
        $region23: #{tpu_custom_call.1} parent=11 // pred_region
          %s176 = ssub.s32 128, 128
          %177 = vsyncadd [#allocation12], %s176
          %s179 = sshll.u32 [#allocation11], 4
          %s180 = int_to_ptr.vmem [resolvable:$true] %s179
          %182 = dma.hbm_to_vmem [thread:$0]  %s3, 128, %s180, [#allocation12]
        $region24: #{tpu_custom_call.1} parent=11 // pred_fallthru
          _
      $region12: #{tpu_custom_call.1} parent=5 // pred_fallthru
        _
      %p183 = scmp.lt.s32.totalorder %s18, 2
      // Predicated region
      $region25: #{tpu_custom_call.1} parent=5 // pred_check
        %p184 = pneg %p183
      $region26: #{tpu_custom_call.1} parent=5 // pred_check_branch
        %186 = sbr.rel (%p184) target = $region28
      $region27: #{tpu_custom_call.1} parent=5 // pred_region
        // Predicated region
        $region29: #{tpu_custom_call.1} parent=27 // pred_check
          %p187 = pneg %p59
        $region30: #{tpu_custom_call.1} parent=27 // pred_check_branch
          %189 = sbr.rel (%p187) target = $region32
        $region31: #{tpu_custom_call.1} parent=27 // pred_region
          %s190 = sand.u32 %s18, 1
          %s191 = scalar_lea.sflag [#allocation9], %s190
          %s192 = sand.u32 %s49, 1
          %s193 = smul.addr %s192, 20
          %s194 = scalar_lea.vmem [#allocation8], %s193
          %s196 = ssub.s32 320, 320
          %197 = vsyncadd %s191, %s196
          %s198 = smul.addr %s18, 10
          %s199 = smul.addr %s198, 32
          %s200 = scalar_lea.hbm %s1, %s199
          %s202 = sshll.u32 %s194, 4
          %s203 = int_to_ptr.vmem [resolvable:$true] %s202
          %205 = dma.hbm_to_vmem [thread:$0]  %s200, 320, %s203, %s191
        $region32: #{tpu_custom_call.1} parent=27 // pred_fallthru
          _
      $region28: #{tpu_custom_call.1} parent=5 // pred_fallthru
        _
      %p206 = scmp.le.s32.totalorder 1, %s18
      %p207 = scmp.lt.s32.totalorder %s18, 3
      %p208 = pnand %p206, %p207
      %p209 = pneg %p208
      // Predicated region
      $region33: #{tpu_custom_call.1} parent=5 // pred_check
        _
      $region34: #{tpu_custom_call.1} parent=5 // pred_check_branch
        %211 = sbr.rel (%p208) target = $region36
      $region35: #{tpu_custom_call.1} parent=5 // pred_region
        %s212 = ssub.s32 %s18, 1
        // Predicated region
        $region37: #{tpu_custom_call.1} parent=35 // pred_check
          %p213 = pneg %p39
        $region38: #{tpu_custom_call.1} parent=35 // pred_check_branch
          %215 = sbr.rel (%p213) target = $region40
        $region39: #{tpu_custom_call.1} parent=35 // pred_region
          %216 = dma.done [#allocation6], 128
        $region40: #{tpu_custom_call.1} parent=35 // pred_fallthru
          _
        %s217 = sand.u32 %s23, 1
        %s218 = scalar_lea.sflag [#allocation9], %s217
        %s219 = sand.u32 %s52, 1
        %s220 = smul.addr %s219, 20
        %s221 = scalar_lea.vmem [#allocation8], %s220
        // Predicated region
        $region41: #{tpu_custom_call.1} parent=35 // pred_check
          %p222 = pneg %p65
        $region42: #{tpu_custom_call.1} parent=35 // pred_check_branch
          %224 = sbr.rel (%p222) target = $region44
        $region43: #{tpu_custom_call.1} parent=35 // pred_region
          %225 = dma.done %s218, 320
        $region44: #{tpu_custom_call.1} parent=35 // pred_fallthru
          _
        // Predicated region
        $region45: #{tpu_custom_call.1} parent=35 // pred_check
          %p226 = pneg %p86
        $region46: #{tpu_custom_call.1} parent=35 // pred_check_branch
          %228 = sbr.rel (%p226) target = $region48
        $region47: #{tpu_custom_call.1} parent=35 // pred_region
          %229 = dma.done [#allocation9], 128
        $region48: #{tpu_custom_call.1} parent=35 // pred_fallthru
          _
        // Predicated region
        $region49: #{tpu_custom_call.1} parent=35 // pred_check
          %p230 = pneg %p107
        $region50: #{tpu_custom_call.1} parent=35 // pred_check_branch
          %232 = sbr.rel (%p230) target = $region52
        $region51: #{tpu_custom_call.1} parent=35 // pred_region
          %233 = dma.done [#allocation12], 128
        $region52: #{tpu_custom_call.1} parent=35 // pred_fallthru
          _
        %p234 = pneg %p39
        %p235 = pneg %p36
        %s236 = sand.u32 %s23, 1
        %s237 = scalar_lea.sflag [#allocation9], %s236
        %s238 = sand.u32 %s52, 1
        %s239 = smul.addr %s238, 20
        %s240 = scalar_lea.vmem [#allocation8], %s239
        %p241 = pneg %p65
        %p242 = pneg %p62
        %p243 = pneg %p86
        %p244 = pneg %p83
        %p245 = pneg %p107
        %p246 = pneg %p104
        %p247 = pneg %p133
        %p248 = pneg %p130
        %s249 = sand.u32 %s120, 1
        %s250 = scalar_lea.sflag [#allocation7], %s249
        %s251 = sand.u32 %s120, 1
        %s252 = smul.addr %s251, 64
        %s253 = scalar_lea.vmem [#allocation13], %s252
        %v255 = vld [vmem:[#allocation5] sm:$0xff]
        %256 = vst [vmem:[#allocation4] sm:$0xf] 0
        %257 = vst [vmem:[#allocation4 + $0x24] sm:$0xf] 0
        %v258 = vld [vmem:[%s221] sm:$0xff]
        %v259 = vld [vmem:[%s221 + $0x8] sm:$0xff]
        %v260 = vld [vmem:[%s221 + $0x10] sm:$0x3]
        %v264 = vcombine.high %v258, %v258
        %v266 = vunpack.c.l.s4 1983009808
        %v267 = vunpack.c.0.s8 %v266
        %v268 = vlaneseq
        %v269 = vshrl.u32 %v268, 7
        %v270 = vsub.s32 %v267, %v269
        %v271 = vrot.slane %v258, %v270
        %v273 = vunpack.c.l.s4 1983009808
        %v274 = vunpack.c.0.s8 %v273
        %v275 = vlaneseq
        %v276 = vshrl.u32 %v275, 7
        %v277 = vsub.s32 %v274, %v276
        %v278 = vrot.slane %v264, %v277
        %v279 = vcombine.high %v259, %v259
        %v281 = vunpack.c.l.s4 1983009808
        %v282 = vunpack.c.0.s8 %v281
        %v283 = vlaneseq
        %v284 = vshrl.u32 %v283, 7
        %v285 = vsub.s32 %v282, %v284
        %v286 = vrot.slane %v259, %v285
        %v288 = vunpack.c.l.s4 1983009808
        %v289 = vunpack.c.0.s8 %v288
        %v290 = vlaneseq
        %v291 = vshrl.u32 %v290, 7
        %v292 = vsub.s32 %v289, %v291
        %v293 = vrot.slane %v279, %v292
        %v295 = vunpack.c.l.s4 1983009808
        %v296 = vunpack.c.0.s8 %v295
        %v297 = vlaneseq
        %v298 = vshrl.u32 %v297, 7
        %v299 = vsub.s32 %v296, %v298
        %v300 = vrot.slane %v260, %v299
        %301 = vrot.lane.b32.xlu0 %v271, 111
        %v302 = vpop.permute.xlu0 %301
        %303 = vrot.lane.b32.xlu0 %v278, 111
        %v304 = vpop.permute.xlu0 %303
        %305 = vrot.lane.b32.xlu0 %v286, 111
        %v306 = vpop.permute.xlu0 %305
        %307 = vrot.lane.b32.xlu0 %v293, 111
        %v308 = vpop.permute.xlu0 %307
        %309 = vrot.lane.b32.xlu0 %v300, 111
        %v310 = vpop.permute.xlu0 %309
        %v311 = vrot.slane %v302, 4
        %v312 = vrot.slane %v304, 4
        %v313 = vrot.slane %v306, 4
        %v314 = vrot.slane %v308, 4
        %v315 = vrot.slane %v310, 4
        %vm316 = vcmask 1043456
        %v317 = vsel %vm316, %v311, %v312
        %vm318 = vcmask 908288
        %v319 = vsel %vm318, %v302, %v317
        %v320 = vsel %vm316, %v312, %v313
        %v321 = vsel %vm318, %v304, %v320
        %v322 = vsel %vm316, %v313, %v314
        %v323 = vsel %vm318, %v306, %v322
        %v324 = vsel %vm316, %v314, %v315
        %v325 = vsel %vm318, %v308, %v324
        %330 = vst [vmem:[#allocation2] sm:$0x33] %v319
        %331 = vst [vmem:[#allocation2 + $0x8] sm:$0x33] %v321
        %332 = vst [vmem:[#allocation2 + $0x10] sm:$0x33] %v323
        %333 = vst [vmem:[#allocation2 + $0x18] sm:$0x33] %v325
        %v334 = vld [vmem:[%s221] sm:$0xff]
        %v335 = vld [vmem:[%s221 + $0x8] sm:$0xff]
        %v336 = vld [vmem:[%s221 + $0x10] sm:$0x3]
        %v340 = vcombine.low %v334, %v334
        %v342 = vunpack.c.l.s4 1983009808
        %v343 = vunpack.c.0.s8 %v342
        %v344 = vlaneseq
        %v345 = vshrl.u32 %v344, 7
        %v346 = vsub.s32 %v343, %v345
        %v347 = vrot.slane %v340, %v346
        %v349 = vunpack.c.l.s4 1983009808
        %v350 = vunpack.c.0.s8 %v349
        %v351 = vlaneseq
        %v352 = vshrl.u32 %v351, 7
        %v353 = vsub.s32 %v350, %v352
        %v354 = vrot.slane %v334, %v353
        %v355 = vcombine.low %v335, %v335
        %v357 = vunpack.c.l.s4 1983009808
        %v358 = vunpack.c.0.s8 %v357
        %v359 = vlaneseq
        %v360 = vshrl.u32 %v359, 7
        %v361 = vsub.s32 %v358, %v360
        %v362 = vrot.slane %v355, %v361
        %v364 = vunpack.c.l.s4 1983009808
        %v365 = vunpack.c.0.s8 %v364
        %v366 = vlaneseq
        %v367 = vshrl.u32 %v366, 7
        %v368 = vsub.s32 %v365, %v367
        %v369 = vrot.slane %v335, %v368
        %v370 = vcombine.low %v336, %v336
        %v372 = vunpack.c.l.s4 1983009808
        %v373 = vunpack.c.0.s8 %v372
        %v374 = vlaneseq
        %v375 = vshrl.u32 %v374, 7
        %v376 = vsub.s32 %v373, %v375
        %v377 = vrot.slane %v370, %v376
        %378 = vrot.lane.b32.xlu0 %v347, 110
        %v379 = vpop.permute.xlu0 %378
        %380 = vrot.lane.b32.xlu0 %v354, 110
        %v381 = vpop.permute.xlu0 %380
        %382 = vrot.lane.b32.xlu0 %v362, 110
        %v383 = vpop.permute.xlu0 %382
        %384 = vrot.lane.b32.xlu0 %v369, 110
        %v385 = vpop.permute.xlu0 %384
        %386 = vrot.lane.b32.xlu0 %v377, 110
        %v387 = vpop.permute.xlu0 %386
        %v388 = vrot.slane %v379, 4
        %v389 = vrot.slane %v381, 4
        %v390 = vrot.slane %v383, 4
        %v391 = vrot.slane %v385, 4
        %v392 = vrot.slane %v387, 4
        %v393 = vsel %vm316, %v388, %v389
        %vm394 = vcmask 900096
        %v395 = vsel %vm394, %v379, %v393
        %v396 = vsel %vm316, %v389, %v390
        %v397 = vsel %vm394, %v381, %v396
        %v398 = vsel %vm316, %v390, %v391
        %v399 = vsel %vm394, %v383, %v398
        %v400 = vsel %vm316, %v391, %v392
        %v401 = vsel %vm394, %v385, %v400
        %406 = vst [vmem:[#allocation2] sm:$0xcc] %v395
        %407 = vst [vmem:[#allocation2 + $0x8] sm:$0xcc] %v397
        %408 = vst [vmem:[#allocation2 + $0x10] sm:$0xcc] %v399
        %409 = vst [vmem:[#allocation2 + $0x18] sm:$0xcc] %v401
        %v410 = vld [vmem:[%s221] sm:$0xff]
        %v411 = vld [vmem:[%s221 + $0x8] sm:$0xff]
        %v412 = vld [vmem:[%s221 + $0x10] sm:$0x3]
        %v416 = vcombine.high %v410, %v410
        %v418 = vunpack.c.l.s4 1983009808
        %v419 = vunpack.c.0.s8 %v418
        %v420 = vlaneseq
        %v421 = vshrl.u32 %v420, 7
        %v422 = vsub.s32 %v419, %v421
        %v423 = vrot.slane %v410, %v422
        %v425 = vunpack.c.l.s4 1983009808
        %v426 = vunpack.c.0.s8 %v425
        %v427 = vlaneseq
        %v428 = vshrl.u32 %v427, 7
        %v429 = vsub.s32 %v426, %v428
        %v430 = vrot.slane %v416, %v429
        %v431 = vcombine.high %v411, %v411
        %v433 = vunpack.c.l.s4 1983009808
        %v434 = vunpack.c.0.s8 %v433
        %v435 = vlaneseq
        %v436 = vshrl.u32 %v435, 7
        %v437 = vsub.s32 %v434, %v436
        %v438 = vrot.slane %v411, %v437
        %v440 = vunpack.c.l.s4 1983009808
        %v441 = vunpack.c.0.s8 %v440
        %v442 = vlaneseq
        %v443 = vshrl.u32 %v442, 7
        %v444 = vsub.s32 %v441, %v443
        %v445 = vrot.slane %v431, %v444
        %v447 = vunpack.c.l.s4 1983009808
        %v448 = vunpack.c.0.s8 %v447
        %v449 = vlaneseq
        %v450 = vshrl.u32 %v449, 7
        %v451 = vsub.s32 %v448, %v450
        %v452 = vrot.slane %v412, %v451
        %453 = vrot.lane.b32.xlu0 %v423, 109
        %v454 = vpop.permute.xlu0 %453
        %455 = vrot.lane.b32.xlu0 %v430, 109
        %v456 = vpop.permute.xlu0 %455
        %457 = vrot.lane.b32.xlu0 %v438, 109
        %v458 = vpop.permute.xlu0 %457
        %459 = vrot.lane.b32.xlu0 %v445, 109
        %v460 = vpop.permute.xlu0 %459
        %461 = vrot.lane.b32.xlu0 %v452, 109
        %v462 = vpop.permute.xlu0 %461
        %v463 = vrot.slane %v454, 4
        %v464 = vrot.slane %v456, 4
        %v465 = vrot.slane %v458, 4
        %v466 = vrot.slane %v460, 4
        %v467 = vrot.slane %v462, 4
        %v468 = vsel %vm316, %v463, %v464
        %vm469 = vcmask 891904
        %v470 = vsel %vm469, %v454, %v468
        %v471 = vsel %vm316, %v464, %v465
        %v472 = vsel %vm469, %v456, %v471
        %v473 = vsel %vm316, %v465, %v466
        %v474 = vsel %vm469, %v458, %v473
        %v475 = vsel %vm316, %v466, %v467
        %v476 = vsel %vm469, %v460, %v475
        %481 = vst [vmem:[#allocation2 + $0x20] sm:$0x33] %v470
        %482 = vst [vmem:[#allocation2 + $0x28] sm:$0x33] %v472
        %483 = vst [vmem:[#allocation2 + $0x30] sm:$0x33] %v474
        %484 = vst [vmem:[#allocation2 + $0x38] sm:$0x33] %v476
        %v485 = vld [vmem:[%s221] sm:$0xff]
        %v486 = vld [vmem:[%s221 + $0x8] sm:$0xff]
        %v487 = vld [vmem:[%s221 + $0x10] sm:$0x3]
        %v491 = vcombine.low %v485, %v485
        %v493 = vunpack.c.l.s4 1983009808
        %v494 = vunpack.c.0.s8 %v493
        %v495 = vlaneseq
        %v496 = vshrl.u32 %v495, 7
        %v497 = vsub.s32 %v494, %v496
        %v498 = vrot.slane %v491, %v497
        %v500 = vunpack.c.l.s4 1983009808
        %v501 = vunpack.c.0.s8 %v500
        %v502 = vlaneseq
        %v503 = vshrl.u32 %v502, 7
        %v504 = vsub.s32 %v501, %v503
        %v505 = vrot.slane %v485, %v504
        %v506 = vcombine.low %v486, %v486
        %v508 = vunpack.c.l.s4 1983009808
        %v509 = vunpack.c.0.s8 %v508
        %v510 = vlaneseq
        %v511 = vshrl.u32 %v510, 7
        %v512 = vsub.s32 %v509, %v511
        %v513 = vrot.slane %v506, %v512
        %v515 = vunpack.c.l.s4 1983009808
        %v516 = vunpack.c.0.s8 %v515
        %v517 = vlaneseq
        %v518 = vshrl.u32 %v517, 7
        %v519 = vsub.s32 %v516, %v518
        %v520 = vrot.slane %v486, %v519
        %v521 = vcombine.low %v487, %v487
        %v523 = vunpack.c.l.s4 1983009808
        %v524 = vunpack.c.0.s8 %v523
        %v525 = vlaneseq
        %v526 = vshrl.u32 %v525, 7
        %v527 = vsub.s32 %v524, %v526
        %v528 = vrot.slane %v521, %v527
        %529 = vrot.lane.b32.xlu0 %v498, 101
        %v530 = vpop.permute.xlu0 %529
        %531 = vrot.lane.b32.xlu0 %v505, 101
        %v532 = vpop.permute.xlu0 %531
        %533 = vrot.lane.b32.xlu0 %v513, 101
        %v534 = vpop.permute.xlu0 %533
        %535 = vrot.lane.b32.xlu0 %v520, 101
        %v536 = vpop.permute.xlu0 %535
        %537 = vrot.lane.b32.xlu0 %v528, 101
        %v538 = vpop.permute.xlu0 %537
        %v539 = vrot.slane %v530, 4
        %v540 = vrot.slane %v532, 4
        %v541 = vrot.slane %v534, 4
        %v542 = vrot.slane %v536, 4
        %v543 = vrot.slane %v538, 4
        %v544 = vsel %vm316, %v539, %v540
        %vm545 = vcmask 826368
        %v546 = vsel %vm545, %v530, %v544
        %v547 = vsel %vm316, %v540, %v541
        %v548 = vsel %vm545, %v532, %v547
        %v549 = vsel %vm316, %v541, %v542
        %v550 = vsel %vm545, %v534, %v549
        %v551 = vsel %vm316, %v542, %v543
        %v552 = vsel %vm545, %v536, %v551
        %557 = vst [vmem:[#allocation2 + $0x20] sm:$0xcc] %v546
        %558 = vst [vmem:[#allocation2 + $0x28] sm:$0xcc] %v548
        %559 = vst [vmem:[#allocation2 + $0x30] sm:$0xcc] %v550
        %560 = vst [vmem:[#allocation2 + $0x38] sm:$0xcc] %v552
        %v561 = vld [vmem:[%s221] sm:$0xff]
        %v562 = vld [vmem:[%s221 + $0x8] sm:$0xff]
        %v563 = vld [vmem:[%s221 + $0x10] sm:$0x3]
        %v567 = vcombine.high %v561, %v561
        %v569 = vunpack.c.l.s4 1983009808
        %v570 = vunpack.c.0.s8 %v569
        %v571 = vlaneseq
        %v572 = vshrl.u32 %v571, 7
        %v573 = vsub.s32 %v570, %v572
        %v574 = vrot.slane %v561, %v573
        %v576 = vunpack.c.l.s4 1983009808
        %v577 = vunpack.c.0.s8 %v576
        %v578 = vlaneseq
        %v579 = vshrl.u32 %v578, 7
        %v580 = vsub.s32 %v577, %v579
        %v581 = vrot.slane %v567, %v580
        %v582 = vcombine.high %v562, %v562
        %v584 = vunpack.c.l.s4 1983009808
        %v585 = vunpack.c.0.s8 %v584
        %v586 = vlaneseq
        %v587 = vshrl.u32 %v586, 7
        %v588 = vsub.s32 %v585, %v587
        %v589 = vrot.slane %v562, %v588
        %v591 = vunpack.c.l.s4 1983009808
        %v592 = vunpack.c.0.s8 %v591
        %v593 = vlaneseq
        %v594 = vshrl.u32 %v593, 7
        %v595 = vsub.s32 %v592, %v594
        %v596 = vrot.slane %v582, %v595
        %v598 = vunpack.c.l.s4 1983009808
        %v599 = vunpack.c.0.s8 %v598
        %v600 = vlaneseq
        %v601 = vshrl.u32 %v600, 7
        %v602 = vsub.s32 %v599, %v601
        %v603 = vrot.slane %v563, %v602
        %604 = vrot.lane.b32.xlu0 %v574, 100
        %v605 = vpop.permute.xlu0 %604
        %606 = vrot.lane.b32.xlu0 %v581, 100
        %v607 = vpop.permute.xlu0 %606
        %608 = vrot.lane.b32.xlu0 %v589, 100
        %v609 = vpop.permute.xlu0 %608
        %610 = vrot.lane.b32.xlu0 %v596, 100
        %v611 = vpop.permute.xlu0 %610
        %612 = vrot.lane.b32.xlu0 %v603, 100
        %v613 = vpop.permute.xlu0 %612
        %v614 = vrot.slane %v605, 4
        %v615 = vrot.slane %v607, 4
        %v616 = vrot.slane %v609, 4
        %v617 = vrot.slane %v611, 4
        %v618 = vrot.slane %v613, 4
        %v619 = vsel %vm316, %v614, %v615
        %vm620 = vcmask 818176
        %v621 = vsel %vm620, %v605, %v619
        %v622 = vsel %vm316, %v615, %v616
        %v623 = vsel %vm620, %v607, %v622
        %v624 = vsel %vm316, %v616, %v617
        %v625 = vsel %vm620, %v609, %v624
        %v626 = vsel %vm316, %v617, %v618
        %v627 = vsel %vm620, %v611, %v626
        %632 = vst [vmem:[#allocation2 + $0x40] sm:$0x33] %v621
        %633 = vst [vmem:[#allocation2 + $0x48] sm:$0x33] %v623
        %634 = vst [vmem:[#allocation2 + $0x50] sm:$0x33] %v625
        %635 = vst [vmem:[#allocation2 + $0x58] sm:$0x33] %v627
        %v636 = vld [vmem:[%s221] sm:$0xff]
        %v637 = vld [vmem:[%s221 + $0x8] sm:$0xff]
        %v638 = vld [vmem:[%s221 + $0x10] sm:$0x3]
        %v642 = vcombine.low %v636, %v636
        %v644 = vunpack.c.l.s4 1983009808
        %v645 = vunpack.c.0.s8 %v644
        %v646 = vlaneseq
        %v647 = vshrl.u32 %v646, 7
        %v648 = vsub.s32 %v645, %v647
        %v649 = vrot.slane %v642, %v648
        %v651 = vunpack.c.l.s4 1983009808
        %v652 = vunpack.c.0.s8 %v651
        %v653 = vlaneseq
        %v654 = vshrl.u32 %v653, 7
        %v655 = vsub.s32 %v652, %v654
        %v656 = vrot.slane %v636, %v655
        %v657 = vcombine.low %v637, %v637
        %v659 = vunpack.c.l.s4 1983009808
        %v660 = vunpack.c.0.s8 %v659
        %v661 = vlaneseq
        %v662 = vshrl.u32 %v661, 7
        %v663 = vsub.s32 %v660, %v662
        %v664 = vrot.slane %v657, %v663
        %v666 = vunpack.c.l.s4 1983009808
        %v667 = vunpack.c.0.s8 %v666
        %v668 = vlaneseq
        %v669 = vshrl.u32 %v668, 7
        %v670 = vsub.s32 %v667, %v669
        %v671 = vrot.slane %v637, %v670
        %v672 = vcombine.low %v638, %v638
        %v674 = vunpack.c.l.s4 1983009808
        %v675 = vunpack.c.0.s8 %v674
        %v676 = vlaneseq
        %v677 = vshrl.u32 %v676, 7
        %v678 = vsub.s32 %v675, %v677
        %v679 = vrot.slane %v672, %v678
        %680 = vrot.lane.b32.xlu0 %v649, 99
        %v681 = vpop.permute.xlu0 %680
        %682 = vrot.lane.b32.xlu0 %v656, 99
        %v683 = vpop.permute.xlu0 %682
        %684 = vrot.lane.b32.xlu0 %v664, 99
        %v685 = vpop.permute.xlu0 %684
        %686 = vrot.lane.b32.xlu0 %v671, 99
        %v687 = vpop.permute.xlu0 %686
        %688 = vrot.lane.b32.xlu0 %v679, 99
        %v689 = vpop.permute.xlu0 %688
        %v690 = vrot.slane %v681, 4
        %v691 = vrot.slane %v683, 4
        %v692 = vrot.slane %v685, 4
        %v693 = vrot.slane %v687, 4
        %v694 = vrot.slane %v689, 4
        %v695 = vsel %vm316, %v690, %v691
        %vm696 = vcmask 809984
        %v697 = vsel %vm696, %v681, %v695
        %v698 = vsel %vm316, %v691, %v692
        %v699 = vsel %vm696, %v683, %v698
        %v700 = vsel %vm316, %v692, %v693
        %v701 = vsel %vm696, %v685, %v700
        %v702 = vsel %vm316, %v693, %v694
        %v703 = vsel %vm696, %v687, %v702
        %708 = vst [vmem:[#allocation2 + $0x40] sm:$0xcc] %v697
        %709 = vst [vmem:[#allocation2 + $0x48] sm:$0xcc] %v699
        %710 = vst [vmem:[#allocation2 + $0x50] sm:$0xcc] %v701
        %711 = vst [vmem:[#allocation2 + $0x58] sm:$0xcc] %v703
        %v712 = vld [vmem:[%s221] sm:$0xff]
        %v713 = vld [vmem:[%s221 + $0x8] sm:$0xff]
        %v714 = vld [vmem:[%s221 + $0x10] sm:$0x3]
        %v718 = vcombine.high %v712, %v712
        %v720 = vunpack.c.l.s4 1983009808
        %v721 = vunpack.c.0.s8 %v720
        %v722 = vlaneseq
        %v723 = vshrl.u32 %v722, 7
        %v724 = vsub.s32 %v721, %v723
        %v725 = vrot.slane %v712, %v724
        %v727 = vunpack.c.l.s4 1983009808
        %v728 = vunpack.c.0.s8 %v727
        %v729 = vlaneseq
        %v730 = vshrl.u32 %v729, 7
        %v731 = vsub.s32 %v728, %v730
        %v732 = vrot.slane %v718, %v731
        %v733 = vcombine.high %v713, %v713
        %v735 = vunpack.c.l.s4 1983009808
        %v736 = vunpack.c.0.s8 %v735
        %v737 = vlaneseq
        %v738 = vshrl.u32 %v737, 7
        %v739 = vsub.s32 %v736, %v738
        %v740 = vrot.slane %v713, %v739
        %v742 = vunpack.c.l.s4 1983009808
        %v743 = vunpack.c.0.s8 %v742
        %v744 = vlaneseq
        %v745 = vshrl.u32 %v744, 7
        %v746 = vsub.s32 %v743, %v745
        %v747 = vrot.slane %v733, %v746
        %v749 = vunpack.c.l.s4 1983009808
        %v750 = vunpack.c.0.s8 %v749
        %v751 = vlaneseq
        %v752 = vshrl.u32 %v751, 7
        %v753 = vsub.s32 %v750, %v752
        %v754 = vrot.slane %v714, %v753
        %755 = vrot.lane.b32.xlu0 %v725, 91
        %v756 = vpop.permute.xlu0 %755
        %757 = vrot.lane.b32.xlu0 %v732, 91
        %v758 = vpop.permute.xlu0 %757
        %759 = vrot.lane.b32.xlu0 %v740, 91
        %v760 = vpop.permute.xlu0 %759
        %761 = vrot.lane.b32.xlu0 %v747, 91
        %v762 = vpop.permute.xlu0 %761
        %763 = vrot.lane.b32.xlu0 %v754, 91
        %v764 = vpop.permute.xlu0 %763
        %v765 = vrot.slane %v756, 4
        %v766 = vrot.slane %v758, 4
        %v767 = vrot.slane %v760, 4
        %v768 = vrot.slane %v762, 4
        %v769 = vrot.slane %v764, 4
        %v770 = vsel %vm316, %v765, %v766
        %vm771 = vcmask 744448
        %v772 = vsel %vm771, %v756, %v770
        %v773 = vsel %vm316, %v766, %v767
        %v774 = vsel %vm771, %v758, %v773
        %v775 = vsel %vm316, %v767, %v768
        %v776 = vsel %vm771, %v760, %v775
        %v777 = vsel %vm316, %v768, %v769
        %v778 = vsel %vm771, %v762, %v777
        %783 = vst [vmem:[#allocation2 + $0x60] sm:$0x33] %v772
        %784 = vst [vmem:[#allocation2 + $0x68] sm:$0x33] %v774
        %785 = vst [vmem:[#allocation2 + $0x70] sm:$0x33] %v776
        %786 = vst [vmem:[#allocation2 + $0x78] sm:$0x33] %v778
        %v787 = vld [vmem:[%s221] sm:$0xff]
        %v788 = vld [vmem:[%s221 + $0x8] sm:$0xff]
        %v789 = vld [vmem:[%s221 + $0x10] sm:$0x3]
        %v793 = vcombine.low %v787, %v787
        %v795 = vunpack.c.l.s4 1983009808
        %v796 = vunpack.c.0.s8 %v795
        %v797 = vlaneseq
        %v798 = vshrl.u32 %v797, 7
        %v799 = vsub.s32 %v796, %v798
        %v800 = vrot.slane %v793, %v799
        %v802 = vunpack.c.l.s4 1983009808
        %v803 = vunpack.c.0.s8 %v802
        %v804 = vlaneseq
        %v805 = vshrl.u32 %v804, 7
        %v806 = vsub.s32 %v803, %v805
        %v807 = vrot.slane %v787, %v806
        %v808 = vcombine.low %v788, %v788
        %v810 = vunpack.c.l.s4 1983009808
        %v811 = vunpack.c.0.s8 %v810
        %v812 = vlaneseq
        %v813 = vshrl.u32 %v812, 7
        %v814 = vsub.s32 %v811, %v813
        %v815 = vrot.slane %v808, %v814
        %v817 = vunpack.c.l.s4 1983009808
        %v818 = vunpack.c.0.s8 %v817
        %v819 = vlaneseq
        %v820 = vshrl.u32 %v819, 7
        %v821 = vsub.s32 %v818, %v820
        %v822 = vrot.slane %v788, %v821
        %v823 = vcombine.low %v789, %v789
        %v825 = vunpack.c.l.s4 1983009808
        %v826 = vunpack.c.0.s8 %v825
        %v827 = vlaneseq
        %v828 = vshrl.u32 %v827, 7
        %v829 = vsub.s32 %v826, %v828
        %v830 = vrot.slane %v823, %v829
        %831 = vrot.lane.b32.xlu0 %v800, 90
        %v832 = vpop.permute.xlu0 %831
        %833 = vrot.lane.b32.xlu0 %v807, 90
        %v834 = vpop.permute.xlu0 %833
        %835 = vrot.lane.b32.xlu0 %v815, 90
        %v836 = vpop.permute.xlu0 %835
        %837 = vrot.lane.b32.xlu0 %v822, 90
        %v838 = vpop.permute.xlu0 %837
        %839 = vrot.lane.b32.xlu0 %v830, 90
        %v840 = vpop.permute.xlu0 %839
        %v841 = vrot.slane %v832, 4
        %v842 = vrot.slane %v834, 4
        %v843 = vrot.slane %v836, 4
        %v844 = vrot.slane %v838, 4
        %v845 = vrot.slane %v840, 4
        %v846 = vsel %vm316, %v841, %v842
        %vm847 = vcmask 736256
        %v848 = vsel %vm847, %v832, %v846
        %v849 = vsel %vm316, %v842, %v843
        %v850 = vsel %vm847, %v834, %v849
        %v851 = vsel %vm316, %v843, %v844
        %v852 = vsel %vm847, %v836, %v851
        %v853 = vsel %vm316, %v844, %v845
        %v854 = vsel %vm847, %v838, %v853
        %859 = vst [vmem:[#allocation2 + $0x60] sm:$0xcc] %v848
        %860 = vst [vmem:[#allocation2 + $0x68] sm:$0xcc] %v850
        %861 = vst [vmem:[#allocation2 + $0x70] sm:$0xcc] %v852
        %862 = vst [vmem:[#allocation2 + $0x78] sm:$0xcc] %v854
        %v863 = vld [vmem:[%s221] sm:$0xff]
        %v864 = vld [vmem:[%s221 + $0x8] sm:$0xff]
        %v865 = vld [vmem:[%s221 + $0x10] sm:$0x3]
        %v869 = vcombine.high %v863, %v863
        %v871 = vunpack.c.l.s4 1983009808
        %v872 = vunpack.c.0.s8 %v871
        %v873 = vlaneseq
        %v874 = vshrl.u32 %v873, 7
        %v875 = vsub.s32 %v872, %v874
        %v876 = vrot.slane %v863, %v875
        %v878 = vunpack.c.l.s4 1983009808
        %v879 = vunpack.c.0.s8 %v878
        %v880 = vlaneseq
        %v881 = vshrl.u32 %v880, 7
        %v882 = vsub.s32 %v879, %v881
        %v883 = vrot.slane %v869, %v882
        %v884 = vcombine.high %v864, %v864
        %v886 = vunpack.c.l.s4 1983009808
        %v887 = vunpack.c.0.s8 %v886
        %v888 = vlaneseq
        %v889 = vshrl.u32 %v888, 7
        %v890 = vsub.s32 %v887, %v889
        %v891 = vrot.slane %v864, %v890
        %v893 = vunpack.c.l.s4 1983009808
        %v894 = vunpack.c.0.s8 %v893
        %v895 = vlaneseq
        %v896 = vshrl.u32 %v895, 7
        %v897 = vsub.s32 %v894, %v896
        %v898 = vrot.slane %v884, %v897
        %v900 = vunpack.c.l.s4 1983009808
        %v901 = vunpack.c.0.s8 %v900
        %v902 = vlaneseq
        %v903 = vshrl.u32 %v902, 7
        %v904 = vsub.s32 %v901, %v903
        %v905 = vrot.slane %v865, %v904
        %906 = vrot.lane.b32.xlu0 %v876, 89
        %v907 = vpop.permute.xlu0 %906
        %908 = vrot.lane.b32.xlu0 %v883, 89
        %v909 = vpop.permute.xlu0 %908
        %910 = vrot.lane.b32.xlu0 %v891, 89
        %v911 = vpop.permute.xlu0 %910
        %912 = vrot.lane.b32.xlu0 %v898, 89
        %v913 = vpop.permute.xlu0 %912
        %914 = vrot.lane.b32.xlu0 %v905, 89
        %v915 = vpop.permute.xlu0 %914
        %v916 = vrot.slane %v907, 4
        %v917 = vrot.slane %v909, 4
        %v918 = vrot.slane %v911, 4
        %v919 = vrot.slane %v913, 4
        %v920 = vrot.slane %v915, 4
        %v921 = vsel %vm316, %v916, %v917
        %vm922 = vcmask 728064
        %v923 = vsel %vm922, %v907, %v921
        %v924 = vsel %vm316, %v917, %v918
        %v925 = vsel %vm922, %v909, %v924
        %v926 = vsel %vm316, %v918, %v919
        %v927 = vsel %vm922, %v911, %v926
        %v928 = vsel %vm316, %v919, %v920
        %v929 = vsel %vm922, %v913, %v928
        %934 = vst [vmem:[#allocation2 + $0x80] sm:$0x33] %v923
        %935 = vst [vmem:[#allocation2 + $0x88] sm:$0x33] %v925
        %936 = vst [vmem:[#allocation2 + $0x90] sm:$0x33] %v927
        %937 = vst [vmem:[#allocation2 + $0x98] sm:$0x33] %v929
        %v938 = vld [vmem:[%s221] sm:$0xff]
        %v939 = vld [vmem:[%s221 + $0x8] sm:$0xff]
        %v940 = vld [vmem:[%s221 + $0x10] sm:$0x3]
        %v944 = vcombine.low %v938, %v938
        %v946 = vunpack.c.l.s4 1983009808
        %v947 = vunpack.c.0.s8 %v946
        %v948 = vlaneseq
        %v949 = vshrl.u32 %v948, 7
        %v950 = vsub.s32 %v947, %v949
        %v951 = vrot.slane %v944, %v950
        %v953 = vunpack.c.l.s4 1983009808
        %v954 = vunpack.c.0.s8 %v953
        %v955 = vlaneseq
        %v956 = vshrl.u32 %v955, 7
        %v957 = vsub.s32 %v954, %v956
        %v958 = vrot.slane %v938, %v957
        %v959 = vcombine.low %v939, %v939
        %v961 = vunpack.c.l.s4 1983009808
        %v962 = vunpack.c.0.s8 %v961
        %v963 = vlaneseq
        %v964 = vshrl.u32 %v963, 7
        %v965 = vsub.s32 %v962, %v964
        %v966 = vrot.slane %v959, %v965
        %v968 = vunpack.c.l.s4 1983009808
        %v969 = vunpack.c.0.s8 %v968
        %v970 = vlaneseq
        %v971 = vshrl.u32 %v970, 7
        %v972 = vsub.s32 %v969, %v971
        %v973 = vrot.slane %v939, %v972
        %v974 = vcombine.low %v940, %v940
        %v976 = vunpack.c.l.s4 1983009808
        %v977 = vunpack.c.0.s8 %v976
        %v978 = vlaneseq
        %v979 = vshrl.u32 %v978, 7
        %v980 = vsub.s32 %v977, %v979
        %v981 = vrot.slane %v974, %v980
        %982 = vrot.lane.b32.xlu0 %v951, 11
        %v983 = vpop.permute.xlu0 %982
        %984 = vrot.lane.b32.xlu0 %v958, 11
        %v985 = vpop.permute.xlu0 %984
        %986 = vrot.lane.b32.xlu0 %v966, 11
        %v987 = vpop.permute.xlu0 %986
        %988 = vrot.lane.b32.xlu0 %v973, 11
        %v989 = vpop.permute.xlu0 %988
        %990 = vrot.lane.b32.xlu0 %v981, 11
        %v991 = vpop.permute.xlu0 %990
        %v992 = vrot.slane %v983, 4
        %v993 = vrot.slane %v985, 4
        %v994 = vrot.slane %v987, 4
        %v995 = vrot.slane %v989, 4
        %v996 = vrot.slane %v991, 4
        %v997 = vsel %vm316, %v992, %v993
        %vm998 = vcmask 89088
        %v999 = vsel %vm998, %v983, %v997
        %v1000 = vsel %vm316, %v993, %v994
        %v1001 = vsel %vm998, %v985, %v1000
        %v1002 = vsel %vm316, %v994, %v995
        %v1003 = vsel %vm998, %v987, %v1002
        %v1004 = vsel %vm316, %v995, %v996
        %v1005 = vsel %vm998, %v989, %v1004
        %1010 = vst [vmem:[#allocation2 + $0x80] sm:$0xcc] %v999
        %1011 = vst [vmem:[#allocation2 + $0x88] sm:$0xcc] %v1001
        %1012 = vst [vmem:[#allocation2 + $0x90] sm:$0xcc] %v1003
        %1013 = vst [vmem:[#allocation2 + $0x98] sm:$0xcc] %v1005
        %v1014 = vld [vmem:[%s221] sm:$0xff]
        %v1015 = vld [vmem:[%s221 + $0x8] sm:$0xff]
        %v1016 = vld [vmem:[%s221 + $0x10] sm:$0x3]
        %v1020 = vcombine.high %v1014, %v1014
        %v1022 = vunpack.c.l.s4 1983009808
        %v1023 = vunpack.c.0.s8 %v1022
        %v1024 = vlaneseq
        %v1025 = vshrl.u32 %v1024, 7
        %v1026 = vsub.s32 %v1023, %v1025
        %v1027 = vrot.slane %v1014, %v1026
        %v1029 = vunpack.c.l.s4 1983009808
        %v1030 = vunpack.c.0.s8 %v1029
        %v1031 = vlaneseq
        %v1032 = vshrl.u32 %v1031, 7
        %v1033 = vsub.s32 %v1030, %v1032
        %v1034 = vrot.slane %v1020, %v1033
        %v1035 = vcombine.high %v1015, %v1015
        %v1037 = vunpack.c.l.s4 1983009808
        %v1038 = vunpack.c.0.s8 %v1037
        %v1039 = vlaneseq
        %v1040 = vshrl.u32 %v1039, 7
        %v1041 = vsub.s32 %v1038, %v1040
        %v1042 = vrot.slane %v1015, %v1041
        %v1044 = vunpack.c.l.s4 1983009808
        %v1045 = vunpack.c.0.s8 %v1044
        %v1046 = vlaneseq
        %v1047 = vshrl.u32 %v1046, 7
        %v1048 = vsub.s32 %v1045, %v1047
        %v1049 = vrot.slane %v1035, %v1048
        %v1051 = vunpack.c.l.s4 1983009808
        %v1052 = vunpack.c.0.s8 %v1051
        %v1053 = vlaneseq
        %v1054 = vshrl.u32 %v1053, 7
        %v1055 = vsub.s32 %v1052, %v1054
        %v1056 = vrot.slane %v1016, %v1055
        %1057 = vrot.lane.b32.xlu0 %v1027, 10
        %v1058 = vpop.permute.xlu0 %1057
        %1059 = vrot.lane.b32.xlu0 %v1034, 10
        %v1060 = vpop.permute.xlu0 %1059
        %1061 = vrot.lane.b32.xlu0 %v1042, 10
        %v1062 = vpop.permute.xlu0 %1061
        %1063 = vrot.lane.b32.xlu0 %v1049, 10
        %v1064 = vpop.permute.xlu0 %1063
        %1065 = vrot.lane.b32.xlu0 %v1056, 10
        %v1066 = vpop.permute.xlu0 %1065
        %v1067 = vrot.slane %v1058, 4
        %v1068 = vrot.slane %v1060, 4
        %v1069 = vrot.slane %v1062, 4
        %v1070 = vrot.slane %v1064, 4
        %v1071 = vrot.slane %v1066, 4
        %v1072 = vsel %vm316, %v1067, %v1068
        %vm1073 = vcmask 80896
        %v1074 = vsel %vm1073, %v1058, %v1072
        %v1075 = vsel %vm316, %v1068, %v1069
        %v1076 = vsel %vm1073, %v1060, %v1075
        %v1077 = vsel %vm316, %v1069, %v1070
        %v1078 = vsel %vm1073, %v1062, %v1077
        %v1079 = vsel %vm316, %v1070, %v1071
        %v1080 = vsel %vm1073, %v1064, %v1079
        %1085 = vst [vmem:[#allocation2 + $0xa0] sm:$0x33] %v1074
        %1086 = vst [vmem:[#allocation2 + $0xa8] sm:$0x33] %v1076
        %1087 = vst [vmem:[#allocation2 + $0xb0] sm:$0x33] %v1078
        %1088 = vst [vmem:[#allocation2 + $0xb8] sm:$0x33] %v1080
        %v1089 = vld [vmem:[%s221] sm:$0xff]
        %v1090 = vld [vmem:[%s221 + $0x8] sm:$0xff]
        %v1091 = vld [vmem:[%s221 + $0x10] sm:$0x3]
        %v1095 = vcombine.low %v1089, %v1089
        %v1097 = vunpack.c.l.s4 1983009808
        %v1098 = vunpack.c.0.s8 %v1097
        %v1099 = vlaneseq
        %v1100 = vshrl.u32 %v1099, 7
        %v1101 = vsub.s32 %v1098, %v1100
        %v1102 = vrot.slane %v1095, %v1101
        %v1104 = vunpack.c.l.s4 1983009808
        %v1105 = vunpack.c.0.s8 %v1104
        %v1106 = vlaneseq
        %v1107 = vshrl.u32 %v1106, 7
        %v1108 = vsub.s32 %v1105, %v1107
        %v1109 = vrot.slane %v1089, %v1108
        %v1110 = vcombine.low %v1090, %v1090
        %v1112 = vunpack.c.l.s4 1983009808
        %v1113 = vunpack.c.0.s8 %v1112
        %v1114 = vlaneseq
        %v1115 = vshrl.u32 %v1114, 7
        %v1116 = vsub.s32 %v1113, %v1115
        %v1117 = vrot.slane %v1110, %v1116
        %v1119 = vunpack.c.l.s4 1983009808
        %v1120 = vunpack.c.0.s8 %v1119
        %v1121 = vlaneseq
        %v1122 = vshrl.u32 %v1121, 7
        %v1123 = vsub.s32 %v1120, %v1122
        %v1124 = vrot.slane %v1090, %v1123
        %v1125 = vcombine.low %v1091, %v1091
        %v1127 = vunpack.c.l.s4 1983009808
        %v1128 = vunpack.c.0.s8 %v1127
        %v1129 = vlaneseq
        %v1130 = vshrl.u32 %v1129, 7
        %v1131 = vsub.s32 %v1128, %v1130
        %v1132 = vrot.slane %v1125, %v1131
        %1133 = vrot.lane.b32.xlu0 %v1102, 9
        %v1134 = vpop.permute.xlu0 %1133
        %1135 = vrot.lane.b32.xlu0 %v1109, 9
        %v1136 = vpop.permute.xlu0 %1135
        %1137 = vrot.lane.b32.xlu0 %v1117, 9
        %v1138 = vpop.permute.xlu0 %1137
        %1139 = vrot.lane.b32.xlu0 %v1124, 9
        %v1140 = vpop.permute.xlu0 %1139
        %1141 = vrot.lane.b32.xlu0 %v1132, 9
        %v1142 = vpop.permute.xlu0 %1141
        %v1143 = vrot.slane %v1134, 4
        %v1144 = vrot.slane %v1136, 4
        %v1145 = vrot.slane %v1138, 4
        %v1146 = vrot.slane %v1140, 4
        %v1147 = vrot.slane %v1142, 4
        %v1148 = vsel %vm316, %v1143, %v1144
        %vm1149 = vcmask 72704
        %v1150 = vsel %vm1149, %v1134, %v1148
        %v1151 = vsel %vm316, %v1144, %v1145
        %v1152 = vsel %vm1149, %v1136, %v1151
        %v1153 = vsel %vm316, %v1145, %v1146
        %v1154 = vsel %vm1149, %v1138, %v1153
        %v1155 = vsel %vm316, %v1146, %v1147
        %v1156 = vsel %vm1149, %v1140, %v1155
        %1161 = vst [vmem:[#allocation2 + $0xa0] sm:$0xcc] %v1150
        %1162 = vst [vmem:[#allocation2 + $0xa8] sm:$0xcc] %v1152
        %1163 = vst [vmem:[#allocation2 + $0xb0] sm:$0xcc] %v1154
        %1164 = vst [vmem:[#allocation2 + $0xb8] sm:$0xcc] %v1156
        %v1165 = vld [vmem:[%s221] sm:$0xff]
        %v1166 = vld [vmem:[%s221 + $0x8] sm:$0xff]
        %v1167 = vld [vmem:[%s221 + $0x10] sm:$0x3]
        %v1171 = vcombine.high %v1165, %v1165
        %v1173 = vunpack.c.l.s4 1983009808
        %v1174 = vunpack.c.0.s8 %v1173
        %v1175 = vlaneseq
        %v1176 = vshrl.u32 %v1175, 7
        %v1177 = vsub.s32 %v1174, %v1176
        %v1178 = vrot.slane %v1165, %v1177
        %v1180 = vunpack.c.l.s4 1983009808
        %v1181 = vunpack.c.0.s8 %v1180
        %v1182 = vlaneseq
        %v1183 = vshrl.u32 %v1182, 7
        %v1184 = vsub.s32 %v1181, %v1183
        %v1185 = vrot.slane %v1171, %v1184
        %v1186 = vcombine.high %v1166, %v1166
        %v1188 = vunpack.c.l.s4 1983009808
        %v1189 = vunpack.c.0.s8 %v1188
        %v1190 = vlaneseq
        %v1191 = vshrl.u32 %v1190, 7
        %v1192 = vsub.s32 %v1189, %v1191
        %v1193 = vrot.slane %v1166, %v1192
        %v1195 = vunpack.c.l.s4 1983009808
        %v1196 = vunpack.c.0.s8 %v1195
        %v1197 = vlaneseq
        %v1198 = vshrl.u32 %v1197, 7
        %v1199 = vsub.s32 %v1196, %v1198
        %v1200 = vrot.slane %v1186, %v1199
        %v1202 = vunpack.c.l.s4 1983009808
        %v1203 = vunpack.c.0.s8 %v1202
        %v1204 = vlaneseq
        %v1205 = vshrl.u32 %v1204, 7
        %v1206 = vsub.s32 %v1203, %v1205
        %v1207 = vrot.slane %v1167, %v1206
        %1208 = vrot.lane.b32.xlu0 %v1178, 1
        %v1209 = vpop.permute.xlu0 %1208
        %1210 = vrot.lane.b32.xlu0 %v1185, 1
        %v1211 = vpop.permute.xlu0 %1210
        %1212 = vrot.lane.b32.xlu0 %v1193, 1
        %v1213 = vpop.permute.xlu0 %1212
        %1214 = vrot.lane.b32.xlu0 %v1200, 1
        %v1215 = vpop.permute.xlu0 %1214
        %1216 = vrot.lane.b32.xlu0 %v1207, 1
        %v1217 = vpop.permute.xlu0 %1216
        %v1218 = vrot.slane %v1209, 4
        %v1219 = vrot.slane %v1211, 4
        %v1220 = vrot.slane %v1213, 4
        %v1221 = vrot.slane %v1215, 4
        %v1222 = vrot.slane %v1217, 4
        %v1223 = vsel %vm316, %v1218, %v1219
        %vm1224 = vcmask 7168
        %v1225 = vsel %vm1224, %v1209, %v1223
        %v1226 = vsel %vm316, %v1219, %v1220
        %v1227 = vsel %vm1224, %v1211, %v1226
        %v1228 = vsel %vm316, %v1220, %v1221
        %v1229 = vsel %vm1224, %v1213, %v1228
        %v1230 = vsel %vm316, %v1221, %v1222
        %v1231 = vsel %vm1224, %v1215, %v1230
        %1236 = vst [vmem:[#allocation2 + $0xc0] sm:$0x33] %v1225
        %1237 = vst [vmem:[#allocation2 + $0xc8] sm:$0x33] %v1227
        %1238 = vst [vmem:[#allocation2 + $0xd0] sm:$0x33] %v1229
        %1239 = vst [vmem:[#allocation2 + $0xd8] sm:$0x33] %v1231
        %v1240 = vld [vmem:[%s221 + $0x2] sm:$0xff]
        %v1241 = vld [vmem:[%s221 + $0xa] sm:$0xff]
        %v1244 = vcombine.low %v1240, %v1240
        %v1246 = vunpack.c.l.s4 1983009808
        %v1247 = vunpack.c.0.s8 %v1246
        %v1248 = vlaneseq
        %v1249 = vshrl.u32 %v1248, 7
        %v1250 = vsub.s32 %v1247, %v1249
        %v1251 = vrot.slane %v1244, %v1250
        %v1253 = vunpack.c.l.s4 1983009808
        %v1254 = vunpack.c.0.s8 %v1253
        %v1255 = vlaneseq
        %v1256 = vshrl.u32 %v1255, 7
        %v1257 = vsub.s32 %v1254, %v1256
        %v1258 = vrot.slane %v1240, %v1257
        %v1259 = vcombine.low %v1241, %v1241
        %v1261 = vunpack.c.l.s4 1983009808
        %v1262 = vunpack.c.0.s8 %v1261
        %v1263 = vlaneseq
        %v1264 = vshrl.u32 %v1263, 7
        %v1265 = vsub.s32 %v1262, %v1264
        %v1266 = vrot.slane %v1259, %v1265
        %v1268 = vunpack.c.l.s4 1983009808
        %v1269 = vunpack.c.0.s8 %v1268
        %v1270 = vlaneseq
        %v1271 = vshrl.u32 %v1270, 7
        %v1272 = vsub.s32 %v1269, %v1271
        %v1273 = vrot.slane %v1241, %v1272
        %1278 = vst [vmem:[#allocation2 + $0xc0] sm:$0xcc] %v1251
        %1279 = vst [vmem:[#allocation2 + $0xc8] sm:$0xcc] %v1258
        %1280 = vst [vmem:[#allocation2 + $0xd0] sm:$0xcc] %v1266
        %1281 = vst [vmem:[#allocation2 + $0xd8] sm:$0xcc] %v1273
        %v1282 = vld [vmem:[%s221 + $0x2] sm:$0xff]
        %v1283 = vld [vmem:[%s221 + $0xa] sm:$0xff]
        %v1284 = vld [vmem:[%s221 + $0x12] sm:$0x3]
        %v1288 = vcombine.high %v1282, %v1282
        %v1290 = vunpack.c.l.s4 1983009808
        %v1291 = vunpack.c.0.s8 %v1290
        %v1292 = vlaneseq
        %v1293 = vshrl.u32 %v1292, 7
        %v1294 = vsub.s32 %v1291, %v1293
        %v1295 = vrot.slane %v1282, %v1294
        %v1297 = vunpack.c.l.s4 1983009808
        %v1298 = vunpack.c.0.s8 %v1297
        %v1299 = vlaneseq
        %v1300 = vshrl.u32 %v1299, 7
        %v1301 = vsub.s32 %v1298, %v1300
        %v1302 = vrot.slane %v1288, %v1301
        %v1303 = vcombine.high %v1283, %v1283
        %v1305 = vunpack.c.l.s4 1983009808
        %v1306 = vunpack.c.0.s8 %v1305
        %v1307 = vlaneseq
        %v1308 = vshrl.u32 %v1307, 7
        %v1309 = vsub.s32 %v1306, %v1308
        %v1310 = vrot.slane %v1283, %v1309
        %v1312 = vunpack.c.l.s4 1983009808
        %v1313 = vunpack.c.0.s8 %v1312
        %v1314 = vlaneseq
        %v1315 = vshrl.u32 %v1314, 7
        %v1316 = vsub.s32 %v1313, %v1315
        %v1317 = vrot.slane %v1303, %v1316
        %v1319 = vunpack.c.l.s4 1983009808
        %v1320 = vunpack.c.0.s8 %v1319
        %v1321 = vlaneseq
        %v1322 = vshrl.u32 %v1321, 7
        %v1323 = vsub.s32 %v1320, %v1322
        %v1324 = vrot.slane %v1284, %v1323
        %1325 = vrot.lane.b32.xlu0 %v1295, 127
        %v1326 = vpop.permute.xlu0 %1325
        %1327 = vrot.lane.b32.xlu0 %v1302, 127
        %v1328 = vpop.permute.xlu0 %1327
        %1329 = vrot.lane.b32.xlu0 %v1310, 127
        %v1330 = vpop.permute.xlu0 %1329
        %1331 = vrot.lane.b32.xlu0 %v1317, 127
        %v1332 = vpop.permute.xlu0 %1331
        %1333 = vrot.lane.b32.xlu0 %v1324, 127
        %v1334 = vpop.permute.xlu0 %1333
        %v1335 = vrot.slane %v1326, 4
        %v1336 = vrot.slane %v1328, 4
        %v1337 = vrot.slane %v1330, 4
        %v1338 = vrot.slane %v1332, 4
        %v1339 = vrot.slane %v1334, 4
        %v1340 = vsel %vm316, %v1335, %v1336
        %vm1341 = vcmask 1039360
        %v1342 = vsel %vm1341, %v1326, %v1340
        %v1343 = vsel %vm316, %v1336, %v1337
        %v1344 = vsel %vm1341, %v1328, %v1343
        %v1345 = vsel %vm316, %v1337, %v1338
        %v1346 = vsel %vm1341, %v1330, %v1345
        %v1347 = vsel %vm316, %v1338, %v1339
        %v1348 = vsel %vm1341, %v1332, %v1347
        %1353 = vst [vmem:[#allocation2 + $0xe0] sm:$0x33] %v1342
        %1354 = vst [vmem:[#allocation2 + $0xe8] sm:$0x33] %v1344
        %1355 = vst [vmem:[#allocation2 + $0xf0] sm:$0x33] %v1346
        %1356 = vst [vmem:[#allocation2 + $0xf8] sm:$0x33] %v1348
        %v1357 = vld [vmem:[%s221 + $0x2] sm:$0xff]
        %v1358 = vld [vmem:[%s221 + $0xa] sm:$0xff]
        %v1359 = vld [vmem:[%s221 + $0x12] sm:$0x3]
        %v1363 = vcombine.low %v1357, %v1357
        %v1365 = vunpack.c.l.s4 1983009808
        %v1366 = vunpack.c.0.s8 %v1365
        %v1367 = vlaneseq
        %v1368 = vshrl.u32 %v1367, 7
        %v1369 = vsub.s32 %v1366, %v1368
        %v1370 = vrot.slane %v1363, %v1369
        %v1372 = vunpack.c.l.s4 1983009808
        %v1373 = vunpack.c.0.s8 %v1372
        %v1374 = vlaneseq
        %v1375 = vshrl.u32 %v1374, 7
        %v1376 = vsub.s32 %v1373, %v1375
        %v1377 = vrot.slane %v1357, %v1376
        %v1378 = vcombine.low %v1358, %v1358
        %v1380 = vunpack.c.l.s4 1983009808
        %v1381 = vunpack.c.0.s8 %v1380
        %v1382 = vlaneseq
        %v1383 = vshrl.u32 %v1382, 7
        %v1384 = vsub.s32 %v1381, %v1383
        %v1385 = vrot.slane %v1378, %v1384
        %v1387 = vunpack.c.l.s4 1983009808
        %v1388 = vunpack.c.0.s8 %v1387
        %v1389 = vlaneseq
        %v1390 = vshrl.u32 %v1389, 7
        %v1391 = vsub.s32 %v1388, %v1390
        %v1392 = vrot.slane %v1358, %v1391
        %v1393 = vcombine.low %v1359, %v1359
        %v1395 = vunpack.c.l.s4 1983009808
        %v1396 = vunpack.c.0.s8 %v1395
        %v1397 = vlaneseq
        %v1398 = vshrl.u32 %v1397, 7
        %v1399 = vsub.s32 %v1396, %v1398
        %v1400 = vrot.slane %v1393, %v1399
        %1401 = vrot.lane.b32.xlu0 %v1370, 119
        %v1402 = vpop.permute.xlu0 %1401
        %1403 = vrot.lane.b32.xlu0 %v1377, 119
        %v1404 = vpop.permute.xlu0 %1403
        %1405 = vrot.lane.b32.xlu0 %v1385, 119
        %v1406 = vpop.permute.xlu0 %1405
        %1407 = vrot.lane.b32.xlu0 %v1392, 119
        %v1408 = vpop.permute.xlu0 %1407
        %1409 = vrot.lane.b32.xlu0 %v1400, 119
        %v1410 = vpop.permute.xlu0 %1409
        %v1411 = vrot.slane %v1402, 4
        %v1412 = vrot.slane %v1404, 4
        %v1413 = vrot.slane %v1406, 4
        %v1414 = vrot.slane %v1408, 4
        %v1415 = vrot.slane %v1410, 4
        %v1416 = vsel %vm316, %v1411, %v1412
        %vm1417 = vcmask 973824
        %v1418 = vsel %vm1417, %v1402, %v1416
        %v1419 = vsel %vm316, %v1412, %v1413
        %v1420 = vsel %vm1417, %v1404, %v1419
        %v1421 = vsel %vm316, %v1413, %v1414
        %v1422 = vsel %vm1417, %v1406, %v1421
        %v1423 = vsel %vm316, %v1414, %v1415
        %v1424 = vsel %vm1417, %v1408, %v1423
        %1429 = vst [vmem:[#allocation2 + $0xe0] sm:$0xcc] %v1418
        %1430 = vst [vmem:[#allocation2 + $0xe8] sm:$0xcc] %v1420
        %1431 = vst [vmem:[#allocation2 + $0xf0] sm:$0xcc] %v1422
        %1432 = vst [vmem:[#allocation2 + $0xf8] sm:$0xcc] %v1424
        %v1433 = vld [vmem:[%s221 + $0x2] sm:$0xff]
        %v1434 = vld [vmem:[%s221 + $0xa] sm:$0xff]
        %v1435 = vld [vmem:[%s221 + $0x12] sm:$0x3]
        %v1439 = vcombine.high %v1433, %v1433
        %v1441 = vunpack.c.l.s4 1983009808
        %v1442 = vunpack.c.0.s8 %v1441
        %v1443 = vlaneseq
        %v1444 = vshrl.u32 %v1443, 7
        %v1445 = vsub.s32 %v1442, %v1444
        %v1446 = vrot.slane %v1433, %v1445
        %v1448 = vunpack.c.l.s4 1983009808
        %v1449 = vunpack.c.0.s8 %v1448
        %v1450 = vlaneseq
        %v1451 = vshrl.u32 %v1450, 7
        %v1452 = vsub.s32 %v1449, %v1451
        %v1453 = vrot.slane %v1439, %v1452
        %v1454 = vcombine.high %v1434, %v1434
        %v1456 = vunpack.c.l.s4 1983009808
        %v1457 = vunpack.c.0.s8 %v1456
        %v1458 = vlaneseq
        %v1459 = vshrl.u32 %v1458, 7
        %v1460 = vsub.s32 %v1457, %v1459
        %v1461 = vrot.slane %v1434, %v1460
        %v1463 = vunpack.c.l.s4 1983009808
        %v1464 = vunpack.c.0.s8 %v1463
        %v1465 = vlaneseq
        %v1466 = vshrl.u32 %v1465, 7
        %v1467 = vsub.s32 %v1464, %v1466
        %v1468 = vrot.slane %v1454, %v1467
        %v1470 = vunpack.c.l.s4 1983009808
        %v1471 = vunpack.c.0.s8 %v1470
        %v1472 = vlaneseq
        %v1473 = vshrl.u32 %v1472, 7
        %v1474 = vsub.s32 %v1471, %v1473
        %v1475 = vrot.slane %v1435, %v1474
        %1476 = vrot.lane.b32.xlu0 %v1446, 118
        %v1477 = vpop.permute.xlu0 %1476
        %1478 = vrot.lane.b32.xlu0 %v1453, 118
        %v1479 = vpop.permute.xlu0 %1478
        %1480 = vrot.lane.b32.xlu0 %v1461, 118
        %v1481 = vpop.permute.xlu0 %1480
        %1482 = vrot.lane.b32.xlu0 %v1468, 118
        %v1483 = vpop.permute.xlu0 %1482
        %1484 = vrot.lane.b32.xlu0 %v1475, 118
        %v1485 = vpop.permute.xlu0 %1484
        %v1486 = vrot.slane %v1477, 4
        %v1487 = vrot.slane %v1479, 4
        %v1488 = vrot.slane %v1481, 4
        %v1489 = vrot.slane %v1483, 4
        %v1490 = vrot.slane %v1485, 4
        %v1491 = vsel %vm316, %v1486, %v1487
        %vm1492 = vcmask 965632
        %v1493 = vsel %vm1492, %v1477, %v1491
        %v1494 = vsel %vm316, %v1487, %v1488
        %v1495 = vsel %vm1492, %v1479, %v1494
        %v1496 = vsel %vm316, %v1488, %v1489
        %v1497 = vsel %vm1492, %v1481, %v1496
        %v1498 = vsel %vm316, %v1489, %v1490
        %v1499 = vsel %vm1492, %v1483, %v1498
        %1504 = vst [vmem:[#allocation2 + $0x100] sm:$0x33] %v1493
        %1505 = vst [vmem:[#allocation2 + $0x108] sm:$0x33] %v1495
        %1506 = vst [vmem:[#allocation2 + $0x110] sm:$0x33] %v1497
        %1507 = vst [vmem:[#allocation2 + $0x118] sm:$0x33] %v1499
        %v1508 = vld [vmem:[%s221 + $0x2] sm:$0xff]
        %v1509 = vld [vmem:[%s221 + $0xa] sm:$0xff]
        %v1510 = vld [vmem:[%s221 + $0x12] sm:$0x3]
        %v1514 = vcombine.low %v1508, %v1508
        %v1516 = vunpack.c.l.s4 1983009808
        %v1517 = vunpack.c.0.s8 %v1516
        %v1518 = vlaneseq
        %v1519 = vshrl.u32 %v1518, 7
        %v1520 = vsub.s32 %v1517, %v1519
        %v1521 = vrot.slane %v1514, %v1520
        %v1523 = vunpack.c.l.s4 1983009808
        %v1524 = vunpack.c.0.s8 %v1523
        %v1525 = vlaneseq
        %v1526 = vshrl.u32 %v1525, 7
        %v1527 = vsub.s32 %v1524, %v1526
        %v1528 = vrot.slane %v1508, %v1527
        %v1529 = vcombine.low %v1509, %v1509
        %v1531 = vunpack.c.l.s4 1983009808
        %v1532 = vunpack.c.0.s8 %v1531
        %v1533 = vlaneseq
        %v1534 = vshrl.u32 %v1533, 7
        %v1535 = vsub.s32 %v1532, %v1534
        %v1536 = vrot.slane %v1529, %v1535
        %v1538 = vunpack.c.l.s4 1983009808
        %v1539 = vunpack.c.0.s8 %v1538
        %v1540 = vlaneseq
        %v1541 = vshrl.u32 %v1540, 7
        %v1542 = vsub.s32 %v1539, %v1541
        %v1543 = vrot.slane %v1509, %v1542
        %v1544 = vcombine.low %v1510, %v1510
        %v1546 = vunpack.c.l.s4 1983009808
        %v1547 = vunpack.c.0.s8 %v1546
        %v1548 = vlaneseq
        %v1549 = vshrl.u32 %v1548, 7
        %v1550 = vsub.s32 %v1547, %v1549
        %v1551 = vrot.slane %v1544, %v1550
        %1552 = vrot.lane.b32.xlu0 %v1521, 117
        %v1553 = vpop.permute.xlu0 %1552
        %1554 = vrot.lane.b32.xlu0 %v1528, 117
        %v1555 = vpop.permute.xlu0 %1554
        %1556 = vrot.lane.b32.xlu0 %v1536, 117
        %v1557 = vpop.permute.xlu0 %1556
        %1558 = vrot.lane.b32.xlu0 %v1543, 117
        %v1559 = vpop.permute.xlu0 %1558
        %1560 = vrot.lane.b32.xlu0 %v1551, 117
        %v1561 = vpop.permute.xlu0 %1560
        %v1562 = vrot.slane %v1553, 4
        %v1563 = vrot.slane %v1555, 4
        %v1564 = vrot.slane %v1557, 4
        %v1565 = vrot.slane %v1559, 4
        %v1566 = vrot.slane %v1561, 4
        %v1567 = vsel %vm316, %v1562, %v1563
        %vm1568 = vcmask 957440
        %v1569 = vsel %vm1568, %v1553, %v1567
        %v1570 = vsel %vm316, %v1563, %v1564
        %v1571 = vsel %vm1568, %v1555, %v1570
        %v1572 = vsel %vm316, %v1564, %v1565
        %v1573 = vsel %vm1568, %v1557, %v1572
        %v1574 = vsel %vm316, %v1565, %v1566
        %v1575 = vsel %vm1568, %v1559, %v1574
        %1580 = vst [vmem:[#allocation2 + $0x100] sm:$0xcc] %v1569
        %1581 = vst [vmem:[#allocation2 + $0x108] sm:$0xcc] %v1571
        %1582 = vst [vmem:[#allocation2 + $0x110] sm:$0xcc] %v1573
        %1583 = vst [vmem:[#allocation2 + $0x118] sm:$0xcc] %v1575
        %v1584 = vld [vmem:[%s221 + $0x2] sm:$0xff]
        %v1585 = vld [vmem:[%s221 + $0xa] sm:$0xff]
        %v1586 = vld [vmem:[%s221 + $0x12] sm:$0x3]
        %v1590 = vcombine.high %v1584, %v1584
        %v1592 = vunpack.c.l.s4 1983009808
        %v1593 = vunpack.c.0.s8 %v1592
        %v1594 = vlaneseq
        %v1595 = vshrl.u32 %v1594, 7
        %v1596 = vsub.s32 %v1593, %v1595
        %v1597 = vrot.slane %v1584, %v1596
        %v1599 = vunpack.c.l.s4 1983009808
        %v1600 = vunpack.c.0.s8 %v1599
        %v1601 = vlaneseq
        %v1602 = vshrl.u32 %v1601, 7
        %v1603 = vsub.s32 %v1600, %v1602
        %v1604 = vrot.slane %v1590, %v1603
        %v1605 = vcombine.high %v1585, %v1585
        %v1607 = vunpack.c.l.s4 1983009808
        %v1608 = vunpack.c.0.s8 %v1607
        %v1609 = vlaneseq
        %v1610 = vshrl.u32 %v1609, 7
        %v1611 = vsub.s32 %v1608, %v1610
        %v1612 = vrot.slane %v1585, %v1611
        %v1614 = vunpack.c.l.s4 1983009808
        %v1615 = vunpack.c.0.s8 %v1614
        %v1616 = vlaneseq
        %v1617 = vshrl.u32 %v1616, 7
        %v1618 = vsub.s32 %v1615, %v1617
        %v1619 = vrot.slane %v1605, %v1618
        %v1621 = vunpack.c.l.s4 1983009808
        %v1622 = vunpack.c.0.s8 %v1621
        %v1623 = vlaneseq
        %v1624 = vshrl.u32 %v1623, 7
        %v1625 = vsub.s32 %v1622, %v1624
        %v1626 = vrot.slane %v1586, %v1625
        %1627 = vrot.lane.b32.xlu0 %v1597, 39
        %v1628 = vpop.permute.xlu0 %1627
        %1629 = vrot.lane.b32.xlu0 %v1604, 39
        %v1630 = vpop.permute.xlu0 %1629
        %1631 = vrot.lane.b32.xlu0 %v1612, 39
        %v1632 = vpop.permute.xlu0 %1631
        %1633 = vrot.lane.b32.xlu0 %v1619, 39
        %v1634 = vpop.permute.xlu0 %1633
        %1635 = vrot.lane.b32.xlu0 %v1626, 39
        %v1636 = vpop.permute.xlu0 %1635
        %v1637 = vrot.slane %v1628, 4
        %v1638 = vrot.slane %v1630, 4
        %v1639 = vrot.slane %v1632, 4
        %v1640 = vrot.slane %v1634, 4
        %v1641 = vrot.slane %v1636, 4
        %v1642 = vsel %vm316, %v1637, %v1638
        %vm1643 = vcmask 318464
        %v1644 = vsel %vm1643, %v1628, %v1642
        %v1645 = vsel %vm316, %v1638, %v1639
        %v1646 = vsel %vm1643, %v1630, %v1645
        %v1647 = vsel %vm316, %v1639, %v1640
        %v1648 = vsel %vm1643, %v1632, %v1647
        %v1649 = vsel %vm316, %v1640, %v1641
        %v1650 = vsel %vm1643, %v1634, %v1649
        %1655 = vst [vmem:[#allocation2 + $0x120] sm:$0x33] %v1644
        %1656 = vst [vmem:[#allocation2 + $0x128] sm:$0x33] %v1646
        %1657 = vst [vmem:[#allocation2 + $0x130] sm:$0x33] %v1648
        %1658 = vst [vmem:[#allocation2 + $0x138] sm:$0x33] %v1650
        %v1659 = vld [vmem:[%s221 + $0x2] sm:$0xff]
        %v1660 = vld [vmem:[%s221 + $0xa] sm:$0xff]
        %v1661 = vld [vmem:[%s221 + $0x12] sm:$0x3]
        %v1665 = vcombine.low %v1659, %v1659
        %v1667 = vunpack.c.l.s4 1983009808
        %v1668 = vunpack.c.0.s8 %v1667
        %v1669 = vlaneseq
        %v1670 = vshrl.u32 %v1669, 7
        %v1671 = vsub.s32 %v1668, %v1670
        %v1672 = vrot.slane %v1665, %v1671
        %v1674 = vunpack.c.l.s4 1983009808
        %v1675 = vunpack.c.0.s8 %v1674
        %v1676 = vlaneseq
        %v1677 = vshrl.u32 %v1676, 7
        %v1678 = vsub.s32 %v1675, %v1677
        %v1679 = vrot.slane %v1659, %v1678
        %v1680 = vcombine.low %v1660, %v1660
        %v1682 = vunpack.c.l.s4 1983009808
        %v1683 = vunpack.c.0.s8 %v1682
        %v1684 = vlaneseq
        %v1685 = vshrl.u32 %v1684, 7
        %v1686 = vsub.s32 %v1683, %v1685
        %v1687 = vrot.slane %v1680, %v1686
        %v1689 = vunpack.c.l.s4 1983009808
        %v1690 = vunpack.c.0.s8 %v1689
        %v1691 = vlaneseq
        %v1692 = vshrl.u32 %v1691, 7
        %v1693 = vsub.s32 %v1690, %v1692
        %v1694 = vrot.slane %v1660, %v1693
        %v1695 = vcombine.low %v1661, %v1661
        %v1697 = vunpack.c.l.s4 1983009808
        %v1698 = vunpack.c.0.s8 %v1697
        %v1699 = vlaneseq
        %v1700 = vshrl.u32 %v1699, 7
        %v1701 = vsub.s32 %v1698, %v1700
        %v1702 = vrot.slane %v1695, %v1701
        %1703 = vrot.lane.b32.xlu0 %v1672, 38
        %v1704 = vpop.permute.xlu0 %1703
        %1705 = vrot.lane.b32.xlu0 %v1679, 38
        %v1706 = vpop.permute.xlu0 %1705
        %1707 = vrot.lane.b32.xlu0 %v1687, 38
        %v1708 = vpop.permute.xlu0 %1707
        %1709 = vrot.lane.b32.xlu0 %v1694, 38
        %v1710 = vpop.permute.xlu0 %1709
        %1711 = vrot.lane.b32.xlu0 %v1702, 38
        %v1712 = vpop.permute.xlu0 %1711
        %v1713 = vrot.slane %v1704, 4
        %v1714 = vrot.slane %v1706, 4
        %v1715 = vrot.slane %v1708, 4
        %v1716 = vrot.slane %v1710, 4
        %v1717 = vrot.slane %v1712, 4
        %v1718 = vsel %vm316, %v1713, %v1714
        %vm1719 = vcmask 310272
        %v1720 = vsel %vm1719, %v1704, %v1718
        %v1721 = vsel %vm316, %v1714, %v1715
        %v1722 = vsel %vm1719, %v1706, %v1721
        %v1723 = vsel %vm316, %v1715, %v1716
        %v1724 = vsel %vm1719, %v1708, %v1723
        %v1725 = vsel %vm316, %v1716, %v1717
        %v1726 = vsel %vm1719, %v1710, %v1725
        %1731 = vst [vmem:[#allocation2 + $0x120] sm:$0xcc] %v1720
        %1732 = vst [vmem:[#allocation2 + $0x128] sm:$0xcc] %v1722
        %1733 = vst [vmem:[#allocation2 + $0x130] sm:$0xcc] %v1724
        %1734 = vst [vmem:[#allocation2 + $0x138] sm:$0xcc] %v1726
        %v1735 = vld [vmem:[%s221 + $0x2] sm:$0xff]
        %v1736 = vld [vmem:[%s221 + $0xa] sm:$0xff]
        %v1737 = vld [vmem:[%s221 + $0x12] sm:$0x3]
        %v1741 = vcombine.high %v1735, %v1735
        %v1743 = vunpack.c.l.s4 1983009808
        %v1744 = vunpack.c.0.s8 %v1743
        %v1745 = vlaneseq
        %v1746 = vshrl.u32 %v1745, 7
        %v1747 = vsub.s32 %v1744, %v1746
        %v1748 = vrot.slane %v1735, %v1747
        %v1750 = vunpack.c.l.s4 1983009808
        %v1751 = vunpack.c.0.s8 %v1750
        %v1752 = vlaneseq
        %v1753 = vshrl.u32 %v1752, 7
        %v1754 = vsub.s32 %v1751, %v1753
        %v1755 = vrot.slane %v1741, %v1754
        %v1756 = vcombine.high %v1736, %v1736
        %v1758 = vunpack.c.l.s4 1983009808
        %v1759 = vunpack.c.0.s8 %v1758
        %v1760 = vlaneseq
        %v1761 = vshrl.u32 %v1760, 7
        %v1762 = vsub.s32 %v1759, %v1761
        %v1763 = vrot.slane %v1736, %v1762
        %v1765 = vunpack.c.l.s4 1983009808
        %v1766 = vunpack.c.0.s8 %v1765
        %v1767 = vlaneseq
        %v1768 = vshrl.u32 %v1767, 7
        %v1769 = vsub.s32 %v1766, %v1768
        %v1770 = vrot.slane %v1756, %v1769
        %v1772 = vunpack.c.l.s4 1983009808
        %v1773 = vunpack.c.0.s8 %v1772
        %v1774 = vlaneseq
        %v1775 = vshrl.u32 %v1774, 7
        %v1776 = vsub.s32 %v1773, %v1775
        %v1777 = vrot.slane %v1737, %v1776
        %1778 = vrot.lane.b32.xlu0 %v1748, 37
        %v1779 = vpop.permute.xlu0 %1778
        %1780 = vrot.lane.b32.xlu0 %v1755, 37
        %v1781 = vpop.permute.xlu0 %1780
        %1782 = vrot.lane.b32.xlu0 %v1763, 37
        %v1783 = vpop.permute.xlu0 %1782
        %1784 = vrot.lane.b32.xlu0 %v1770, 37
        %v1785 = vpop.permute.xlu0 %1784
        %1786 = vrot.lane.b32.xlu0 %v1777, 37
        %v1787 = vpop.permute.xlu0 %1786
        %v1788 = vrot.slane %v1779, 4
        %v1789 = vrot.slane %v1781, 4
        %v1790 = vrot.slane %v1783, 4
        %v1791 = vrot.slane %v1785, 4
        %v1792 = vrot.slane %v1787, 4
        %v1793 = vsel %vm316, %v1788, %v1789
        %vm1794 = vcmask 302080
        %v1795 = vsel %vm1794, %v1779, %v1793
        %v1796 = vsel %vm316, %v1789, %v1790
        %v1797 = vsel %vm1794, %v1781, %v1796
        %v1798 = vsel %vm316, %v1790, %v1791
        %v1799 = vsel %vm1794, %v1783, %v1798
        %v1800 = vsel %vm316, %v1791, %v1792
        %v1801 = vsel %vm1794, %v1785, %v1800
        %1806 = vst [vmem:[#allocation2 + $0x140] sm:$0x33] %v1795
        %1807 = vst [vmem:[#allocation2 + $0x148] sm:$0x33] %v1797
        %1808 = vst [vmem:[#allocation2 + $0x150] sm:$0x33] %v1799
        %1809 = vst [vmem:[#allocation2 + $0x158] sm:$0x33] %v1801
        %v1810 = vld [vmem:[%s221 + $0x2] sm:$0xff]
        %v1811 = vld [vmem:[%s221 + $0xa] sm:$0xff]
        %v1812 = vld [vmem:[%s221 + $0x12] sm:$0x3]
        %v1816 = vcombine.low %v1810, %v1810
        %v1818 = vunpack.c.l.s4 1983009808
        %v1819 = vunpack.c.0.s8 %v1818
        %v1820 = vlaneseq
        %v1821 = vshrl.u32 %v1820, 7
        %v1822 = vsub.s32 %v1819, %v1821
        %v1823 = vrot.slane %v1816, %v1822
        %v1825 = vunpack.c.l.s4 1983009808
        %v1826 = vunpack.c.0.s8 %v1825
        %v1827 = vlaneseq
        %v1828 = vshrl.u32 %v1827, 7
        %v1829 = vsub.s32 %v1826, %v1828
        %v1830 = vrot.slane %v1810, %v1829
        %v1831 = vcombine.low %v1811, %v1811
        %v1833 = vunpack.c.l.s4 1983009808
        %v1834 = vunpack.c.0.s8 %v1833
        %v1835 = vlaneseq
        %v1836 = vshrl.u32 %v1835, 7
        %v1837 = vsub.s32 %v1834, %v1836
        %v1838 = vrot.slane %v1831, %v1837
        %v1840 = vunpack.c.l.s4 1983009808
        %v1841 = vunpack.c.0.s8 %v1840
        %v1842 = vlaneseq
        %v1843 = vshrl.u32 %v1842, 7
        %v1844 = vsub.s32 %v1841, %v1843
        %v1845 = vrot.slane %v1811, %v1844
        %v1846 = vcombine.low %v1812, %v1812
        %v1848 = vunpack.c.l.s4 1983009808
        %v1849 = vunpack.c.0.s8 %v1848
        %v1850 = vlaneseq
        %v1851 = vshrl.u32 %v1850, 7
        %v1852 = vsub.s32 %v1849, %v1851
        %v1853 = vrot.slane %v1846, %v1852
        %1854 = vrot.lane.b32.xlu0 %v1823, 29
        %v1855 = vpop.permute.xlu0 %1854
        %1856 = vrot.lane.b32.xlu0 %v1830, 29
        %v1857 = vpop.permute.xlu0 %1856
        %1858 = vrot.lane.b32.xlu0 %v1838, 29
        %v1859 = vpop.permute.xlu0 %1858
        %1860 = vrot.lane.b32.xlu0 %v1845, 29
        %v1861 = vpop.permute.xlu0 %1860
        %1862 = vrot.lane.b32.xlu0 %v1853, 29
        %v1863 = vpop.permute.xlu0 %1862
        %v1864 = vrot.slane %v1855, 4
        %v1865 = vrot.slane %v1857, 4
        %v1866 = vrot.slane %v1859, 4
        %v1867 = vrot.slane %v1861, 4
        %v1868 = vrot.slane %v1863, 4
        %v1869 = vsel %vm316, %v1864, %v1865
        %vm1870 = vcmask 236544
        %v1871 = vsel %vm1870, %v1855, %v1869
        %v1872 = vsel %vm316, %v1865, %v1866
        %v1873 = vsel %vm1870, %v1857, %v1872
        %v1874 = vsel %vm316, %v1866, %v1867
        %v1875 = vsel %vm1870, %v1859, %v1874
        %v1876 = vsel %vm316, %v1867, %v1868
        %v1877 = vsel %vm1870, %v1861, %v1876
        %1882 = vst [vmem:[#allocation2 + $0x140] sm:$0xcc] %v1871
        %1883 = vst [vmem:[#allocation2 + $0x148] sm:$0xcc] %v1873
        %1884 = vst [vmem:[#allocation2 + $0x150] sm:$0xcc] %v1875
        %1885 = vst [vmem:[#allocation2 + $0x158] sm:$0xcc] %v1877
        %v1886 = vld [vmem:[%s221 + $0x2] sm:$0xff]
        %v1887 = vld [vmem:[%s221 + $0xa] sm:$0xff]
        %v1888 = vld [vmem:[%s221 + $0x12] sm:$0x3]
        %v1892 = vcombine.high %v1886, %v1886
        %v1894 = vunpack.c.l.s4 1983009808
        %v1895 = vunpack.c.0.s8 %v1894
        %v1896 = vlaneseq
        %v1897 = vshrl.u32 %v1896, 7
        %v1898 = vsub.s32 %v1895, %v1897
        %v1899 = vrot.slane %v1886, %v1898
        %v1901 = vunpack.c.l.s4 1983009808
        %v1902 = vunpack.c.0.s8 %v1901
        %v1903 = vlaneseq
        %v1904 = vshrl.u32 %v1903, 7
        %v1905 = vsub.s32 %v1902, %v1904
        %v1906 = vrot.slane %v1892, %v1905
        %v1907 = vcombine.high %v1887, %v1887
        %v1909 = vunpack.c.l.s4 1983009808
        %v1910 = vunpack.c.0.s8 %v1909
        %v1911 = vlaneseq
        %v1912 = vshrl.u32 %v1911, 7
        %v1913 = vsub.s32 %v1910, %v1912
        %v1914 = vrot.slane %v1887, %v1913
        %v1916 = vunpack.c.l.s4 1983009808
        %v1917 = vunpack.c.0.s8 %v1916
        %v1918 = vlaneseq
        %v1919 = vshrl.u32 %v1918, 7
        %v1920 = vsub.s32 %v1917, %v1919
        %v1921 = vrot.slane %v1907, %v1920
        %v1923 = vunpack.c.l.s4 1983009808
        %v1924 = vunpack.c.0.s8 %v1923
        %v1925 = vlaneseq
        %v1926 = vshrl.u32 %v1925, 7
        %v1927 = vsub.s32 %v1924, %v1926
        %v1928 = vrot.slane %v1888, %v1927
        %1929 = vrot.lane.b32.xlu0 %v1899, 28
        %v1930 = vpop.permute.xlu0 %1929
        %1931 = vrot.lane.b32.xlu0 %v1906, 28
        %v1932 = vpop.permute.xlu0 %1931
        %1933 = vrot.lane.b32.xlu0 %v1914, 28
        %v1934 = vpop.permute.xlu0 %1933
        %1935 = vrot.lane.b32.xlu0 %v1921, 28
        %v1936 = vpop.permute.xlu0 %1935
        %1937 = vrot.lane.b32.xlu0 %v1928, 28
        %v1938 = vpop.permute.xlu0 %1937
        %v1939 = vrot.slane %v1930, 4
        %v1940 = vrot.slane %v1932, 4
        %v1941 = vrot.slane %v1934, 4
        %v1942 = vrot.slane %v1936, 4
        %v1943 = vrot.slane %v1938, 4
        %v1944 = vsel %vm316, %v1939, %v1940
        %vm1945 = vcmask 228352
        %v1946 = vsel %vm1945, %v1930, %v1944
        %v1947 = vsel %vm316, %v1940, %v1941
        %v1948 = vsel %vm1945, %v1932, %v1947
        %v1949 = vsel %vm316, %v1941, %v1942
        %v1950 = vsel %vm1945, %v1934, %v1949
        %v1951 = vsel %vm316, %v1942, %v1943
        %v1952 = vsel %vm1945, %v1936, %v1951
        %1957 = vst [vmem:[#allocation2 + $0x160] sm:$0x33] %v1946
        %1958 = vst [vmem:[#allocation2 + $0x168] sm:$0x33] %v1948
        %1959 = vst [vmem:[#allocation2 + $0x170] sm:$0x33] %v1950
        %1960 = vst [vmem:[#allocation2 + $0x178] sm:$0x33] %v1952
        %v1961 = vld [vmem:[%s221 + $0x2] sm:$0xff]
        %v1962 = vld [vmem:[%s221 + $0xa] sm:$0xff]
        %v1963 = vld [vmem:[%s221 + $0x12] sm:$0x3]
        %v1967 = vcombine.low %v1961, %v1961
        %v1969 = vunpack.c.l.s4 1983009808
        %v1970 = vunpack.c.0.s8 %v1969
        %v1971 = vlaneseq
        %v1972 = vshrl.u32 %v1971, 7
        %v1973 = vsub.s32 %v1970, %v1972
        %v1974 = vrot.slane %v1967, %v1973
        %v1976 = vunpack.c.l.s4 1983009808
        %v1977 = vunpack.c.0.s8 %v1976
        %v1978 = vlaneseq
        %v1979 = vshrl.u32 %v1978, 7
        %v1980 = vsub.s32 %v1977, %v1979
        %v1981 = vrot.slane %v1961, %v1980
        %v1982 = vcombine.low %v1962, %v1962
        %v1984 = vunpack.c.l.s4 1983009808
        %v1985 = vunpack.c.0.s8 %v1984
        %v1986 = vlaneseq
        %v1987 = vshrl.u32 %v1986, 7
        %v1988 = vsub.s32 %v1985, %v1987
        %v1989 = vrot.slane %v1982, %v1988
        %v1991 = vunpack.c.l.s4 1983009808
        %v1992 = vunpack.c.0.s8 %v1991
        %v1993 = vlaneseq
        %v1994 = vshrl.u32 %v1993, 7
        %v1995 = vsub.s32 %v1992, %v1994
        %v1996 = vrot.slane %v1962, %v1995
        %v1997 = vcombine.low %v1963, %v1963
        %v1999 = vunpack.c.l.s4 1983009808
        %v2000 = vunpack.c.0.s8 %v1999
        %v2001 = vlaneseq
        %v2002 = vshrl.u32 %v2001, 7
        %v2003 = vsub.s32 %v2000, %v2002
        %v2004 = vrot.slane %v1997, %v2003
        %2005 = vrot.lane.b32.xlu0 %v1974, 27
        %v2006 = vpop.permute.xlu0 %2005
        %2007 = vrot.lane.b32.xlu0 %v1981, 27
        %v2008 = vpop.permute.xlu0 %2007
        %2009 = vrot.lane.b32.xlu0 %v1989, 27
        %v2010 = vpop.permute.xlu0 %2009
        %2011 = vrot.lane.b32.xlu0 %v1996, 27
        %v2012 = vpop.permute.xlu0 %2011
        %2013 = vrot.lane.b32.xlu0 %v2004, 27
        %v2014 = vpop.permute.xlu0 %2013
        %v2015 = vrot.slane %v2006, 4
        %v2016 = vrot.slane %v2008, 4
        %v2017 = vrot.slane %v2010, 4
        %v2018 = vrot.slane %v2012, 4
        %v2019 = vrot.slane %v2014, 4
        %v2020 = vsel %vm316, %v2015, %v2016
        %vm2021 = vcmask 220160
        %v2022 = vsel %vm2021, %v2006, %v2020
        %v2023 = vsel %vm316, %v2016, %v2017
        %v2024 = vsel %vm2021, %v2008, %v2023
        %v2025 = vsel %vm316, %v2017, %v2018
        %v2026 = vsel %vm2021, %v2010, %v2025
        %v2027 = vsel %vm316, %v2018, %v2019
        %v2028 = vsel %vm2021, %v2012, %v2027
        %2033 = vst [vmem:[#allocation2 + $0x160] sm:$0xcc] %v2022
        %2034 = vst [vmem:[#allocation2 + $0x168] sm:$0xcc] %v2024
        %2035 = vst [vmem:[#allocation2 + $0x170] sm:$0xcc] %v2026
        %2036 = vst [vmem:[#allocation2 + $0x178] sm:$0xcc] %v2028
        %v2037 = vld [vmem:[%s221 + $0x2] sm:$0xff]
        %v2038 = vld [vmem:[%s221 + $0xa] sm:$0xff]
        %v2039 = vld [vmem:[%s221 + $0x12] sm:$0x3]
        %v2043 = vcombine.high %v2037, %v2037
        %v2045 = vunpack.c.l.s4 1983009808
        %v2046 = vunpack.c.0.s8 %v2045
        %v2047 = vlaneseq
        %v2048 = vshrl.u32 %v2047, 7
        %v2049 = vsub.s32 %v2046, %v2048
        %v2050 = vrot.slane %v2037, %v2049
        %v2052 = vunpack.c.l.s4 1983009808
        %v2053 = vunpack.c.0.s8 %v2052
        %v2054 = vlaneseq
        %v2055 = vshrl.u32 %v2054, 7
        %v2056 = vsub.s32 %v2053, %v2055
        %v2057 = vrot.slane %v2043, %v2056
        %v2058 = vcombine.high %v2038, %v2038
        %v2060 = vunpack.c.l.s4 1983009808
        %v2061 = vunpack.c.0.s8 %v2060
        %v2062 = vlaneseq
        %v2063 = vshrl.u32 %v2062, 7
        %v2064 = vsub.s32 %v2061, %v2063
        %v2065 = vrot.slane %v2038, %v2064
        %v2067 = vunpack.c.l.s4 1983009808
        %v2068 = vunpack.c.0.s8 %v2067
        %v2069 = vlaneseq
        %v2070 = vshrl.u32 %v2069, 7
        %v2071 = vsub.s32 %v2068, %v2070
        %v2072 = vrot.slane %v2058, %v2071
        %v2074 = vunpack.c.l.s4 1983009808
        %v2075 = vunpack.c.0.s8 %v2074
        %v2076 = vlaneseq
        %v2077 = vshrl.u32 %v2076, 7
        %v2078 = vsub.s32 %v2075, %v2077
        %v2079 = vrot.slane %v2039, %v2078
        %2080 = vrot.lane.b32.xlu0 %v2050, 19
        %v2081 = vpop.permute.xlu0 %2080
        %2082 = vrot.lane.b32.xlu0 %v2057, 19
        %v2083 = vpop.permute.xlu0 %2082
        %2084 = vrot.lane.b32.xlu0 %v2065, 19
        %v2085 = vpop.permute.xlu0 %2084
        %2086 = vrot.lane.b32.xlu0 %v2072, 19
        %v2087 = vpop.permute.xlu0 %2086
        %2088 = vrot.lane.b32.xlu0 %v2079, 19
        %v2089 = vpop.permute.xlu0 %2088
        %v2090 = vrot.slane %v2081, 4
        %v2091 = vrot.slane %v2083, 4
        %v2092 = vrot.slane %v2085, 4
        %v2093 = vrot.slane %v2087, 4
        %v2094 = vrot.slane %v2089, 4
        %v2095 = vsel %vm316, %v2090, %v2091
        %vm2096 = vcmask 154624
        %v2097 = vsel %vm2096, %v2081, %v2095
        %v2098 = vsel %vm316, %v2091, %v2092
        %v2099 = vsel %vm2096, %v2083, %v2098
        %v2100 = vsel %vm316, %v2092, %v2093
        %v2101 = vsel %vm2096, %v2085, %v2100
        %v2102 = vsel %vm316, %v2093, %v2094
        %v2103 = vsel %vm2096, %v2087, %v2102
        %2108 = vst [vmem:[#allocation2 + $0x180] sm:$0x33] %v2097
        %2109 = vst [vmem:[#allocation2 + $0x188] sm:$0x33] %v2099
        %2110 = vst [vmem:[#allocation2 + $0x190] sm:$0x33] %v2101
        %2111 = vst [vmem:[#allocation2 + $0x198] sm:$0x33] %v2103
        %v2112 = vld [vmem:[%s221 + $0x2] sm:$0xff]
        %v2113 = vld [vmem:[%s221 + $0xa] sm:$0xff]
        %v2114 = vld [vmem:[%s221 + $0x12] sm:$0x3]
        %v2118 = vcombine.low %v2112, %v2112
        %v2120 = vunpack.c.l.s4 1983009808
        %v2121 = vunpack.c.0.s8 %v2120
        %v2122 = vlaneseq
        %v2123 = vshrl.u32 %v2122, 7
        %v2124 = vsub.s32 %v2121, %v2123
        %v2125 = vrot.slane %v2118, %v2124
        %v2127 = vunpack.c.l.s4 1983009808
        %v2128 = vunpack.c.0.s8 %v2127
        %v2129 = vlaneseq
        %v2130 = vshrl.u32 %v2129, 7
        %v2131 = vsub.s32 %v2128, %v2130
        %v2132 = vrot.slane %v2112, %v2131
        %v2133 = vcombine.low %v2113, %v2113
        %v2135 = vunpack.c.l.s4 1983009808
        %v2136 = vunpack.c.0.s8 %v2135
        %v2137 = vlaneseq
        %v2138 = vshrl.u32 %v2137, 7
        %v2139 = vsub.s32 %v2136, %v2138
        %v2140 = vrot.slane %v2133, %v2139
        %v2142 = vunpack.c.l.s4 1983009808
        %v2143 = vunpack.c.0.s8 %v2142
        %v2144 = vlaneseq
        %v2145 = vshrl.u32 %v2144, 7
        %v2146 = vsub.s32 %v2143, %v2145
        %v2147 = vrot.slane %v2113, %v2146
        %v2148 = vcombine.low %v2114, %v2114
        %v2150 = vunpack.c.l.s4 1983009808
        %v2151 = vunpack.c.0.s8 %v2150
        %v2152 = vlaneseq
        %v2153 = vshrl.u32 %v2152, 7
        %v2154 = vsub.s32 %v2151, %v2153
        %v2155 = vrot.slane %v2148, %v2154
        %2156 = vrot.lane.b32.xlu0 %v2125, 18
        %v2157 = vpop.permute.xlu0 %2156
        %2158 = vrot.lane.b32.xlu0 %v2132, 18
        %v2159 = vpop.permute.xlu0 %2158
        %2160 = vrot.lane.b32.xlu0 %v2140, 18
        %v2161 = vpop.permute.xlu0 %2160
        %2162 = vrot.lane.b32.xlu0 %v2147, 18
        %v2163 = vpop.permute.xlu0 %2162
        %2164 = vrot.lane.b32.xlu0 %v2155, 18
        %v2165 = vpop.permute.xlu0 %2164
        %v2166 = vrot.slane %v2157, 4
        %v2167 = vrot.slane %v2159, 4
        %v2168 = vrot.slane %v2161, 4
        %v2169 = vrot.slane %v2163, 4
        %v2170 = vrot.slane %v2165, 4
        %v2171 = vsel %vm316, %v2166, %v2167
        %vm2172 = vcmask 146432
        %v2173 = vsel %vm2172, %v2157, %v2171
        %v2174 = vsel %vm316, %v2167, %v2168
        %v2175 = vsel %vm2172, %v2159, %v2174
        %v2176 = vsel %vm316, %v2168, %v2169
        %v2177 = vsel %vm2172, %v2161, %v2176
        %v2178 = vsel %vm316, %v2169, %v2170
        %v2179 = vsel %vm2172, %v2163, %v2178
        %2184 = vst [vmem:[#allocation2 + $0x180] sm:$0xcc] %v2173
        %2185 = vst [vmem:[#allocation2 + $0x188] sm:$0xcc] %v2175
        %2186 = vst [vmem:[#allocation2 + $0x190] sm:$0xcc] %v2177
        %2187 = vst [vmem:[#allocation2 + $0x198] sm:$0xcc] %v2179
        %v2188 = vld [vmem:[%s221 + $0x2] sm:$0xff]
        %v2189 = vld [vmem:[%s221 + $0xa] sm:$0xff]
        %v2190 = vld [vmem:[%s221 + $0x12] sm:$0x3]
        %v2194 = vcombine.high %v2188, %v2188
        %v2196 = vunpack.c.l.s4 1983009808
        %v2197 = vunpack.c.0.s8 %v2196
        %v2198 = vlaneseq
        %v2199 = vshrl.u32 %v2198, 7
        %v2200 = vsub.s32 %v2197, %v2199
        %v2201 = vrot.slane %v2188, %v2200
        %v2203 = vunpack.c.l.s4 1983009808
        %v2204 = vunpack.c.0.s8 %v2203
        %v2205 = vlaneseq
        %v2206 = vshrl.u32 %v2205, 7
        %v2207 = vsub.s32 %v2204, %v2206
        %v2208 = vrot.slane %v2194, %v2207
        %v2209 = vcombine.high %v2189, %v2189
        %v2211 = vunpack.c.l.s4 1983009808
        %v2212 = vunpack.c.0.s8 %v2211
        %v2213 = vlaneseq
        %v2214 = vshrl.u32 %v2213, 7
        %v2215 = vsub.s32 %v2212, %v2214
        %v2216 = vrot.slane %v2189, %v2215
        %v2218 = vunpack.c.l.s4 1983009808
        %v2219 = vunpack.c.0.s8 %v2218
        %v2220 = vlaneseq
        %v2221 = vshrl.u32 %v2220, 7
        %v2222 = vsub.s32 %v2219, %v2221
        %v2223 = vrot.slane %v2209, %v2222
        %v2225 = vunpack.c.l.s4 1983009808
        %v2226 = vunpack.c.0.s8 %v2225
        %v2227 = vlaneseq
        %v2228 = vshrl.u32 %v2227, 7
        %v2229 = vsub.s32 %v2226, %v2228
        %v2230 = vrot.slane %v2190, %v2229
        %2231 = vrot.lane.b32.xlu0 %v2201, 17
        %v2232 = vpop.permute.xlu0 %2231
        %2233 = vrot.lane.b32.xlu0 %v2208, 17
        %v2234 = vpop.permute.xlu0 %2233
        %2235 = vrot.lane.b32.xlu0 %v2216, 17
        %v2236 = vpop.permute.xlu0 %2235
        %2237 = vrot.lane.b32.xlu0 %v2223, 17
        %v2238 = vpop.permute.xlu0 %2237
        %2239 = vrot.lane.b32.xlu0 %v2230, 17
        %v2240 = vpop.permute.xlu0 %2239
        %v2241 = vrot.slane %v2232, 4
        %v2242 = vrot.slane %v2234, 4
        %v2243 = vrot.slane %v2236, 4
        %v2244 = vrot.slane %v2238, 4
        %v2245 = vrot.slane %v2240, 4
        %v2246 = vsel %vm316, %v2241, %v2242
        %vm2247 = vcmask 138240
        %v2248 = vsel %vm2247, %v2232, %v2246
        %v2249 = vsel %vm316, %v2242, %v2243
        %v2250 = vsel %vm2247, %v2234, %v2249
        %v2251 = vsel %vm316, %v2243, %v2244
        %v2252 = vsel %vm2247, %v2236, %v2251
        %v2253 = vsel %vm316, %v2244, %v2245
        %v2254 = vsel %vm2247, %v2238, %v2253
        %2259 = vst [vmem:[#allocation2 + $0x1a0] sm:$0x33] %v2248
        %2260 = vst [vmem:[#allocation2 + $0x1a8] sm:$0x33] %v2250
        %2261 = vst [vmem:[#allocation2 + $0x1b0] sm:$0x33] %v2252
        %2262 = vst [vmem:[#allocation2 + $0x1b8] sm:$0x33] %v2254
        %v2263 = vld [vmem:[#allocation10] sm:$0xf]
        %v2264 = vld [vmem:[#allocation10 + $0x4] sm:$0xf]
        %v2265 = vld [vmem:[#allocation2] sm:$0xff]
        %v2266 = vld [vmem:[#allocation2 + $0x8] sm:$0xff]
        %v2267 = vld [vmem:[#allocation2 + $0x10] sm:$0xff]
        %v2268 = vld [vmem:[#allocation2 + $0x18] sm:$0xff]
        %v2269 = vld [vmem:[#allocation2 + $0x20] sm:$0xff]
        %v2270 = vld [vmem:[#allocation2 + $0x28] sm:$0xff]
        %v2271 = vld [vmem:[#allocation2 + $0x30] sm:$0xff]
        %v2272 = vld [vmem:[#allocation2 + $0x38] sm:$0xff]
        %v2273 = vld [vmem:[#allocation2 + $0x40] sm:$0xff]
        %v2274 = vld [vmem:[#allocation2 + $0x48] sm:$0xff]
        %v2275 = vld [vmem:[#allocation2 + $0x50] sm:$0xff]
        %v2276 = vld [vmem:[#allocation2 + $0x58] sm:$0xff]
        %v2277 = vld [vmem:[#allocation2 + $0x60] sm:$0xff]
        %v2278 = vld [vmem:[#allocation2 + $0x68] sm:$0xff]
        %v2279 = vld [vmem:[#allocation2 + $0x70] sm:$0xff]
        %v2280 = vld [vmem:[#allocation2 + $0x78] sm:$0xff]
        %v2281 = vld [vmem:[#allocation2 + $0x80] sm:$0xff]
        %v2282 = vld [vmem:[#allocation2 + $0x88] sm:$0xff]
        %v2283 = vld [vmem:[#allocation2 + $0x90] sm:$0xff]
        %v2284 = vld [vmem:[#allocation2 + $0x98] sm:$0xff]
        %v2285 = vld [vmem:[#allocation2 + $0xa0] sm:$0xff]
        %v2286 = vld [vmem:[#allocation2 + $0xa8] sm:$0xff]
        %v2287 = vld [vmem:[#allocation2 + $0xb0] sm:$0xff]
        %v2288 = vld [vmem:[#allocation2 + $0xb8] sm:$0xff]
        %v2289 = vld [vmem:[#allocation2 + $0xc0] sm:$0xff]
        %v2290 = vld [vmem:[#allocation2 + $0xc8] sm:$0xff]
        %v2291 = vld [vmem:[#allocation2 + $0xd0] sm:$0xff]
        %v2292 = vld [vmem:[#allocation2 + $0xd8] sm:$0xff]
        %v2293 = vld [vmem:[#allocation2 + $0xe0] sm:$0xff]
        %v2294 = vld [vmem:[#allocation2 + $0xe8] sm:$0xff]
        %v2295 = vld [vmem:[#allocation2 + $0xf0] sm:$0xff]
        %v2296 = vld [vmem:[#allocation2 + $0xf8] sm:$0xff]
        %v2297 = vld [vmem:[#allocation2 + $0x100] sm:$0xff]
        %v2298 = vld [vmem:[#allocation2 + $0x108] sm:$0xff]
        %v2299 = vld [vmem:[#allocation2 + $0x110] sm:$0xff]
        %v2300 = vld [vmem:[#allocation2 + $0x118] sm:$0xff]
        %v2301 = vld [vmem:[#allocation2 + $0x120] sm:$0xff]
        %v2302 = vld [vmem:[#allocation2 + $0x128] sm:$0xff]
        %v2303 = vld [vmem:[#allocation2 + $0x130] sm:$0xff]
        %v2304 = vld [vmem:[#allocation2 + $0x138] sm:$0xff]
        %v2305 = vld [vmem:[#allocation2 + $0x140] sm:$0xff]
        %v2306 = vld [vmem:[#allocation2 + $0x148] sm:$0xff]
        %v2307 = vld [vmem:[#allocation2 + $0x150] sm:$0xff]
        %v2308 = vld [vmem:[#allocation2 + $0x158] sm:$0xff]
        %v2309 = vld [vmem:[#allocation2 + $0x160] sm:$0xff]
        %v2310 = vld [vmem:[#allocation2 + $0x168] sm:$0xff]
        %v2311 = vld [vmem:[#allocation2 + $0x170] sm:$0xff]
        %v2312 = vld [vmem:[#allocation2 + $0x178] sm:$0xff]
        %v2313 = vld [vmem:[#allocation2 + $0x180] sm:$0xff]
        %v2314 = vld [vmem:[#allocation2 + $0x188] sm:$0xff]
        %v2315 = vld [vmem:[#allocation2 + $0x190] sm:$0xff]
        %v2316 = vld [vmem:[#allocation2 + $0x198] sm:$0xff]
        %v2317 = vld [vmem:[#allocation2 + $0x1a0] sm:$0x33]
        %v2318 = vld [vmem:[#allocation2 + $0x1a8] sm:$0x33]
        %v2319 = vld [vmem:[#allocation2 + $0x1b0] sm:$0x33]
        %v2320 = vld [vmem:[#allocation2 + $0x1b8] sm:$0x33]
        %v2323 = vunpack.c.l.b16 %v2263
        %v2324 = vunpack.c.l.b16 %v2264
        %v2325 = vpack.c.b16 %v2324, %v2323
        %v2382 = vunpack.c.l.b16 %v2265
        %v2383 = vunpack.c.h.b16 %v2265
        %v2384 = vunpack.c.l.b16 %v2266
        %v2385 = vunpack.c.h.b16 %v2266
        %v2386 = vunpack.c.l.b16 %v2267
        %v2387 = vunpack.c.h.b16 %v2267
        %v2388 = vunpack.c.l.b16 %v2268
        %v2389 = vunpack.c.h.b16 %v2268
        %v2390 = vunpack.c.l.b16 %v2269
        %v2391 = vunpack.c.h.b16 %v2269
        %v2392 = vunpack.c.l.b16 %v2270
        %v2393 = vunpack.c.h.b16 %v2270
        %v2394 = vunpack.c.l.b16 %v2271
        %v2395 = vunpack.c.h.b16 %v2271
        %v2396 = vunpack.c.l.b16 %v2272
        %v2397 = vunpack.c.h.b16 %v2272
        %v2398 = vunpack.c.l.b16 %v2273
        %v2399 = vunpack.c.h.b16 %v2273
        %v2400 = vunpack.c.l.b16 %v2274
        %v2401 = vunpack.c.h.b16 %v2274
        %v2402 = vunpack.c.l.b16 %v2275
        %v2403 = vunpack.c.h.b16 %v2275
        %v2404 = vunpack.c.l.b16 %v2276
        %v2405 = vunpack.c.h.b16 %v2276
        %v2406 = vunpack.c.l.b16 %v2277
        %v2407 = vunpack.c.h.b16 %v2277
        %v2408 = vunpack.c.l.b16 %v2278
        %v2409 = vunpack.c.h.b16 %v2278
        %v2410 = vunpack.c.l.b16 %v2279
        %v2411 = vunpack.c.h.b16 %v2279
        %v2412 = vunpack.c.l.b16 %v2280
        %v2413 = vunpack.c.h.b16 %v2280
        %v2414 = vunpack.c.l.b16 %v2281
        %v2415 = vunpack.c.h.b16 %v2281
        %v2416 = vunpack.c.l.b16 %v2282
        %v2417 = vunpack.c.h.b16 %v2282
        %v2418 = vunpack.c.l.b16 %v2283
        %v2419 = vunpack.c.h.b16 %v2283
        %v2420 = vunpack.c.l.b16 %v2284
        %v2421 = vunpack.c.h.b16 %v2284
        %v2422 = vunpack.c.l.b16 %v2285
        %v2423 = vunpack.c.h.b16 %v2285
        %v2424 = vunpack.c.l.b16 %v2286
        %v2425 = vunpack.c.h.b16 %v2286
        %v2426 = vunpack.c.l.b16 %v2287
        %v2427 = vunpack.c.h.b16 %v2287
        %v2428 = vunpack.c.l.b16 %v2288
        %v2429 = vunpack.c.h.b16 %v2288
        %v2430 = vunpack.c.l.b16 %v2289
        %v2431 = vunpack.c.h.b16 %v2289
        %v2432 = vunpack.c.l.b16 %v2290
        %v2433 = vunpack.c.h.b16 %v2290
        %v2434 = vunpack.c.l.b16 %v2291
        %v2435 = vunpack.c.h.b16 %v2291
        %v2436 = vunpack.c.l.b16 %v2292
        %v2437 = vunpack.c.h.b16 %v2292
        %v2438 = vunpack.c.l.b16 %v2293
        %v2439 = vunpack.c.h.b16 %v2293
        %v2440 = vunpack.c.l.b16 %v2294
        %v2441 = vunpack.c.h.b16 %v2294
        %v2442 = vunpack.c.l.b16 %v2295
        %v2443 = vunpack.c.h.b16 %v2295
        %v2444 = vunpack.c.l.b16 %v2296
        %v2445 = vunpack.c.h.b16 %v2296
        %v2446 = vunpack.c.l.b16 %v2297
        %v2447 = vunpack.c.h.b16 %v2297
        %v2448 = vunpack.c.l.b16 %v2298
        %v2449 = vunpack.c.h.b16 %v2298
        %v2450 = vunpack.c.l.b16 %v2299
        %v2451 = vunpack.c.h.b16 %v2299
        %v2452 = vunpack.c.l.b16 %v2300
        %v2453 = vunpack.c.h.b16 %v2300
        %v2454 = vunpack.c.l.b16 %v2301
        %v2455 = vunpack.c.h.b16 %v2301
        %v2456 = vunpack.c.l.b16 %v2302
        %v2457 = vunpack.c.h.b16 %v2302
        %v2458 = vunpack.c.l.b16 %v2303
        %v2459 = vunpack.c.h.b16 %v2303
        %v2460 = vunpack.c.l.b16 %v2304
        %v2461 = vunpack.c.h.b16 %v2304
        %v2462 = vunpack.c.l.b16 %v2305
        %v2463 = vunpack.c.h.b16 %v2305
        %v2464 = vunpack.c.l.b16 %v2306
        %v2465 = vunpack.c.h.b16 %v2306
        %v2466 = vunpack.c.l.b16 %v2307
        %v2467 = vunpack.c.h.b16 %v2307
        %v2468 = vunpack.c.l.b16 %v2308
        %v2469 = vunpack.c.h.b16 %v2308
        %v2470 = vunpack.c.l.b16 %v2309
        %v2471 = vunpack.c.h.b16 %v2309
        %v2472 = vunpack.c.l.b16 %v2310
        %v2473 = vunpack.c.h.b16 %v2310
        %v2474 = vunpack.c.l.b16 %v2311
        %v2475 = vunpack.c.h.b16 %v2311
        %v2476 = vunpack.c.l.b16 %v2312
        %v2477 = vunpack.c.h.b16 %v2312
        %v2478 = vunpack.c.l.b16 %v2313
        %v2479 = vunpack.c.h.b16 %v2313
        %v2480 = vunpack.c.l.b16 %v2314
        %v2481 = vunpack.c.h.b16 %v2314
        %v2482 = vunpack.c.l.b16 %v2315
        %v2483 = vunpack.c.h.b16 %v2315
        %v2484 = vunpack.c.l.b16 %v2316
        %v2485 = vunpack.c.h.b16 %v2316
        %v2486 = vunpack.c.l.b16 %v2317
        %v2487 = vunpack.c.h.b16 %v2317
        %v2488 = vunpack.c.l.b16 %v2318
        %v2489 = vunpack.c.h.b16 %v2318
        %v2490 = vunpack.c.l.b16 %v2319
        %v2491 = vunpack.c.h.b16 %v2319
        %v2492 = vunpack.c.l.b16 %v2320
        %v2493 = vunpack.c.h.b16 %v2320
        %v2494 = vpack.c.b16 %v2390, %v2382
        %v2495 = vpack.c.b16 %v2391, %v2383
        %v2496 = vpack.c.b16 %v2392, %v2384
        %v2497 = vpack.c.b16 %v2393, %v2385
        %v2498 = vpack.c.b16 %v2394, %v2386
        %v2499 = vpack.c.b16 %v2395, %v2387
        %v2500 = vpack.c.b16 %v2396, %v2388
        %v2501 = vpack.c.b16 %v2397, %v2389
        %v2502 = vpack.c.b16 %v2406, %v2398
        %v2503 = vpack.c.b16 %v2407, %v2399
        %v2504 = vpack.c.b16 %v2408, %v2400
        %v2505 = vpack.c.b16 %v2409, %v2401
        %v2506 = vpack.c.b16 %v2410, %v2402
        %v2507 = vpack.c.b16 %v2411, %v2403
        %v2508 = vpack.c.b16 %v2412, %v2404
        %v2509 = vpack.c.b16 %v2413, %v2405
        %v2510 = vpack.c.b16 %v2422, %v2414
        %v2511 = vpack.c.b16 %v2423, %v2415
        %v2512 = vpack.c.b16 %v2424, %v2416
        %v2513 = vpack.c.b16 %v2425, %v2417
        %v2514 = vpack.c.b16 %v2426, %v2418
        %v2515 = vpack.c.b16 %v2427, %v2419
        %v2516 = vpack.c.b16 %v2428, %v2420
        %v2517 = vpack.c.b16 %v2429, %v2421
        %v2518 = vpack.c.b16 %v2438, %v2430
        %v2519 = vpack.c.b16 %v2439, %v2431
        %v2520 = vpack.c.b16 %v2440, %v2432
        %v2521 = vpack.c.b16 %v2441, %v2433
        %v2522 = vpack.c.b16 %v2442, %v2434
        %v2523 = vpack.c.b16 %v2443, %v2435
        %v2524 = vpack.c.b16 %v2444, %v2436
        %v2525 = vpack.c.b16 %v2445, %v2437
        %v2526 = vpack.c.b16 %v2454, %v2446
        %v2527 = vpack.c.b16 %v2455, %v2447
        %v2528 = vpack.c.b16 %v2456, %v2448
        %v2529 = vpack.c.b16 %v2457, %v2449
        %v2530 = vpack.c.b16 %v2458, %v2450
        %v2531 = vpack.c.b16 %v2459, %v2451
        %v2532 = vpack.c.b16 %v2460, %v2452
        %v2533 = vpack.c.b16 %v2461, %v2453
        %v2534 = vpack.c.b16 %v2470, %v2462
        %v2535 = vpack.c.b16 %v2471, %v2463
        %v2536 = vpack.c.b16 %v2472, %v2464
        %v2537 = vpack.c.b16 %v2473, %v2465
        %v2538 = vpack.c.b16 %v2474, %v2466
        %v2539 = vpack.c.b16 %v2475, %v2467
        %v2540 = vpack.c.b16 %v2476, %v2468
        %v2541 = vpack.c.b16 %v2477, %v2469
        %v2542 = vpack.c.b16 %v2486, %v2478
        %v2543 = vpack.c.b16 %v2487, %v2479
        %v2544 = vpack.c.b16 %v2488, %v2480
        %v2545 = vpack.c.b16 %v2489, %v2481
        %v2546 = vpack.c.b16 %v2490, %v2482
        %v2547 = vpack.c.b16 %v2491, %v2483
        %v2548 = vpack.c.b16 %v2492, %v2484
        %v2549 = vpack.c.b16 %v2493, %v2485
        %vm2598 = vcmask 883712
        %v2600 = vsel %vm2598, %v2325, 0
        %vm2602 = vcmask 1045504
        %v2604 = vsel %vm2602, %v2542, 0
        %v2607 = vsel %vm2602, %v2543, 0
        %v2610 = vsel %vm2602, %v2544, 0
        %v2613 = vsel %vm2602, %v2545, 0
        %v2616 = vsel %vm2602, %v2546, 0
        %v2619 = vsel %vm2602, %v2547, 0
        %v2622 = vsel %vm2602, %v2548, 0
        %v2625 = vsel %vm2602, %v2549, 0
        %2627 = vmatprep.subr.bf16.mxu0 0
        %2628 = vmatpush1.bf16.msra.mxu0 0
        %2629 = vmatprep.subr.bf16.mxu0 %v2607
        %2630 = vmatpush1.bf16.msra.mxu0 %v2604
        %2631 = vmatprep.subr.bf16.mxu0 %v2535
        %2632 = vmatpush1.bf16.msra.mxu0 %v2534
        %2633 = vmatprep.subr.bf16.mxu0 %v2527
        %2634 = vmatpush1.bf16.msra.mxu0 %v2526
        %2635 = vmatprep.subr.bf16.mxu0 %v2519
        %2636 = vmatpush1.bf16.msra.mxu0 %v2518
        %2637 = vmatprep.subr.bf16.mxu0 %v2511
        %2638 = vmatpush1.bf16.msra.mxu0 %v2510
        %2639 = vmatprep.subr.bf16.mxu0 %v2503
        %2640 = vmatpush1.bf16.msra.mxu0 %v2502
        %2641 = vmatprep.subr.bf16.mxu0 %v2495
        %2642 = vmatpush1.bf16.msra.mxu0 %v2494
        %2643 = vmatprep.subr.bf16.mxu0 0
        %2644 = vmatpush2.bf16.msra.mxu0 0
        %2645 = vmatprep.subr.bf16.mxu0 0
        %2646 = vmatpush2.bf16.msra.mxu0 0
        %2647 = vmatprep.subr.bf16.mxu0 0
        %2648 = vmatpush2.bf16.msra.mxu0 0
        %2649 = vmatprep.subr.bf16.mxu0 0
        %2650 = vmatpush2.bf16.msra.mxu0 0
        %2651 = vmatprep.subr.bf16.mxu0 0
        %2652 = vmatpush2.bf16.msra.mxu0 0
        %2653 = vmatprep.subr.bf16.mxu0 0
        %2654 = vmatpush2.bf16.msra.mxu0 0
        %2655 = vmatprep.subr.bf16.mxu0 0
        %2656 = vmatpush2.bf16.msra.mxu0 0
        %2657 = vmatprep.subr.bf16.mxu0 0
        %2658 = vmatpush2.bf16.msra.mxu0 0
        %2659 = vmatprep.mubr.bf16.mxu0 0
        %2660 = vmatmul.mubr.bf16.gmra.mxu0 %v2600
        %v2661 = vpop.f32.mrf.mxu0
        %v2662 = vadd.f32 0.0, %v2661
        %v2663 = vpop.f32.mrf.mxu0
        %v2664 = vadd.f32 0.0, %v2663
        %v2665 = vpop.f32.mrf.mxu0
        %v2666 = vadd.f32 0.0, %v2665
        %v2667 = vpop.f32.mrf.mxu0
        %v2668 = vadd.f32 0.0, %v2667
        %2669 = vdwg.mxu0
        %2670 = vmatprep.subr.bf16.mxu0 0
        %2671 = vmatpush1.bf16.msra.mxu0 0
        %2672 = vmatprep.subr.bf16.mxu0 %v2613
        %2673 = vmatpush1.bf16.msra.mxu0 %v2610
        %2674 = vmatprep.subr.bf16.mxu0 %v2537
        %2675 = vmatpush1.bf16.msra.mxu0 %v2536
        %2676 = vmatprep.subr.bf16.mxu0 %v2529
        %2677 = vmatpush1.bf16.msra.mxu0 %v2528
        %2678 = vmatprep.subr.bf16.mxu0 %v2521
        %2679 = vmatpush1.bf16.msra.mxu0 %v2520
        %2680 = vmatprep.subr.bf16.mxu0 %v2513
        %2681 = vmatpush1.bf16.msra.mxu0 %v2512
        %2682 = vmatprep.subr.bf16.mxu0 %v2505
        %2683 = vmatpush1.bf16.msra.mxu0 %v2504
        %2684 = vmatprep.subr.bf16.mxu0 %v2497
        %2685 = vmatpush1.bf16.msra.mxu0 %v2496
        %2686 = vmatprep.subr.bf16.mxu0 0
        %2687 = vmatpush2.bf16.msra.mxu0 0
        %2688 = vmatprep.subr.bf16.mxu0 0
        %2689 = vmatpush2.bf16.msra.mxu0 0
        %2690 = vmatprep.subr.bf16.mxu0 0
        %2691 = vmatpush2.bf16.msra.mxu0 0
        %2692 = vmatprep.subr.bf16.mxu0 0
        %2693 = vmatpush2.bf16.msra.mxu0 0
        %2694 = vmatprep.subr.bf16.mxu0 0
        %2695 = vmatpush2.bf16.msra.mxu0 0
        %2696 = vmatprep.subr.bf16.mxu0 0
        %2697 = vmatpush2.bf16.msra.mxu0 0
        %2698 = vmatprep.subr.bf16.mxu0 0
        %2699 = vmatpush2.bf16.msra.mxu0 0
        %2700 = vmatprep.subr.bf16.mxu0 0
        %2701 = vmatpush2.bf16.msra.mxu0 0
        %2702 = vmatprep.mubr.bf16.mxu0 0
        %2703 = vmatmul.mubr.bf16.gmra.mxu0 %v2600
        %v2704 = vpop.f32.mrf.mxu0
        %v2705 = vadd.f32 0.0, %v2704
        %v2706 = vpop.f32.mrf.mxu0
        %v2707 = vadd.f32 0.0, %v2706
        %v2708 = vpop.f32.mrf.mxu0
        %v2709 = vadd.f32 0.0, %v2708
        %v2710 = vpop.f32.mrf.mxu0
        %v2711 = vadd.f32 0.0, %v2710
        %2712 = vdwg.mxu0
        %2713 = vmatprep.subr.bf16.mxu0 0
        %2714 = vmatpush1.bf16.msra.mxu0 0
        %2715 = vmatprep.subr.bf16.mxu0 %v2619
        %2716 = vmatpush1.bf16.msra.mxu0 %v2616
        %2717 = vmatprep.subr.bf16.mxu0 %v2539
        %2718 = vmatpush1.bf16.msra.mxu0 %v2538
        %2719 = vmatprep.subr.bf16.mxu0 %v2531
        %2720 = vmatpush1.bf16.msra.mxu0 %v2530
        %2721 = vmatprep.subr.bf16.mxu0 %v2523
        %2722 = vmatpush1.bf16.msra.mxu0 %v2522
        %2723 = vmatprep.subr.bf16.mxu0 %v2515
        %2724 = vmatpush1.bf16.msra.mxu0 %v2514
        %2725 = vmatprep.subr.bf16.mxu0 %v2507
        %2726 = vmatpush1.bf16.msra.mxu0 %v2506
        %2727 = vmatprep.subr.bf16.mxu0 %v2499
        %2728 = vmatpush1.bf16.msra.mxu0 %v2498
        %2729 = vmatprep.subr.bf16.mxu0 0
        %2730 = vmatpush2.bf16.msra.mxu0 0
        %2731 = vmatprep.subr.bf16.mxu0 0
        %2732 = vmatpush2.bf16.msra.mxu0 0
        %2733 = vmatprep.subr.bf16.mxu0 0
        %2734 = vmatpush2.bf16.msra.mxu0 0
        %2735 = vmatprep.subr.bf16.mxu0 0
        %2736 = vmatpush2.bf16.msra.mxu0 0
        %2737 = vmatprep.subr.bf16.mxu0 0
        %2738 = vmatpush2.bf16.msra.mxu0 0
        %2739 = vmatprep.subr.bf16.mxu0 0
        %2740 = vmatpush2.bf16.msra.mxu0 0
        %2741 = vmatprep.subr.bf16.mxu0 0
        %2742 = vmatpush2.bf16.msra.mxu0 0
        %2743 = vmatprep.subr.bf16.mxu0 0
        %2744 = vmatpush2.bf16.msra.mxu0 0
        %2745 = vmatprep.mubr.bf16.mxu0 0
        %2746 = vmatmul.mubr.bf16.gmra.mxu0 %v2600
        %v2747 = vpop.f32.mrf.mxu0
        %v2748 = vadd.f32 0.0, %v2747
        %v2749 = vpop.f32.mrf.mxu0
        %v2750 = vadd.f32 0.0, %v2749
        %v2751 = vpop.f32.mrf.mxu0
        %v2752 = vadd.f32 0.0, %v2751
        %v2753 = vpop.f32.mrf.mxu0
        %v2754 = vadd.f32 0.0, %v2753
        %2755 = vdwg.mxu0
        %2756 = vmatprep.subr.bf16.mxu0 0
        %2757 = vmatpush1.bf16.msra.mxu0 0
        %2758 = vmatprep.subr.bf16.mxu0 %v2625
        %2759 = vmatpush1.bf16.msra.mxu0 %v2622
        %2760 = vmatprep.subr.bf16.mxu0 %v2541
        %2761 = vmatpush1.bf16.msra.mxu0 %v2540
        %2762 = vmatprep.subr.bf16.mxu0 %v2533
        %2763 = vmatpush1.bf16.msra.mxu0 %v2532
        %2764 = vmatprep.subr.bf16.mxu0 %v2525
        %2765 = vmatpush1.bf16.msra.mxu0 %v2524
        %2766 = vmatprep.subr.bf16.mxu0 %v2517
        %2767 = vmatpush1.bf16.msra.mxu0 %v2516
        %2768 = vmatprep.subr.bf16.mxu0 %v2509
        %2769 = vmatpush1.bf16.msra.mxu0 %v2508
        %2770 = vmatprep.subr.bf16.mxu0 %v2501
        %2771 = vmatpush1.bf16.msra.mxu0 %v2500
        %2772 = vmatprep.subr.bf16.mxu0 0
        %2773 = vmatpush2.bf16.msra.mxu0 0
        %2774 = vmatprep.subr.bf16.mxu0 0
        %2775 = vmatpush2.bf16.msra.mxu0 0
        %2776 = vmatprep.subr.bf16.mxu0 0
        %2777 = vmatpush2.bf16.msra.mxu0 0
        %2778 = vmatprep.subr.bf16.mxu0 0
        %2779 = vmatpush2.bf16.msra.mxu0 0
        %2780 = vmatprep.subr.bf16.mxu0 0
        %2781 = vmatpush2.bf16.msra.mxu0 0
        %2782 = vmatprep.subr.bf16.mxu0 0
        %2783 = vmatpush2.bf16.msra.mxu0 0
        %2784 = vmatprep.subr.bf16.mxu0 0
        %2785 = vmatpush2.bf16.msra.mxu0 0
        %2786 = vmatprep.subr.bf16.mxu0 0
        %2787 = vmatpush2.bf16.msra.mxu0 0
        %2788 = vmatprep.mubr.bf16.mxu0 0
        %2789 = vmatmul.mubr.bf16.gmra.mxu0 %v2600
        %v2790 = vpop.f32.mrf.mxu0
        %v2791 = vadd.f32 0.0, %v2790
        %v2792 = vpop.f32.mrf.mxu0
        %v2793 = vadd.f32 0.0, %v2792
        %v2794 = vpop.f32.mrf.mxu0
        %v2795 = vadd.f32 0.0, %v2794
        %v2796 = vpop.f32.mrf.mxu0
        %v2797 = vadd.f32 0.0, %v2796
        %2798 = vdwg.mxu0
        %v2800 = vlaneseq
        %v2801 = vshrl.u32 %v2800, 7
        %v2802 = vsub.s32 0, %v2801
        %v2803 = vrot.slane %v255, %v2802
        %v2804 = vlaneseq
        %v2805 = vshrl.u32 %v2804, 7
        %v2806 = vsub.s32 1, %v2805
        %v2807 = vrot.slane %v255, %v2806
        %v2808 = vlaneseq
        %v2809 = vshrl.u32 %v2808, 7
        %v2810 = vsub.s32 2, %v2809
        %v2811 = vrot.slane %v255, %v2810
        %v2812 = vlaneseq
        %v2813 = vshrl.u32 %v2812, 7
        %v2814 = vsub.s32 3, %v2813
        %v2815 = vrot.slane %v255, %v2814
        %v2816 = vlaneseq
        %v2817 = vshrl.u32 %v2816, 7
        %v2818 = vsub.s32 4, %v2817
        %v2819 = vrot.slane %v255, %v2818
        %v2820 = vlaneseq
        %v2821 = vshrl.u32 %v2820, 7
        %v2822 = vsub.s32 5, %v2821
        %v2823 = vrot.slane %v255, %v2822
        %v2824 = vlaneseq
        %v2825 = vshrl.u32 %v2824, 7
        %v2826 = vsub.s32 6, %v2825
        %v2827 = vrot.slane %v255, %v2826
        %v2828 = vlaneseq
        %v2829 = vshrl.u32 %v2828, 7
        %v2830 = vsub.s32 7, %v2829
        %v2831 = vrot.slane %v255, %v2830
        %v2840 = vmul.f32 %v2662, %v2803
        %v2841 = vmul.f32 %v2664, %v2807
        %v2842 = vmul.f32 %v2705, %v2811
        %v2843 = vmul.f32 %v2707, %v2815
        %v2844 = vmul.f32 %v2748, %v2819
        %v2845 = vmul.f32 %v2750, %v2823
        %v2846 = vmul.f32 %v2791, %v2827
        %v2847 = vmul.f32 %v2793, %v2831
        %v2848 = vmul.f32 %v2666, %v2803
        %v2849 = vmul.f32 %v2668, %v2807
        %v2850 = vmul.f32 %v2709, %v2811
        %v2851 = vmul.f32 %v2711, %v2815
        %v2852 = vmul.f32 %v2752, %v2819
        %v2853 = vmul.f32 %v2754, %v2823
        %v2854 = vmul.f32 %v2795, %v2827
        %v2855 = vmul.f32 %v2797, %v2831
        %v2856 = vadd.f32 %v2840, %v2841
        %v2857 = vadd.f32 %v2856, %v2842
        %v2858 = vadd.f32 %v2857, %v2843
        %v2859 = vadd.f32 %v2858, %v2844
        %v2860 = vadd.f32 %v2859, %v2845
        %v2861 = vadd.f32 %v2860, %v2846
        %v2862 = vadd.f32 %v2861, %v2847
        %2863 = vadd.xlane.f32.xlu0 %v2862
        %v2864 = vpop.xlane.xlu0 %2863
        %v2865 = vadd.f32 %v2848, %v2849
        %v2866 = vadd.f32 %v2865, %v2850
        %v2867 = vadd.f32 %v2866, %v2851
        %v2868 = vadd.f32 %v2867, %v2852
        %v2869 = vadd.f32 %v2868, %v2853
        %v2870 = vadd.f32 %v2869, %v2854
        %v2871 = vadd.f32 %v2870, %v2855
        %2872 = vadd.xlane.f32.xlu0 %v2871
        %v2873 = vpop.xlane.xlu0 %2872
        %v2874 = vmul.f32 %v2840, %v2662
        %v2875 = vmul.f32 %v2841, %v2664
        %v2876 = vmul.f32 %v2842, %v2705
        %v2877 = vmul.f32 %v2843, %v2707
        %v2878 = vmul.f32 %v2844, %v2748
        %v2879 = vmul.f32 %v2845, %v2750
        %v2880 = vmul.f32 %v2846, %v2791
        %v2881 = vmul.f32 %v2847, %v2793
        %v2882 = vmul.f32 %v2848, %v2666
        %v2883 = vmul.f32 %v2849, %v2668
        %v2884 = vmul.f32 %v2850, %v2709
        %v2885 = vmul.f32 %v2851, %v2711
        %v2886 = vmul.f32 %v2852, %v2752
        %v2887 = vmul.f32 %v2853, %v2754
        %v2888 = vmul.f32 %v2854, %v2795
        %v2889 = vmul.f32 %v2855, %v2797
        %v2890 = vadd.f32 %v2874, %v2875
        %v2891 = vadd.f32 %v2890, %v2876
        %v2892 = vadd.f32 %v2891, %v2877
        %v2893 = vadd.f32 %v2892, %v2878
        %v2894 = vadd.f32 %v2893, %v2879
        %v2895 = vadd.f32 %v2894, %v2880
        %v2896 = vadd.f32 %v2895, %v2881
        %2897 = vadd.xlane.f32.xlu0 %v2896
        %v2898 = vpop.xlane.xlu0 %2897
        %v2899 = vadd.f32 %v2882, %v2883
        %v2900 = vadd.f32 %v2899, %v2884
        %v2901 = vadd.f32 %v2900, %v2885
        %v2902 = vadd.f32 %v2901, %v2886
        %v2903 = vadd.f32 %v2902, %v2887
        %v2904 = vadd.f32 %v2903, %v2888
        %v2905 = vadd.f32 %v2904, %v2889
        %2906 = vadd.xlane.f32.xlu0 %v2905
        %v2907 = vpop.xlane.xlu0 %2906
        %v2908 = vmul.f32 %v2864, 0.001953125
        %v2909 = vmul.f32 %v2873, 0.001953125
        %v2910 = vmul.f32 %v2898, 0.001953125
        %v2911 = vmul.f32 %v2907, 0.001953125
        %v2912 = vmul.f32 %v2908, %v2908
        %v2913 = vmul.f32 %v2909, %v2909
        %v2914 = vsub.f32 %v2910, %v2912
        %v2915 = vsub.f32 %v2911, %v2913
        %v2916 = vmax.f32 %v2914, 0.0
        %v2917 = vmax.f32 %v2915, 0.0
        %v2918 = vadd.f32 %v2916, 1e-05
        %v2919 = vadd.f32 %v2917, 1e-05
        %v2920 = vrsqrt.pop %v2918
        %v2921 = vrsqrt.pop %v2919
        %v2922 = vsub.f32 %v2662, %v2908
        %v2923 = vsub.f32 %v2664, %v2908
        %v2924 = vsub.f32 %v2705, %v2908
        %v2925 = vsub.f32 %v2707, %v2908
        %v2926 = vsub.f32 %v2748, %v2908
        %v2927 = vsub.f32 %v2750, %v2908
        %v2928 = vsub.f32 %v2791, %v2908
        %v2929 = vsub.f32 %v2793, %v2908
        %v2930 = vsub.f32 %v2666, %v2909
        %v2931 = vsub.f32 %v2668, %v2909
        %v2932 = vsub.f32 %v2709, %v2909
        %v2933 = vsub.f32 %v2711, %v2909
        %v2934 = vsub.f32 %v2752, %v2909
        %v2935 = vsub.f32 %v2754, %v2909
        %v2936 = vsub.f32 %v2795, %v2909
        %v2937 = vsub.f32 %v2797, %v2909
        %v2938 = vmul.f32 %v2922, %v2920
        %v2939 = vmul.f32 %v2923, %v2920
        %v2940 = vmul.f32 %v2924, %v2920
        %v2941 = vmul.f32 %v2925, %v2920
        %v2942 = vmul.f32 %v2926, %v2920
        %v2943 = vmul.f32 %v2927, %v2920
        %v2944 = vmul.f32 %v2928, %v2920
        %v2945 = vmul.f32 %v2929, %v2920
        %v2946 = vmul.f32 %v2930, %v2921
        %v2947 = vmul.f32 %v2931, %v2921
        %v2948 = vmul.f32 %v2932, %v2921
        %v2949 = vmul.f32 %v2933, %v2921
        %v2950 = vmul.f32 %v2934, %v2921
        %v2951 = vmul.f32 %v2935, %v2921
        %v2952 = vmul.f32 %v2936, %v2921
        %v2953 = vmul.f32 %v2937, %v2921
        %v2954 = vmax.f32 %v2938, 0.0
        %v2955 = vmax.f32 %v2939, 0.0
        %v2956 = vmax.f32 %v2940, 0.0
        %v2957 = vmax.f32 %v2941, 0.0
        %v2958 = vmax.f32 %v2942, 0.0
        %v2959 = vmax.f32 %v2943, 0.0
        %v2960 = vmax.f32 %v2944, 0.0
        %v2961 = vmax.f32 %v2945, 0.0
        %v2962 = vmax.f32 %v2946, 0.0
        %v2963 = vmax.f32 %v2947, 0.0
        %v2964 = vmax.f32 %v2948, 0.0
        %v2965 = vmax.f32 %v2949, 0.0
        %v2966 = vmax.f32 %v2950, 0.0
        %v2967 = vmax.f32 %v2951, 0.0
        %v2968 = vmax.f32 %v2952, 0.0
        %v2969 = vmax.f32 %v2953, 0.0
        %v2970 = vmul.f32 %v2954, %v2803
        %v2971 = vmul.f32 %v2955, %v2807
        %v2972 = vmul.f32 %v2956, %v2811
        %v2973 = vmul.f32 %v2957, %v2815
        %v2974 = vmul.f32 %v2958, %v2819
        %v2975 = vmul.f32 %v2959, %v2823
        %v2976 = vmul.f32 %v2960, %v2827
        %v2977 = vmul.f32 %v2961, %v2831
        %v2978 = vmul.f32 %v2962, %v2803
        %v2979 = vmul.f32 %v2963, %v2807
        %v2980 = vmul.f32 %v2964, %v2811
        %v2981 = vmul.f32 %v2965, %v2815
        %v2982 = vmul.f32 %v2966, %v2819
        %v2983 = vmul.f32 %v2967, %v2823
        %v2984 = vmul.f32 %v2968, %v2827
        %v2985 = vmul.f32 %v2969, %v2831
        %v2986 = vpack.c.bf16 %v2970, %v2970
        %v2987 = vpack.c.bf16 %v2971, %v2971
        %v2988 = vpack.c.bf16 %v2972, %v2972
        %v2989 = vpack.c.bf16 %v2973, %v2973
        %v2990 = vpack.c.bf16 %v2974, %v2974
        %v2991 = vpack.c.bf16 %v2975, %v2975
        %v2992 = vpack.c.bf16 %v2976, %v2976
        %v2993 = vpack.c.bf16 %v2977, %v2977
        %v3002 = vunpack.c.l.b16 %v2986
        %v3003 = vunpack.c.l.b16 %v2987
        %v3004 = vunpack.c.l.b16 %v2988
        %v3005 = vunpack.c.l.b16 %v2989
        %v3006 = vunpack.c.l.b16 %v2990
        %v3007 = vunpack.c.l.b16 %v2991
        %v3008 = vunpack.c.l.b16 %v2992
        %v3009 = vunpack.c.l.b16 %v2993
        %v3010 = vpack.c.b16 %v3003, %v3002
        %v3011 = vpack.c.b16 %v3005, %v3004
        %v3012 = vpack.c.b16 %v3007, %v3006
        %v3013 = vpack.c.b16 %v3009, %v3008
        %3018 = vst [vmem:[#allocation4 + $0x4] sm:$0xff] %v3010
        %3019 = vst [vmem:[#allocation4 + $0xc] sm:$0xff] %v3011
        %3020 = vst [vmem:[#allocation4 + $0x14] sm:$0xff] %v3012
        %3021 = vst [vmem:[#allocation4 + $0x1c] sm:$0xff] %v3013
        %v3022 = vld [vmem:[#allocation4] sm:$0xff]
        %v3023 = vld [vmem:[#allocation4 + $0x8] sm:$0xff]
        %v3024 = vld [vmem:[#allocation4 + $0x10] sm:$0xff]
        %v3025 = vld [vmem:[#allocation4 + $0x18] sm:$0xff]
        %v3026 = vld [vmem:[#allocation4 + $0x20] sm:$0xf]
        %3032 = vrot.lane.b32.xlu0 %v3022, 111
        %v3033 = vpop.permute.xlu0 %3032
        %3034 = vrot.lane.b32.xlu0 %v3023, 111
        %v3035 = vpop.permute.xlu0 %3034
        %3036 = vrot.lane.b32.xlu0 %v3024, 111
        %v3037 = vpop.permute.xlu0 %3036
        %3038 = vrot.lane.b32.xlu0 %v3025, 111
        %v3039 = vpop.permute.xlu0 %3038
        %3040 = vrot.lane.b32.xlu0 %v3026, 111
        %v3041 = vpop.permute.xlu0 %3040
        %v3042 = vrot.slane %v3033, 4
        %v3043 = vrot.slane %v3035, 4
        %v3044 = vrot.slane %v3037, 4
        %v3045 = vrot.slane %v3039, 4
        %v3046 = vrot.slane %v3041, 4
        %v3047 = vsel %vm316, %v3042, %v3043
        %v3048 = vsel %vm318, %v3033, %v3047
        %v3049 = vsel %vm316, %v3043, %v3044
        %v3050 = vsel %vm318, %v3035, %v3049
        %v3051 = vsel %vm316, %v3044, %v3045
        %v3052 = vsel %vm318, %v3037, %v3051
        %v3053 = vsel %vm316, %v3045, %v3046
        %v3054 = vsel %vm318, %v3039, %v3053
        %3059 = vst [vmem:[#allocation3] sm:$0xff] %v3048
        %3060 = vst [vmem:[#allocation3 + $0x8] sm:$0xff] %v3050
        %3061 = vst [vmem:[#allocation3 + $0x10] sm:$0xff] %v3052
        %3062 = vst [vmem:[#allocation3 + $0x18] sm:$0xff] %v3054
        %v3063 = vld [vmem:[#allocation4] sm:$0xff]
        %v3064 = vld [vmem:[#allocation4 + $0x8] sm:$0xff]
        %v3065 = vld [vmem:[#allocation4 + $0x10] sm:$0xff]
        %v3066 = vld [vmem:[#allocation4 + $0x18] sm:$0xff]
        %v3067 = vld [vmem:[#allocation4 + $0x20] sm:$0xf]
        %3073 = vrot.lane.b32.xlu0 %v3063, 110
        %v3074 = vpop.permute.xlu0 %3073
        %3075 = vrot.lane.b32.xlu0 %v3064, 110
        %v3076 = vpop.permute.xlu0 %3075
        %3077 = vrot.lane.b32.xlu0 %v3065, 110
        %v3078 = vpop.permute.xlu0 %3077
        %3079 = vrot.lane.b32.xlu0 %v3066, 110
        %v3080 = vpop.permute.xlu0 %3079
        %3081 = vrot.lane.b32.xlu0 %v3067, 110
        %v3082 = vpop.permute.xlu0 %3081
        %v3083 = vrot.slane %v3074, 4
        %v3084 = vrot.slane %v3076, 4
        %v3085 = vrot.slane %v3078, 4
        %v3086 = vrot.slane %v3080, 4
        %v3087 = vrot.slane %v3082, 4
        %v3088 = vsel %vm316, %v3083, %v3084
        %v3089 = vsel %vm394, %v3074, %v3088
        %v3090 = vsel %vm316, %v3084, %v3085
        %v3091 = vsel %vm394, %v3076, %v3090
        %v3092 = vsel %vm316, %v3085, %v3086
        %v3093 = vsel %vm394, %v3078, %v3092
        %v3094 = vsel %vm316, %v3086, %v3087
        %v3095 = vsel %vm394, %v3080, %v3094
        %3100 = vst [vmem:[#allocation3 + $0x20] sm:$0xff] %v3089
        %3101 = vst [vmem:[#allocation3 + $0x28] sm:$0xff] %v3091
        %3102 = vst [vmem:[#allocation3 + $0x30] sm:$0xff] %v3093
        %3103 = vst [vmem:[#allocation3 + $0x38] sm:$0xff] %v3095
        %v3104 = vld [vmem:[#allocation4] sm:$0xff]
        %v3105 = vld [vmem:[#allocation4 + $0x8] sm:$0xff]
        %v3106 = vld [vmem:[#allocation4 + $0x10] sm:$0xff]
        %v3107 = vld [vmem:[#allocation4 + $0x18] sm:$0xff]
        %v3108 = vld [vmem:[#allocation4 + $0x20] sm:$0xf]
        %3114 = vrot.lane.b32.xlu0 %v3104, 109
        %v3115 = vpop.permute.xlu0 %3114
        %3116 = vrot.lane.b32.xlu0 %v3105, 109
        %v3117 = vpop.permute.xlu0 %3116
        %3118 = vrot.lane.b32.xlu0 %v3106, 109
        %v3119 = vpop.permute.xlu0 %3118
        %3120 = vrot.lane.b32.xlu0 %v3107, 109
        %v3121 = vpop.permute.xlu0 %3120
        %3122 = vrot.lane.b32.xlu0 %v3108, 109
        %v3123 = vpop.permute.xlu0 %3122
        %v3124 = vrot.slane %v3115, 4
        %v3125 = vrot.slane %v3117, 4
        %v3126 = vrot.slane %v3119, 4
        %v3127 = vrot.slane %v3121, 4
        %v3128 = vrot.slane %v3123, 4
        %v3129 = vsel %vm316, %v3124, %v3125
        %v3130 = vsel %vm469, %v3115, %v3129
        %v3131 = vsel %vm316, %v3125, %v3126
        %v3132 = vsel %vm469, %v3117, %v3131
        %v3133 = vsel %vm316, %v3126, %v3127
        %v3134 = vsel %vm469, %v3119, %v3133
        %v3135 = vsel %vm316, %v3127, %v3128
        %v3136 = vsel %vm469, %v3121, %v3135
        %3141 = vst [vmem:[#allocation3 + $0x40] sm:$0xff] %v3130
        %3142 = vst [vmem:[#allocation3 + $0x48] sm:$0xff] %v3132
        %3143 = vst [vmem:[#allocation3 + $0x50] sm:$0xff] %v3134
        %3144 = vst [vmem:[#allocation3 + $0x58] sm:$0xff] %v3136
        %v3145 = vld [vmem:[#allocation4] sm:$0xff]
        %v3146 = vld [vmem:[#allocation4 + $0x8] sm:$0xff]
        %v3147 = vld [vmem:[#allocation4 + $0x10] sm:$0xff]
        %v3148 = vld [vmem:[#allocation4 + $0x18] sm:$0xff]
        %v3149 = vld [vmem:[#allocation4 + $0x20] sm:$0xf]
        %3155 = vrot.lane.b32.xlu0 %v3145, 101
        %v3156 = vpop.permute.xlu0 %3155
        %3157 = vrot.lane.b32.xlu0 %v3146, 101
        %v3158 = vpop.permute.xlu0 %3157
        %3159 = vrot.lane.b32.xlu0 %v3147, 101
        %v3160 = vpop.permute.xlu0 %3159
        %3161 = vrot.lane.b32.xlu0 %v3148, 101
        %v3162 = vpop.permute.xlu0 %3161
        %3163 = vrot.lane.b32.xlu0 %v3149, 101
        %v3164 = vpop.permute.xlu0 %3163
        %v3165 = vrot.slane %v3156, 4
        %v3166 = vrot.slane %v3158, 4
        %v3167 = vrot.slane %v3160, 4
        %v3168 = vrot.slane %v3162, 4
        %v3169 = vrot.slane %v3164, 4
        %v3170 = vsel %vm316, %v3165, %v3166
        %v3171 = vsel %vm545, %v3156, %v3170
        %v3172 = vsel %vm316, %v3166, %v3167
        %v3173 = vsel %vm545, %v3158, %v3172
        %v3174 = vsel %vm316, %v3167, %v3168
        %v3175 = vsel %vm545, %v3160, %v3174
        %v3176 = vsel %vm316, %v3168, %v3169
        %v3177 = vsel %vm545, %v3162, %v3176
        %3182 = vst [vmem:[#allocation3 + $0x60] sm:$0xff] %v3171
        %3183 = vst [vmem:[#allocation3 + $0x68] sm:$0xff] %v3173
        %3184 = vst [vmem:[#allocation3 + $0x70] sm:$0xff] %v3175
        %3185 = vst [vmem:[#allocation3 + $0x78] sm:$0xff] %v3177
        %v3186 = vld [vmem:[#allocation4] sm:$0xff]
        %v3187 = vld [vmem:[#allocation4 + $0x8] sm:$0xff]
        %v3188 = vld [vmem:[#allocation4 + $0x10] sm:$0xff]
        %v3189 = vld [vmem:[#allocation4 + $0x18] sm:$0xff]
        %v3190 = vld [vmem:[#allocation4 + $0x20] sm:$0xf]
        %3196 = vrot.lane.b32.xlu0 %v3186, 100
        %v3197 = vpop.permute.xlu0 %3196
        %3198 = vrot.lane.b32.xlu0 %v3187, 100
        %v3199 = vpop.permute.xlu0 %3198
        %3200 = vrot.lane.b32.xlu0 %v3188, 100
        %v3201 = vpop.permute.xlu0 %3200
        %3202 = vrot.lane.b32.xlu0 %v3189, 100
        %v3203 = vpop.permute.xlu0 %3202
        %3204 = vrot.lane.b32.xlu0 %v3190, 100
        %v3205 = vpop.permute.xlu0 %3204
        %v3206 = vrot.slane %v3197, 4
        %v3207 = vrot.slane %v3199, 4
        %v3208 = vrot.slane %v3201, 4
        %v3209 = vrot.slane %v3203, 4
        %v3210 = vrot.slane %v3205, 4
        %v3211 = vsel %vm316, %v3206, %v3207
        %v3212 = vsel %vm620, %v3197, %v3211
        %v3213 = vsel %vm316, %v3207, %v3208
        %v3214 = vsel %vm620, %v3199, %v3213
        %v3215 = vsel %vm316, %v3208, %v3209
        %v3216 = vsel %vm620, %v3201, %v3215
        %v3217 = vsel %vm316, %v3209, %v3210
        %v3218 = vsel %vm620, %v3203, %v3217
        %3223 = vst [vmem:[#allocation3 + $0x80] sm:$0xff] %v3212
        %3224 = vst [vmem:[#allocation3 + $0x88] sm:$0xff] %v3214
        %3225 = vst [vmem:[#allocation3 + $0x90] sm:$0xff] %v3216
        %3226 = vst [vmem:[#allocation3 + $0x98] sm:$0xff] %v3218
        %v3227 = vld [vmem:[#allocation4] sm:$0xff]
        %v3228 = vld [vmem:[#allocation4 + $0x8] sm:$0xff]
        %v3229 = vld [vmem:[#allocation4 + $0x10] sm:$0xff]
        %v3230 = vld [vmem:[#allocation4 + $0x18] sm:$0xff]
        %v3231 = vld [vmem:[#allocation4 + $0x20] sm:$0xf]
        %3237 = vrot.lane.b32.xlu0 %v3227, 99
        %v3238 = vpop.permute.xlu0 %3237
        %3239 = vrot.lane.b32.xlu0 %v3228, 99
        %v3240 = vpop.permute.xlu0 %3239
        %3241 = vrot.lane.b32.xlu0 %v3229, 99
        %v3242 = vpop.permute.xlu0 %3241
        %3243 = vrot.lane.b32.xlu0 %v3230, 99
        %v3244 = vpop.permute.xlu0 %3243
        %3245 = vrot.lane.b32.xlu0 %v3231, 99
        %v3246 = vpop.permute.xlu0 %3245
        %v3247 = vrot.slane %v3238, 4
        %v3248 = vrot.slane %v3240, 4
        %v3249 = vrot.slane %v3242, 4
        %v3250 = vrot.slane %v3244, 4
        %v3251 = vrot.slane %v3246, 4
        %v3252 = vsel %vm316, %v3247, %v3248
        %v3253 = vsel %vm696, %v3238, %v3252
        %v3254 = vsel %vm316, %v3248, %v3249
        %v3255 = vsel %vm696, %v3240, %v3254
        %v3256 = vsel %vm316, %v3249, %v3250
        %v3257 = vsel %vm696, %v3242, %v3256
        %v3258 = vsel %vm316, %v3250, %v3251
        %v3259 = vsel %vm696, %v3244, %v3258
        %3264 = vst [vmem:[#allocation3 + $0xa0] sm:$0xff] %v3253
        %3265 = vst [vmem:[#allocation3 + $0xa8] sm:$0xff] %v3255
        %3266 = vst [vmem:[#allocation3 + $0xb0] sm:$0xff] %v3257
        %3267 = vst [vmem:[#allocation3 + $0xb8] sm:$0xff] %v3259
        %v3268 = vld [vmem:[#allocation4] sm:$0xff]
        %v3269 = vld [vmem:[#allocation4 + $0x8] sm:$0xff]
        %v3270 = vld [vmem:[#allocation4 + $0x10] sm:$0xff]
        %v3271 = vld [vmem:[#allocation4 + $0x18] sm:$0xff]
        %v3272 = vld [vmem:[#allocation4 + $0x20] sm:$0xf]
        %3278 = vrot.lane.b32.xlu0 %v3268, 91
        %v3279 = vpop.permute.xlu0 %3278
        %3280 = vrot.lane.b32.xlu0 %v3269, 91
        %v3281 = vpop.permute.xlu0 %3280
        %3282 = vrot.lane.b32.xlu0 %v3270, 91
        %v3283 = vpop.permute.xlu0 %3282
        %3284 = vrot.lane.b32.xlu0 %v3271, 91
        %v3285 = vpop.permute.xlu0 %3284
        %3286 = vrot.lane.b32.xlu0 %v3272, 91
        %v3287 = vpop.permute.xlu0 %3286
        %v3288 = vrot.slane %v3279, 4
        %v3289 = vrot.slane %v3281, 4
        %v3290 = vrot.slane %v3283, 4
        %v3291 = vrot.slane %v3285, 4
        %v3292 = vrot.slane %v3287, 4
        %v3293 = vsel %vm316, %v3288, %v3289
        %v3294 = vsel %vm771, %v3279, %v3293
        %v3295 = vsel %vm316, %v3289, %v3290
        %v3296 = vsel %vm771, %v3281, %v3295
        %v3297 = vsel %vm316, %v3290, %v3291
        %v3298 = vsel %vm771, %v3283, %v3297
        %v3299 = vsel %vm316, %v3291, %v3292
        %v3300 = vsel %vm771, %v3285, %v3299
        %3305 = vst [vmem:[#allocation3 + $0xc0] sm:$0xff] %v3294
        %3306 = vst [vmem:[#allocation3 + $0xc8] sm:$0xff] %v3296
        %3307 = vst [vmem:[#allocation3 + $0xd0] sm:$0xff] %v3298
        %3308 = vst [vmem:[#allocation3 + $0xd8] sm:$0xff] %v3300
        %v3309 = vld [vmem:[#allocation4] sm:$0xff]
        %v3310 = vld [vmem:[#allocation4 + $0x8] sm:$0xff]
        %v3311 = vld [vmem:[#allocation4 + $0x10] sm:$0xff]
        %v3312 = vld [vmem:[#allocation4 + $0x18] sm:$0xff]
        %v3313 = vld [vmem:[#allocation4 + $0x20] sm:$0xf]
        %3319 = vrot.lane.b32.xlu0 %v3309, 90
        %v3320 = vpop.permute.xlu0 %3319
        %3321 = vrot.lane.b32.xlu0 %v3310, 90
        %v3322 = vpop.permute.xlu0 %3321
        %3323 = vrot.lane.b32.xlu0 %v3311, 90
        %v3324 = vpop.permute.xlu0 %3323
        %3325 = vrot.lane.b32.xlu0 %v3312, 90
        %v3326 = vpop.permute.xlu0 %3325
        %3327 = vrot.lane.b32.xlu0 %v3313, 90
        %v3328 = vpop.permute.xlu0 %3327
        %v3329 = vrot.slane %v3320, 4
        %v3330 = vrot.slane %v3322, 4
        %v3331 = vrot.slane %v3324, 4
        %v3332 = vrot.slane %v3326, 4
        %v3333 = vrot.slane %v3328, 4
        %v3334 = vsel %vm316, %v3329, %v3330
        %v3335 = vsel %vm847, %v3320, %v3334
        %v3336 = vsel %vm316, %v3330, %v3331
        %v3337 = vsel %vm847, %v3322, %v3336
        %v3338 = vsel %vm316, %v3331, %v3332
        %v3339 = vsel %vm847, %v3324, %v3338
        %v3340 = vsel %vm316, %v3332, %v3333
        %v3341 = vsel %vm847, %v3326, %v3340
        %3346 = vst [vmem:[#allocation3 + $0xe0] sm:$0xff] %v3335
        %3347 = vst [vmem:[#allocation3 + $0xe8] sm:$0xff] %v3337
        %3348 = vst [vmem:[#allocation3 + $0xf0] sm:$0xff] %v3339
        %3349 = vst [vmem:[#allocation3 + $0xf8] sm:$0xff] %v3341
        %v3350 = vld [vmem:[#allocation4] sm:$0xff]
        %v3351 = vld [vmem:[#allocation4 + $0x8] sm:$0xff]
        %v3352 = vld [vmem:[#allocation4 + $0x10] sm:$0xff]
        %v3353 = vld [vmem:[#allocation4 + $0x18] sm:$0xff]
        %v3354 = vld [vmem:[#allocation4 + $0x20] sm:$0xf]
        %3360 = vrot.lane.b32.xlu0 %v3350, 89
        %v3361 = vpop.permute.xlu0 %3360
        %3362 = vrot.lane.b32.xlu0 %v3351, 89
        %v3363 = vpop.permute.xlu0 %3362
        %3364 = vrot.lane.b32.xlu0 %v3352, 89
        %v3365 = vpop.permute.xlu0 %3364
        %3366 = vrot.lane.b32.xlu0 %v3353, 89
        %v3367 = vpop.permute.xlu0 %3366
        %3368 = vrot.lane.b32.xlu0 %v3354, 89
        %v3369 = vpop.permute.xlu0 %3368
        %v3370 = vrot.slane %v3361, 4
        %v3371 = vrot.slane %v3363, 4
        %v3372 = vrot.slane %v3365, 4
        %v3373 = vrot.slane %v3367, 4
        %v3374 = vrot.slane %v3369, 4
        %v3375 = vsel %vm316, %v3370, %v3371
        %v3376 = vsel %vm922, %v3361, %v3375
        %v3377 = vsel %vm316, %v3371, %v3372
        %v3378 = vsel %vm922, %v3363, %v3377
        %v3379 = vsel %vm316, %v3372, %v3373
        %v3380 = vsel %vm922, %v3365, %v3379
        %v3381 = vsel %vm316, %v3373, %v3374
        %v3382 = vsel %vm922, %v3367, %v3381
        %3387 = vst [vmem:[#allocation3 + $0x100] sm:$0xff] %v3376
        %3388 = vst [vmem:[#allocation3 + $0x108] sm:$0xff] %v3378
        %3389 = vst [vmem:[#allocation3 + $0x110] sm:$0xff] %v3380
        %3390 = vst [vmem:[#allocation3 + $0x118] sm:$0xff] %v3382
        %v3391 = vld [vmem:[#allocation4] sm:$0xff]
        %v3392 = vld [vmem:[#allocation4 + $0x8] sm:$0xff]
        %v3393 = vld [vmem:[#allocation4 + $0x10] sm:$0xff]
        %v3394 = vld [vmem:[#allocation4 + $0x18] sm:$0xff]
        %v3395 = vld [vmem:[#allocation4 + $0x20] sm:$0xf]
        %3401 = vrot.lane.b32.xlu0 %v3391, 11
        %v3402 = vpop.permute.xlu0 %3401
        %3403 = vrot.lane.b32.xlu0 %v3392, 11
        %v3404 = vpop.permute.xlu0 %3403
        %3405 = vrot.lane.b32.xlu0 %v3393, 11
        %v3406 = vpop.permute.xlu0 %3405
        %3407 = vrot.lane.b32.xlu0 %v3394, 11
        %v3408 = vpop.permute.xlu0 %3407
        %3409 = vrot.lane.b32.xlu0 %v3395, 11
        %v3410 = vpop.permute.xlu0 %3409
        %v3411 = vrot.slane %v3402, 4
        %v3412 = vrot.slane %v3404, 4
        %v3413 = vrot.slane %v3406, 4
        %v3414 = vrot.slane %v3408, 4
        %v3415 = vrot.slane %v3410, 4
        %v3416 = vsel %vm316, %v3411, %v3412
        %v3417 = vsel %vm998, %v3402, %v3416
        %v3418 = vsel %vm316, %v3412, %v3413
        %v3419 = vsel %vm998, %v3404, %v3418
        %v3420 = vsel %vm316, %v3413, %v3414
        %v3421 = vsel %vm998, %v3406, %v3420
        %v3422 = vsel %vm316, %v3414, %v3415
        %v3423 = vsel %vm998, %v3408, %v3422
        %3428 = vst [vmem:[#allocation3 + $0x120] sm:$0xff] %v3417
        %3429 = vst [vmem:[#allocation3 + $0x128] sm:$0xff] %v3419
        %3430 = vst [vmem:[#allocation3 + $0x130] sm:$0xff] %v3421
        %3431 = vst [vmem:[#allocation3 + $0x138] sm:$0xff] %v3423
        %v3432 = vld [vmem:[#allocation4] sm:$0xff]
        %v3433 = vld [vmem:[#allocation4 + $0x8] sm:$0xff]
        %v3434 = vld [vmem:[#allocation4 + $0x10] sm:$0xff]
        %v3435 = vld [vmem:[#allocation4 + $0x18] sm:$0xff]
        %v3436 = vld [vmem:[#allocation4 + $0x20] sm:$0xf]
        %3442 = vrot.lane.b32.xlu0 %v3432, 10
        %v3443 = vpop.permute.xlu0 %3442
        %3444 = vrot.lane.b32.xlu0 %v3433, 10
        %v3445 = vpop.permute.xlu0 %3444
        %3446 = vrot.lane.b32.xlu0 %v3434, 10
        %v3447 = vpop.permute.xlu0 %3446
        %3448 = vrot.lane.b32.xlu0 %v3435, 10
        %v3449 = vpop.permute.xlu0 %3448
        %3450 = vrot.lane.b32.xlu0 %v3436, 10
        %v3451 = vpop.permute.xlu0 %3450
        %v3452 = vrot.slane %v3443, 4
        %v3453 = vrot.slane %v3445, 4
        %v3454 = vrot.slane %v3447, 4
        %v3455 = vrot.slane %v3449, 4
        %v3456 = vrot.slane %v3451, 4
        %v3457 = vsel %vm316, %v3452, %v3453
        %v3458 = vsel %vm1073, %v3443, %v3457
        %v3459 = vsel %vm316, %v3453, %v3454
        %v3460 = vsel %vm1073, %v3445, %v3459
        %v3461 = vsel %vm316, %v3454, %v3455
        %v3462 = vsel %vm1073, %v3447, %v3461
        %v3463 = vsel %vm316, %v3455, %v3456
        %v3464 = vsel %vm1073, %v3449, %v3463
        %3469 = vst [vmem:[#allocation3 + $0x140] sm:$0xff] %v3458
        %3470 = vst [vmem:[#allocation3 + $0x148] sm:$0xff] %v3460
        %3471 = vst [vmem:[#allocation3 + $0x150] sm:$0xff] %v3462
        %3472 = vst [vmem:[#allocation3 + $0x158] sm:$0xff] %v3464
        %v3473 = vld [vmem:[#allocation4] sm:$0xff]
        %v3474 = vld [vmem:[#allocation4 + $0x8] sm:$0xff]
        %v3475 = vld [vmem:[#allocation4 + $0x10] sm:$0xff]
        %v3476 = vld [vmem:[#allocation4 + $0x18] sm:$0xff]
        %v3477 = vld [vmem:[#allocation4 + $0x20] sm:$0xf]
        %3483 = vrot.lane.b32.xlu0 %v3473, 9
        %v3484 = vpop.permute.xlu0 %3483
        %3485 = vrot.lane.b32.xlu0 %v3474, 9
        %v3486 = vpop.permute.xlu0 %3485
        %3487 = vrot.lane.b32.xlu0 %v3475, 9
        %v3488 = vpop.permute.xlu0 %3487
        %3489 = vrot.lane.b32.xlu0 %v3476, 9
        %v3490 = vpop.permute.xlu0 %3489
        %3491 = vrot.lane.b32.xlu0 %v3477, 9
        %v3492 = vpop.permute.xlu0 %3491
        %v3493 = vrot.slane %v3484, 4
        %v3494 = vrot.slane %v3486, 4
        %v3495 = vrot.slane %v3488, 4
        %v3496 = vrot.slane %v3490, 4
        %v3497 = vrot.slane %v3492, 4
        %v3498 = vsel %vm316, %v3493, %v3494
        %v3499 = vsel %vm1149, %v3484, %v3498
        %v3500 = vsel %vm316, %v3494, %v3495
        %v3501 = vsel %vm1149, %v3486, %v3500
        %v3502 = vsel %vm316, %v3495, %v3496
        %v3503 = vsel %vm1149, %v3488, %v3502
        %v3504 = vsel %vm316, %v3496, %v3497
        %v3505 = vsel %vm1149, %v3490, %v3504
        %3510 = vst [vmem:[#allocation3 + $0x160] sm:$0xff] %v3499
        %3511 = vst [vmem:[#allocation3 + $0x168] sm:$0xff] %v3501
        %3512 = vst [vmem:[#allocation3 + $0x170] sm:$0xff] %v3503
        %3513 = vst [vmem:[#allocation3 + $0x178] sm:$0xff] %v3505
        %v3514 = vld [vmem:[#allocation4] sm:$0xff]
        %v3515 = vld [vmem:[#allocation4 + $0x8] sm:$0xff]
        %v3516 = vld [vmem:[#allocation4 + $0x10] sm:$0xff]
        %v3517 = vld [vmem:[#allocation4 + $0x18] sm:$0xff]
        %v3518 = vld [vmem:[#allocation4 + $0x20] sm:$0xf]
        %3524 = vrot.lane.b32.xlu0 %v3514, 1
        %v3525 = vpop.permute.xlu0 %3524
        %3526 = vrot.lane.b32.xlu0 %v3515, 1
        %v3527 = vpop.permute.xlu0 %3526
        %3528 = vrot.lane.b32.xlu0 %v3516, 1
        %v3529 = vpop.permute.xlu0 %3528
        %3530 = vrot.lane.b32.xlu0 %v3517, 1
        %v3531 = vpop.permute.xlu0 %3530
        %3532 = vrot.lane.b32.xlu0 %v3518, 1
        %v3533 = vpop.permute.xlu0 %3532
        %v3534 = vrot.slane %v3525, 4
        %v3535 = vrot.slane %v3527, 4
        %v3536 = vrot.slane %v3529, 4
        %v3537 = vrot.slane %v3531, 4
        %v3538 = vrot.slane %v3533, 4
        %v3539 = vsel %vm316, %v3534, %v3535
        %v3540 = vsel %vm1224, %v3525, %v3539
        %v3541 = vsel %vm316, %v3535, %v3536
        %v3542 = vsel %vm1224, %v3527, %v3541
        %v3543 = vsel %vm316, %v3536, %v3537
        %v3544 = vsel %vm1224, %v3529, %v3543
        %v3545 = vsel %vm316, %v3537, %v3538
        %v3546 = vsel %vm1224, %v3531, %v3545
        %3551 = vst [vmem:[#allocation3 + $0x180] sm:$0xff] %v3540
        %3552 = vst [vmem:[#allocation3 + $0x188] sm:$0xff] %v3542
        %3553 = vst [vmem:[#allocation3 + $0x190] sm:$0xff] %v3544
        %3554 = vst [vmem:[#allocation3 + $0x198] sm:$0xff] %v3546
        %v3555 = vld [vmem:[#allocation4 + $0x4] sm:$0xff]
        %v3556 = vld [vmem:[#allocation4 + $0xc] sm:$0xff]
        %v3557 = vld [vmem:[#allocation4 + $0x14] sm:$0xff]
        %v3558 = vld [vmem:[#allocation4 + $0x1c] sm:$0xff]
        %3559 = vst [vmem:[#allocation3 + $0x1a0] sm:$0xff] %v3555
        %3560 = vst [vmem:[#allocation3 + $0x1a8] sm:$0xff] %v3556
        %3561 = vst [vmem:[#allocation3 + $0x1b0] sm:$0xff] %v3557
        %3562 = vst [vmem:[#allocation3 + $0x1b8] sm:$0xff] %v3558
        %v3563 = vld [vmem:[#allocation4 + $0x4] sm:$0xff]
        %v3564 = vld [vmem:[#allocation4 + $0xc] sm:$0xff]
        %v3565 = vld [vmem:[#allocation4 + $0x14] sm:$0xff]
        %v3566 = vld [vmem:[#allocation4 + $0x1c] sm:$0xff]
        %v3567 = vld [vmem:[#allocation4 + $0x24] sm:$0xf]
        %3573 = vrot.lane.b32.xlu0 %v3563, 127
        %v3574 = vpop.permute.xlu0 %3573
        %3575 = vrot.lane.b32.xlu0 %v3564, 127
        %v3576 = vpop.permute.xlu0 %3575
        %3577 = vrot.lane.b32.xlu0 %v3565, 127
        %v3578 = vpop.permute.xlu0 %3577
        %3579 = vrot.lane.b32.xlu0 %v3566, 127
        %v3580 = vpop.permute.xlu0 %3579
        %3581 = vrot.lane.b32.xlu0 %v3567, 127
        %v3582 = vpop.permute.xlu0 %3581
        %v3583 = vrot.slane %v3574, 4
        %v3584 = vrot.slane %v3576, 4
        %v3585 = vrot.slane %v3578, 4
        %v3586 = vrot.slane %v3580, 4
        %v3587 = vrot.slane %v3582, 4
        %v3588 = vsel %vm316, %v3583, %v3584
        %v3589 = vsel %vm1341, %v3574, %v3588
        %v3590 = vsel %vm316, %v3584, %v3585
        %v3591 = vsel %vm1341, %v3576, %v3590
        %v3592 = vsel %vm316, %v3585, %v3586
        %v3593 = vsel %vm1341, %v3578, %v3592
        %v3594 = vsel %vm316, %v3586, %v3587
        %v3595 = vsel %vm1341, %v3580, %v3594
        %3600 = vst [vmem:[#allocation3 + $0x1c0] sm:$0xff] %v3589
        %3601 = vst [vmem:[#allocation3 + $0x1c8] sm:$0xff] %v3591
        %3602 = vst [vmem:[#allocation3 + $0x1d0] sm:$0xff] %v3593
        %3603 = vst [vmem:[#allocation3 + $0x1d8] sm:$0xff] %v3595
        %v3604 = vld [vmem:[#allocation4 + $0x4] sm:$0xff]
        %v3605 = vld [vmem:[#allocation4 + $0xc] sm:$0xff]
        %v3606 = vld [vmem:[#allocation4 + $0x14] sm:$0xff]
        %v3607 = vld [vmem:[#allocation4 + $0x1c] sm:$0xff]
        %v3608 = vld [vmem:[#allocation4 + $0x24] sm:$0xf]
        %3614 = vrot.lane.b32.xlu0 %v3604, 119
        %v3615 = vpop.permute.xlu0 %3614
        %3616 = vrot.lane.b32.xlu0 %v3605, 119
        %v3617 = vpop.permute.xlu0 %3616
        %3618 = vrot.lane.b32.xlu0 %v3606, 119
        %v3619 = vpop.permute.xlu0 %3618
        %3620 = vrot.lane.b32.xlu0 %v3607, 119
        %v3621 = vpop.permute.xlu0 %3620
        %3622 = vrot.lane.b32.xlu0 %v3608, 119
        %v3623 = vpop.permute.xlu0 %3622
        %v3624 = vrot.slane %v3615, 4
        %v3625 = vrot.slane %v3617, 4
        %v3626 = vrot.slane %v3619, 4
        %v3627 = vrot.slane %v3621, 4
        %v3628 = vrot.slane %v3623, 4
        %v3629 = vsel %vm316, %v3624, %v3625
        %v3630 = vsel %vm1417, %v3615, %v3629
        %v3631 = vsel %vm316, %v3625, %v3626
        %v3632 = vsel %vm1417, %v3617, %v3631
        %v3633 = vsel %vm316, %v3626, %v3627
        %v3634 = vsel %vm1417, %v3619, %v3633
        %v3635 = vsel %vm316, %v3627, %v3628
        %v3636 = vsel %vm1417, %v3621, %v3635
        %3641 = vst [vmem:[#allocation3 + $0x1e0] sm:$0xff] %v3630
        %3642 = vst [vmem:[#allocation3 + $0x1e8] sm:$0xff] %v3632
        %3643 = vst [vmem:[#allocation3 + $0x1f0] sm:$0xff] %v3634
        %3644 = vst [vmem:[#allocation3 + $0x1f8] sm:$0xff] %v3636
        %v3645 = vld [vmem:[#allocation4 + $0x4] sm:$0xff]
        %v3646 = vld [vmem:[#allocation4 + $0xc] sm:$0xff]
        %v3647 = vld [vmem:[#allocation4 + $0x14] sm:$0xff]
        %v3648 = vld [vmem:[#allocation4 + $0x1c] sm:$0xff]
        %v3649 = vld [vmem:[#allocation4 + $0x24] sm:$0xf]
        %3655 = vrot.lane.b32.xlu0 %v3645, 118
        %v3656 = vpop.permute.xlu0 %3655
        %3657 = vrot.lane.b32.xlu0 %v3646, 118
        %v3658 = vpop.permute.xlu0 %3657
        %3659 = vrot.lane.b32.xlu0 %v3647, 118
        %v3660 = vpop.permute.xlu0 %3659
        %3661 = vrot.lane.b32.xlu0 %v3648, 118
        %v3662 = vpop.permute.xlu0 %3661
        %3663 = vrot.lane.b32.xlu0 %v3649, 118
        %v3664 = vpop.permute.xlu0 %3663
        %v3665 = vrot.slane %v3656, 4
        %v3666 = vrot.slane %v3658, 4
        %v3667 = vrot.slane %v3660, 4
        %v3668 = vrot.slane %v3662, 4
        %v3669 = vrot.slane %v3664, 4
        %v3670 = vsel %vm316, %v3665, %v3666
        %v3671 = vsel %vm1492, %v3656, %v3670
        %v3672 = vsel %vm316, %v3666, %v3667
        %v3673 = vsel %vm1492, %v3658, %v3672
        %v3674 = vsel %vm316, %v3667, %v3668
        %v3675 = vsel %vm1492, %v3660, %v3674
        %v3676 = vsel %vm316, %v3668, %v3669
        %v3677 = vsel %vm1492, %v3662, %v3676
        %3682 = vst [vmem:[#allocation3 + $0x200] sm:$0xff] %v3671
        %3683 = vst [vmem:[#allocation3 + $0x208] sm:$0xff] %v3673
        %3684 = vst [vmem:[#allocation3 + $0x210] sm:$0xff] %v3675
        %3685 = vst [vmem:[#allocation3 + $0x218] sm:$0xff] %v3677
        %v3686 = vld [vmem:[#allocation4 + $0x4] sm:$0xff]
        %v3687 = vld [vmem:[#allocation4 + $0xc] sm:$0xff]
        %v3688 = vld [vmem:[#allocation4 + $0x14] sm:$0xff]
        %v3689 = vld [vmem:[#allocation4 + $0x1c] sm:$0xff]
        %v3690 = vld [vmem:[#allocation4 + $0x24] sm:$0xf]
        %3696 = vrot.lane.b32.xlu0 %v3686, 117
        %v3697 = vpop.permute.xlu0 %3696
        %3698 = vrot.lane.b32.xlu0 %v3687, 117
        %v3699 = vpop.permute.xlu0 %3698
        %3700 = vrot.lane.b32.xlu0 %v3688, 117
        %v3701 = vpop.permute.xlu0 %3700
        %3702 = vrot.lane.b32.xlu0 %v3689, 117
        %v3703 = vpop.permute.xlu0 %3702
        %3704 = vrot.lane.b32.xlu0 %v3690, 117
        %v3705 = vpop.permute.xlu0 %3704
        %v3706 = vrot.slane %v3697, 4
        %v3707 = vrot.slane %v3699, 4
        %v3708 = vrot.slane %v3701, 4
        %v3709 = vrot.slane %v3703, 4
        %v3710 = vrot.slane %v3705, 4
        %v3711 = vsel %vm316, %v3706, %v3707
        %v3712 = vsel %vm1568, %v3697, %v3711
        %v3713 = vsel %vm316, %v3707, %v3708
        %v3714 = vsel %vm1568, %v3699, %v3713
        %v3715 = vsel %vm316, %v3708, %v3709
        %v3716 = vsel %vm1568, %v3701, %v3715
        %v3717 = vsel %vm316, %v3709, %v3710
        %v3718 = vsel %vm1568, %v3703, %v3717
        %3723 = vst [vmem:[#allocation3 + $0x220] sm:$0xff] %v3712
        %3724 = vst [vmem:[#allocation3 + $0x228] sm:$0xff] %v3714
        %3725 = vst [vmem:[#allocation3 + $0x230] sm:$0xff] %v3716
        %3726 = vst [vmem:[#allocation3 + $0x238] sm:$0xff] %v3718
        %v3727 = vld [vmem:[#allocation4 + $0x4] sm:$0xff]
        %v3728 = vld [vmem:[#allocation4 + $0xc] sm:$0xff]
        %v3729 = vld [vmem:[#allocation4 + $0x14] sm:$0xff]
        %v3730 = vld [vmem:[#allocation4 + $0x1c] sm:$0xff]
        %v3731 = vld [vmem:[#allocation4 + $0x24] sm:$0xf]
        %3737 = vrot.lane.b32.xlu0 %v3727, 39
        %v3738 = vpop.permute.xlu0 %3737
        %3739 = vrot.lane.b32.xlu0 %v3728, 39
        %v3740 = vpop.permute.xlu0 %3739
        %3741 = vrot.lane.b32.xlu0 %v3729, 39
        %v3742 = vpop.permute.xlu0 %3741
        %3743 = vrot.lane.b32.xlu0 %v3730, 39
        %v3744 = vpop.permute.xlu0 %3743
        %3745 = vrot.lane.b32.xlu0 %v3731, 39
        %v3746 = vpop.permute.xlu0 %3745
        %v3747 = vrot.slane %v3738, 4
        %v3748 = vrot.slane %v3740, 4
        %v3749 = vrot.slane %v3742, 4
        %v3750 = vrot.slane %v3744, 4
        %v3751 = vrot.slane %v3746, 4
        %v3752 = vsel %vm316, %v3747, %v3748
        %v3753 = vsel %vm1643, %v3738, %v3752
        %v3754 = vsel %vm316, %v3748, %v3749
        %v3755 = vsel %vm1643, %v3740, %v3754
        %v3756 = vsel %vm316, %v3749, %v3750
        %v3757 = vsel %vm1643, %v3742, %v3756
        %v3758 = vsel %vm316, %v3750, %v3751
        %v3759 = vsel %vm1643, %v3744, %v3758
        %3764 = vst [vmem:[#allocation3 + $0x240] sm:$0xff] %v3753
        %3765 = vst [vmem:[#allocation3 + $0x248] sm:$0xff] %v3755
        %3766 = vst [vmem:[#allocation3 + $0x250] sm:$0xff] %v3757
        %3767 = vst [vmem:[#allocation3 + $0x258] sm:$0xff] %v3759
        %v3768 = vld [vmem:[#allocation4 + $0x4] sm:$0xff]
        %v3769 = vld [vmem:[#allocation4 + $0xc] sm:$0xff]
        %v3770 = vld [vmem:[#allocation4 + $0x14] sm:$0xff]
        %v3771 = vld [vmem:[#allocation4 + $0x1c] sm:$0xff]
        %v3772 = vld [vmem:[#allocation4 + $0x24] sm:$0xf]
        %3778 = vrot.lane.b32.xlu0 %v3768, 38
        %v3779 = vpop.permute.xlu0 %3778
        %3780 = vrot.lane.b32.xlu0 %v3769, 38
        %v3781 = vpop.permute.xlu0 %3780
        %3782 = vrot.lane.b32.xlu0 %v3770, 38
        %v3783 = vpop.permute.xlu0 %3782
        %3784 = vrot.lane.b32.xlu0 %v3771, 38
        %v3785 = vpop.permute.xlu0 %3784
        %3786 = vrot.lane.b32.xlu0 %v3772, 38
        %v3787 = vpop.permute.xlu0 %3786
        %v3788 = vrot.slane %v3779, 4
        %v3789 = vrot.slane %v3781, 4
        %v3790 = vrot.slane %v3783, 4
        %v3791 = vrot.slane %v3785, 4
        %v3792 = vrot.slane %v3787, 4
        %v3793 = vsel %vm316, %v3788, %v3789
        %v3794 = vsel %vm1719, %v3779, %v3793
        %v3795 = vsel %vm316, %v3789, %v3790
        %v3796 = vsel %vm1719, %v3781, %v3795
        %v3797 = vsel %vm316, %v3790, %v3791
        %v3798 = vsel %vm1719, %v3783, %v3797
        %v3799 = vsel %vm316, %v3791, %v3792
        %v3800 = vsel %vm1719, %v3785, %v3799
        %3805 = vst [vmem:[#allocation3 + $0x260] sm:$0xff] %v3794
        %3806 = vst [vmem:[#allocation3 + $0x268] sm:$0xff] %v3796
        %3807 = vst [vmem:[#allocation3 + $0x270] sm:$0xff] %v3798
        %3808 = vst [vmem:[#allocation3 + $0x278] sm:$0xff] %v3800
        %v3809 = vld [vmem:[#allocation4 + $0x4] sm:$0xff]
        %v3810 = vld [vmem:[#allocation4 + $0xc] sm:$0xff]
        %v3811 = vld [vmem:[#allocation4 + $0x14] sm:$0xff]
        %v3812 = vld [vmem:[#allocation4 + $0x1c] sm:$0xff]
        %v3813 = vld [vmem:[#allocation4 + $0x24] sm:$0xf]
        %3819 = vrot.lane.b32.xlu0 %v3809, 37
        %v3820 = vpop.permute.xlu0 %3819
        %3821 = vrot.lane.b32.xlu0 %v3810, 37
        %v3822 = vpop.permute.xlu0 %3821
        %3823 = vrot.lane.b32.xlu0 %v3811, 37
        %v3824 = vpop.permute.xlu0 %3823
        %3825 = vrot.lane.b32.xlu0 %v3812, 37
        %v3826 = vpop.permute.xlu0 %3825
        %3827 = vrot.lane.b32.xlu0 %v3813, 37
        %v3828 = vpop.permute.xlu0 %3827
        %v3829 = vrot.slane %v3820, 4
        %v3830 = vrot.slane %v3822, 4
        %v3831 = vrot.slane %v3824, 4
        %v3832 = vrot.slane %v3826, 4
        %v3833 = vrot.slane %v3828, 4
        %v3834 = vsel %vm316, %v3829, %v3830
        %v3835 = vsel %vm1794, %v3820, %v3834
        %v3836 = vsel %vm316, %v3830, %v3831
        %v3837 = vsel %vm1794, %v3822, %v3836
        %v3838 = vsel %vm316, %v3831, %v3832
        %v3839 = vsel %vm1794, %v3824, %v3838
        %v3840 = vsel %vm316, %v3832, %v3833
        %v3841 = vsel %vm1794, %v3826, %v3840
        %3846 = vst [vmem:[#allocation3 + $0x280] sm:$0xff] %v3835
        %3847 = vst [vmem:[#allocation3 + $0x288] sm:$0xff] %v3837
        %3848 = vst [vmem:[#allocation3 + $0x290] sm:$0xff] %v3839
        %3849 = vst [vmem:[#allocation3 + $0x298] sm:$0xff] %v3841
        %v3850 = vld [vmem:[#allocation4 + $0x4] sm:$0xff]
        %v3851 = vld [vmem:[#allocation4 + $0xc] sm:$0xff]
        %v3852 = vld [vmem:[#allocation4 + $0x14] sm:$0xff]
        %v3853 = vld [vmem:[#allocation4 + $0x1c] sm:$0xff]
        %v3854 = vld [vmem:[#allocation4 + $0x24] sm:$0xf]
        %3860 = vrot.lane.b32.xlu0 %v3850, 29
        %v3861 = vpop.permute.xlu0 %3860
        %3862 = vrot.lane.b32.xlu0 %v3851, 29
        %v3863 = vpop.permute.xlu0 %3862
        %3864 = vrot.lane.b32.xlu0 %v3852, 29
        %v3865 = vpop.permute.xlu0 %3864
        %3866 = vrot.lane.b32.xlu0 %v3853, 29
        %v3867 = vpop.permute.xlu0 %3866
        %3868 = vrot.lane.b32.xlu0 %v3854, 29
        %v3869 = vpop.permute.xlu0 %3868
        %v3870 = vrot.slane %v3861, 4
        %v3871 = vrot.slane %v3863, 4
        %v3872 = vrot.slane %v3865, 4
        %v3873 = vrot.slane %v3867, 4
        %v3874 = vrot.slane %v3869, 4
        %v3875 = vsel %vm316, %v3870, %v3871
        %v3876 = vsel %vm1870, %v3861, %v3875
        %v3877 = vsel %vm316, %v3871, %v3872
        %v3878 = vsel %vm1870, %v3863, %v3877
        %v3879 = vsel %vm316, %v3872, %v3873
        %v3880 = vsel %vm1870, %v3865, %v3879
        %v3881 = vsel %vm316, %v3873, %v3874
        %v3882 = vsel %vm1870, %v3867, %v3881
        %3887 = vst [vmem:[#allocation3 + $0x2a0] sm:$0xff] %v3876
        %3888 = vst [vmem:[#allocation3 + $0x2a8] sm:$0xff] %v3878
        %3889 = vst [vmem:[#allocation3 + $0x2b0] sm:$0xff] %v3880
        %3890 = vst [vmem:[#allocation3 + $0x2b8] sm:$0xff] %v3882
        %v3891 = vld [vmem:[#allocation4 + $0x4] sm:$0xff]
        %v3892 = vld [vmem:[#allocation4 + $0xc] sm:$0xff]
        %v3893 = vld [vmem:[#allocation4 + $0x14] sm:$0xff]
        %v3894 = vld [vmem:[#allocation4 + $0x1c] sm:$0xff]
        %v3895 = vld [vmem:[#allocation4 + $0x24] sm:$0xf]
        %3901 = vrot.lane.b32.xlu0 %v3891, 28
        %v3902 = vpop.permute.xlu0 %3901
        %3903 = vrot.lane.b32.xlu0 %v3892, 28
        %v3904 = vpop.permute.xlu0 %3903
        %3905 = vrot.lane.b32.xlu0 %v3893, 28
        %v3906 = vpop.permute.xlu0 %3905
        %3907 = vrot.lane.b32.xlu0 %v3894, 28
        %v3908 = vpop.permute.xlu0 %3907
        %3909 = vrot.lane.b32.xlu0 %v3895, 28
        %v3910 = vpop.permute.xlu0 %3909
        %v3911 = vrot.slane %v3902, 4
        %v3912 = vrot.slane %v3904, 4
        %v3913 = vrot.slane %v3906, 4
        %v3914 = vrot.slane %v3908, 4
        %v3915 = vrot.slane %v3910, 4
        %v3916 = vsel %vm316, %v3911, %v3912
        %v3917 = vsel %vm1945, %v3902, %v3916
        %v3918 = vsel %vm316, %v3912, %v3913
        %v3919 = vsel %vm1945, %v3904, %v3918
        %v3920 = vsel %vm316, %v3913, %v3914
        %v3921 = vsel %vm1945, %v3906, %v3920
        %v3922 = vsel %vm316, %v3914, %v3915
        %v3923 = vsel %vm1945, %v3908, %v3922
        %3928 = vst [vmem:[#allocation3 + $0x2c0] sm:$0xff] %v3917
        %3929 = vst [vmem:[#allocation3 + $0x2c8] sm:$0xff] %v3919
        %3930 = vst [vmem:[#allocation3 + $0x2d0] sm:$0xff] %v3921
        %3931 = vst [vmem:[#allocation3 + $0x2d8] sm:$0xff] %v3923
        %v3932 = vld [vmem:[#allocation4 + $0x4] sm:$0xff]
        %v3933 = vld [vmem:[#allocation4 + $0xc] sm:$0xff]
        %v3934 = vld [vmem:[#allocation4 + $0x14] sm:$0xff]
        %v3935 = vld [vmem:[#allocation4 + $0x1c] sm:$0xff]
        %v3936 = vld [vmem:[#allocation4 + $0x24] sm:$0xf]
        %3942 = vrot.lane.b32.xlu0 %v3932, 27
        %v3943 = vpop.permute.xlu0 %3942
        %3944 = vrot.lane.b32.xlu0 %v3933, 27
        %v3945 = vpop.permute.xlu0 %3944
        %3946 = vrot.lane.b32.xlu0 %v3934, 27
        %v3947 = vpop.permute.xlu0 %3946
        %3948 = vrot.lane.b32.xlu0 %v3935, 27
        %v3949 = vpop.permute.xlu0 %3948
        %3950 = vrot.lane.b32.xlu0 %v3936, 27
        %v3951 = vpop.permute.xlu0 %3950
        %v3952 = vrot.slane %v3943, 4
        %v3953 = vrot.slane %v3945, 4
        %v3954 = vrot.slane %v3947, 4
        %v3955 = vrot.slane %v3949, 4
        %v3956 = vrot.slane %v3951, 4
        %v3957 = vsel %vm316, %v3952, %v3953
        %v3958 = vsel %vm2021, %v3943, %v3957
        %v3959 = vsel %vm316, %v3953, %v3954
        %v3960 = vsel %vm2021, %v3945, %v3959
        %v3961 = vsel %vm316, %v3954, %v3955
        %v3962 = vsel %vm2021, %v3947, %v3961
        %v3963 = vsel %vm316, %v3955, %v3956
        %v3964 = vsel %vm2021, %v3949, %v3963
        %3969 = vst [vmem:[#allocation3 + $0x2e0] sm:$0xff] %v3958
        %3970 = vst [vmem:[#allocation3 + $0x2e8] sm:$0xff] %v3960
        %3971 = vst [vmem:[#allocation3 + $0x2f0] sm:$0xff] %v3962
        %3972 = vst [vmem:[#allocation3 + $0x2f8] sm:$0xff] %v3964
        %v3973 = vld [vmem:[#allocation4 + $0x4] sm:$0xff]
        %v3974 = vld [vmem:[#allocation4 + $0xc] sm:$0xff]
        %v3975 = vld [vmem:[#allocation4 + $0x14] sm:$0xff]
        %v3976 = vld [vmem:[#allocation4 + $0x1c] sm:$0xff]
        %v3977 = vld [vmem:[#allocation4 + $0x24] sm:$0xf]
        %3983 = vrot.lane.b32.xlu0 %v3973, 19
        %v3984 = vpop.permute.xlu0 %3983
        %3985 = vrot.lane.b32.xlu0 %v3974, 19
        %v3986 = vpop.permute.xlu0 %3985
        %3987 = vrot.lane.b32.xlu0 %v3975, 19
        %v3988 = vpop.permute.xlu0 %3987
        %3989 = vrot.lane.b32.xlu0 %v3976, 19
        %v3990 = vpop.permute.xlu0 %3989
        %3991 = vrot.lane.b32.xlu0 %v3977, 19
        %v3992 = vpop.permute.xlu0 %3991
        %v3993 = vrot.slane %v3984, 4
        %v3994 = vrot.slane %v3986, 4
        %v3995 = vrot.slane %v3988, 4
        %v3996 = vrot.slane %v3990, 4
        %v3997 = vrot.slane %v3992, 4
        %v3998 = vsel %vm316, %v3993, %v3994
        %v3999 = vsel %vm2096, %v3984, %v3998
        %v4000 = vsel %vm316, %v3994, %v3995
        %v4001 = vsel %vm2096, %v3986, %v4000
        %v4002 = vsel %vm316, %v3995, %v3996
        %v4003 = vsel %vm2096, %v3988, %v4002
        %v4004 = vsel %vm316, %v3996, %v3997
        %v4005 = vsel %vm2096, %v3990, %v4004
        %4010 = vst [vmem:[#allocation3 + $0x300] sm:$0xff] %v3999
        %4011 = vst [vmem:[#allocation3 + $0x308] sm:$0xff] %v4001
        %4012 = vst [vmem:[#allocation3 + $0x310] sm:$0xff] %v4003
        %4013 = vst [vmem:[#allocation3 + $0x318] sm:$0xff] %v4005
        %v4014 = vld [vmem:[#allocation4 + $0x4] sm:$0xff]
        %v4015 = vld [vmem:[#allocation4 + $0xc] sm:$0xff]
        %v4016 = vld [vmem:[#allocation4 + $0x14] sm:$0xff]
        %v4017 = vld [vmem:[#allocation4 + $0x1c] sm:$0xff]
        %v4018 = vld [vmem:[#allocation4 + $0x24] sm:$0xf]
        %4024 = vrot.lane.b32.xlu0 %v4014, 18
        %v4025 = vpop.permute.xlu0 %4024
        %4026 = vrot.lane.b32.xlu0 %v4015, 18
        %v4027 = vpop.permute.xlu0 %4026
        %4028 = vrot.lane.b32.xlu0 %v4016, 18
        %v4029 = vpop.permute.xlu0 %4028
        %4030 = vrot.lane.b32.xlu0 %v4017, 18
        %v4031 = vpop.permute.xlu0 %4030
        %4032 = vrot.lane.b32.xlu0 %v4018, 18
        %v4033 = vpop.permute.xlu0 %4032
        %v4034 = vrot.slane %v4025, 4
        %v4035 = vrot.slane %v4027, 4
        %v4036 = vrot.slane %v4029, 4
        %v4037 = vrot.slane %v4031, 4
        %v4038 = vrot.slane %v4033, 4
        %v4039 = vsel %vm316, %v4034, %v4035
        %v4040 = vsel %vm2172, %v4025, %v4039
        %v4041 = vsel %vm316, %v4035, %v4036
        %v4042 = vsel %vm2172, %v4027, %v4041
        %v4043 = vsel %vm316, %v4036, %v4037
        %v4044 = vsel %vm2172, %v4029, %v4043
        %v4045 = vsel %vm316, %v4037, %v4038
        %v4046 = vsel %vm2172, %v4031, %v4045
        %4051 = vst [vmem:[#allocation3 + $0x320] sm:$0xff] %v4040
        %4052 = vst [vmem:[#allocation3 + $0x328] sm:$0xff] %v4042
        %4053 = vst [vmem:[#allocation3 + $0x330] sm:$0xff] %v4044
        %4054 = vst [vmem:[#allocation3 + $0x338] sm:$0xff] %v4046
        %v4055 = vld [vmem:[#allocation4 + $0x4] sm:$0xff]
        %v4056 = vld [vmem:[#allocation4 + $0xc] sm:$0xff]
        %v4057 = vld [vmem:[#allocation4 + $0x14] sm:$0xff]
        %v4058 = vld [vmem:[#allocation4 + $0x1c] sm:$0xff]
        %v4059 = vld [vmem:[#allocation4 + $0x24] sm:$0xf]
        %4065 = vrot.lane.b32.xlu0 %v4055, 17
        %v4066 = vpop.permute.xlu0 %4065
        %4067 = vrot.lane.b32.xlu0 %v4056, 17
        %v4068 = vpop.permute.xlu0 %4067
        %4069 = vrot.lane.b32.xlu0 %v4057, 17
        %v4070 = vpop.permute.xlu0 %4069
        %4071 = vrot.lane.b32.xlu0 %v4058, 17
        %v4072 = vpop.permute.xlu0 %4071
        %4073 = vrot.lane.b32.xlu0 %v4059, 17
        %v4074 = vpop.permute.xlu0 %4073
        %v4075 = vrot.slane %v4066, 4
        %v4076 = vrot.slane %v4068, 4
        %v4077 = vrot.slane %v4070, 4
        %v4078 = vrot.slane %v4072, 4
        %v4079 = vrot.slane %v4074, 4
        %v4080 = vsel %vm316, %v4075, %v4076
        %v4081 = vsel %vm2247, %v4066, %v4080
        %v4082 = vsel %vm316, %v4076, %v4077
        %v4083 = vsel %vm2247, %v4068, %v4082
        %v4084 = vsel %vm316, %v4077, %v4078
        %v4085 = vsel %vm2247, %v4070, %v4084
        %v4086 = vsel %vm316, %v4078, %v4079
        %v4087 = vsel %vm2247, %v4072, %v4086
        %4092 = vst [vmem:[#allocation3 + $0x340] sm:$0xff] %v4081
        %4093 = vst [vmem:[#allocation3 + $0x348] sm:$0xff] %v4083
        %4094 = vst [vmem:[#allocation3 + $0x350] sm:$0xff] %v4085
        %4095 = vst [vmem:[#allocation3 + $0x358] sm:$0xff] %v4087
        %v4096 = vld [vmem:[#allocation11] sm:$0xff]
        %v4097 = vld [vmem:[#allocation3] sm:$0xff]
        %v4098 = vld [vmem:[#allocation3 + $0x8] sm:$0xff]
        %v4099 = vld [vmem:[#allocation3 + $0x10] sm:$0xff]
        %v4100 = vld [vmem:[#allocation3 + $0x18] sm:$0xff]
        %v4101 = vld [vmem:[#allocation3 + $0x20] sm:$0xff]
        %v4102 = vld [vmem:[#allocation3 + $0x28] sm:$0xff]
        %v4103 = vld [vmem:[#allocation3 + $0x30] sm:$0xff]
        %v4104 = vld [vmem:[#allocation3 + $0x38] sm:$0xff]
        %v4105 = vld [vmem:[#allocation3 + $0x40] sm:$0xff]
        %v4106 = vld [vmem:[#allocation3 + $0x48] sm:$0xff]
        %v4107 = vld [vmem:[#allocation3 + $0x50] sm:$0xff]
        %v4108 = vld [vmem:[#allocation3 + $0x58] sm:$0xff]
        %v4109 = vld [vmem:[#allocation3 + $0x60] sm:$0xff]
        %v4110 = vld [vmem:[#allocation3 + $0x68] sm:$0xff]
        %v4111 = vld [vmem:[#allocation3 + $0x70] sm:$0xff]
        %v4112 = vld [vmem:[#allocation3 + $0x78] sm:$0xff]
        %v4113 = vld [vmem:[#allocation3 + $0x80] sm:$0xff]
        %v4114 = vld [vmem:[#allocation3 + $0x88] sm:$0xff]
        %v4115 = vld [vmem:[#allocation3 + $0x90] sm:$0xff]
        %v4116 = vld [vmem:[#allocation3 + $0x98] sm:$0xff]
        %v4117 = vld [vmem:[#allocation3 + $0xa0] sm:$0xff]
        %v4118 = vld [vmem:[#allocation3 + $0xa8] sm:$0xff]
        %v4119 = vld [vmem:[#allocation3 + $0xb0] sm:$0xff]
        %v4120 = vld [vmem:[#allocation3 + $0xb8] sm:$0xff]
        %v4121 = vld [vmem:[#allocation3 + $0xc0] sm:$0xff]
        %v4122 = vld [vmem:[#allocation3 + $0xc8] sm:$0xff]
        %v4123 = vld [vmem:[#allocation3 + $0xd0] sm:$0xff]
        %v4124 = vld [vmem:[#allocation3 + $0xd8] sm:$0xff]
        %v4125 = vld [vmem:[#allocation3 + $0xe0] sm:$0xff]
        %v4126 = vld [vmem:[#allocation3 + $0xe8] sm:$0xff]
        %v4127 = vld [vmem:[#allocation3 + $0xf0] sm:$0xff]
        %v4128 = vld [vmem:[#allocation3 + $0xf8] sm:$0xff]
        %v4129 = vld [vmem:[#allocation3 + $0x100] sm:$0xff]
        %v4130 = vld [vmem:[#allocation3 + $0x108] sm:$0xff]
        %v4131 = vld [vmem:[#allocation3 + $0x110] sm:$0xff]
        %v4132 = vld [vmem:[#allocation3 + $0x118] sm:$0xff]
        %v4133 = vld [vmem:[#allocation3 + $0x120] sm:$0xff]
        %v4134 = vld [vmem:[#allocation3 + $0x128] sm:$0xff]
        %v4135 = vld [vmem:[#allocation3 + $0x130] sm:$0xff]
        %v4136 = vld [vmem:[#allocation3 + $0x138] sm:$0xff]
        %v4137 = vld [vmem:[#allocation3 + $0x140] sm:$0xff]
        %v4138 = vld [vmem:[#allocation3 + $0x148] sm:$0xff]
        %v4139 = vld [vmem:[#allocation3 + $0x150] sm:$0xff]
        %v4140 = vld [vmem:[#allocation3 + $0x158] sm:$0xff]
        %v4141 = vld [vmem:[#allocation3 + $0x160] sm:$0xff]
        %v4142 = vld [vmem:[#allocation3 + $0x168] sm:$0xff]
        %v4143 = vld [vmem:[#allocation3 + $0x170] sm:$0xff]
        %v4144 = vld [vmem:[#allocation3 + $0x178] sm:$0xff]
        %v4145 = vld [vmem:[#allocation3 + $0x180] sm:$0xff]
        %v4146 = vld [vmem:[#allocation3 + $0x188] sm:$0xff]
        %v4147 = vld [vmem:[#allocation3 + $0x190] sm:$0xff]
        %v4148 = vld [vmem:[#allocation3 + $0x198] sm:$0xff]
        %v4149 = vld [vmem:[#allocation3 + $0x1a0] sm:$0xff]
        %v4150 = vld [vmem:[#allocation3 + $0x1a8] sm:$0xff]
        %v4151 = vld [vmem:[#allocation3 + $0x1b0] sm:$0xff]
        %v4152 = vld [vmem:[#allocation3 + $0x1b8] sm:$0xff]
        %v4153 = vld [vmem:[#allocation3 + $0x1c0] sm:$0xff]
        %v4154 = vld [vmem:[#allocation3 + $0x1c8] sm:$0xff]
        %v4155 = vld [vmem:[#allocation3 + $0x1d0] sm:$0xff]
        %v4156 = vld [vmem:[#allocation3 + $0x1d8] sm:$0xff]
        %v4157 = vld [vmem:[#allocation3 + $0x1e0] sm:$0xff]
        %v4158 = vld [vmem:[#allocation3 + $0x1e8] sm:$0xff]
        %v4159 = vld [vmem:[#allocation3 + $0x1f0] sm:$0xff]
        %v4160 = vld [vmem:[#allocation3 + $0x1f8] sm:$0xff]
        %v4161 = vld [vmem:[#allocation3 + $0x200] sm:$0xff]
        %v4162 = vld [vmem:[#allocation3 + $0x208] sm:$0xff]
        %v4163 = vld [vmem:[#allocation3 + $0x210] sm:$0xff]
        %v4164 = vld [vmem:[#allocation3 + $0x218] sm:$0xff]
        %v4165 = vld [vmem:[#allocation3 + $0x220] sm:$0xff]
        %v4166 = vld [vmem:[#allocation3 + $0x228] sm:$0xff]
        %v4167 = vld [vmem:[#allocation3 + $0x230] sm:$0xff]
        %v4168 = vld [vmem:[#allocation3 + $0x238] sm:$0xff]
        %v4169 = vld [vmem:[#allocation3 + $0x240] sm:$0xff]
        %v4170 = vld [vmem:[#allocation3 + $0x248] sm:$0xff]
        %v4171 = vld [vmem:[#allocation3 + $0x250] sm:$0xff]
        %v4172 = vld [vmem:[#allocation3 + $0x258] sm:$0xff]
        %v4173 = vld [vmem:[#allocation3 + $0x260] sm:$0xff]
        %v4174 = vld [vmem:[#allocation3 + $0x268] sm:$0xff]
        %v4175 = vld [vmem:[#allocation3 + $0x270] sm:$0xff]
        %v4176 = vld [vmem:[#allocation3 + $0x278] sm:$0xff]
        %v4177 = vld [vmem:[#allocation3 + $0x280] sm:$0xff]
        %v4178 = vld [vmem:[#allocation3 + $0x288] sm:$0xff]
        %v4179 = vld [vmem:[#allocation3 + $0x290] sm:$0xff]
        %v4180 = vld [vmem:[#allocation3 + $0x298] sm:$0xff]
        %v4181 = vld [vmem:[#allocation3 + $0x2a0] sm:$0xff]
        %v4182 = vld [vmem:[#allocation3 + $0x2a8] sm:$0xff]
        %v4183 = vld [vmem:[#allocation3 + $0x2b0] sm:$0xff]
        %v4184 = vld [vmem:[#allocation3 + $0x2b8] sm:$0xff]
        %v4185 = vld [vmem:[#allocation3 + $0x2c0] sm:$0xff]
        %v4186 = vld [vmem:[#allocation3 + $0x2c8] sm:$0xff]
        %v4187 = vld [vmem:[#allocation3 + $0x2d0] sm:$0xff]
        %v4188 = vld [vmem:[#allocation3 + $0x2d8] sm:$0xff]
        %v4189 = vld [vmem:[#allocation3 + $0x2e0] sm:$0xff]
        %v4190 = vld [vmem:[#allocation3 + $0x2e8] sm:$0xff]
        %v4191 = vld [vmem:[#allocation3 + $0x2f0] sm:$0xff]
        %v4192 = vld [vmem:[#allocation3 + $0x2f8] sm:$0xff]
        %v4193 = vld [vmem:[#allocation3 + $0x300] sm:$0xff]
        %v4194 = vld [vmem:[#allocation3 + $0x308] sm:$0xff]
        %v4195 = vld [vmem:[#allocation3 + $0x310] sm:$0xff]
        %v4196 = vld [vmem:[#allocation3 + $0x318] sm:$0xff]
        %v4197 = vld [vmem:[#allocation3 + $0x320] sm:$0xff]
        %v4198 = vld [vmem:[#allocation3 + $0x328] sm:$0xff]
        %v4199 = vld [vmem:[#allocation3 + $0x330] sm:$0xff]
        %v4200 = vld [vmem:[#allocation3 + $0x338] sm:$0xff]
        %v4201 = vld [vmem:[#allocation3 + $0x340] sm:$0xff]
        %v4202 = vld [vmem:[#allocation3 + $0x348] sm:$0xff]
        %v4203 = vld [vmem:[#allocation3 + $0x350] sm:$0xff]
        %v4204 = vld [vmem:[#allocation3 + $0x358] sm:$0xff]
        %v4206 = vunpack.c.l.b16 %v4096
        %v4207 = vunpack.c.h.b16 %v4096
        %v4208 = vpack.c.b16 %v4206, %v4206
        %v4209 = vpack.c.b16 %v4207, %v4207
        %v4319 = vunpack.c.l.b16 %v4097
        %v4320 = vunpack.c.h.b16 %v4097
        %v4321 = vunpack.c.l.b16 %v4098
        %v4322 = vunpack.c.h.b16 %v4098
        %v4323 = vunpack.c.l.b16 %v4099
        %v4324 = vunpack.c.h.b16 %v4099
        %v4325 = vunpack.c.l.b16 %v4100
        %v4326 = vunpack.c.h.b16 %v4100
        %v4327 = vunpack.c.l.b16 %v4101
        %v4328 = vunpack.c.h.b16 %v4101
        %v4329 = vunpack.c.l.b16 %v4102
        %v4330 = vunpack.c.h.b16 %v4102
        %v4331 = vunpack.c.l.b16 %v4103
        %v4332 = vunpack.c.h.b16 %v4103
        %v4333 = vunpack.c.l.b16 %v4104
        %v4334 = vunpack.c.h.b16 %v4104
        %v4335 = vunpack.c.l.b16 %v4105
        %v4336 = vunpack.c.h.b16 %v4105
        %v4337 = vunpack.c.l.b16 %v4106
        %v4338 = vunpack.c.h.b16 %v4106
        %v4339 = vunpack.c.l.b16 %v4107
        %v4340 = vunpack.c.h.b16 %v4107
        %v4341 = vunpack.c.l.b16 %v4108
        %v4342 = vunpack.c.h.b16 %v4108
        %v4343 = vunpack.c.l.b16 %v4109
        %v4344 = vunpack.c.h.b16 %v4109
        %v4345 = vunpack.c.l.b16 %v4110
        %v4346 = vunpack.c.h.b16 %v4110
        %v4347 = vunpack.c.l.b16 %v4111
        %v4348 = vunpack.c.h.b16 %v4111
        %v4349 = vunpack.c.l.b16 %v4112
        %v4350 = vunpack.c.h.b16 %v4112
        %v4351 = vunpack.c.l.b16 %v4113
        %v4352 = vunpack.c.h.b16 %v4113
        %v4353 = vunpack.c.l.b16 %v4114
        %v4354 = vunpack.c.h.b16 %v4114
        %v4355 = vunpack.c.l.b16 %v4115
        %v4356 = vunpack.c.h.b16 %v4115
        %v4357 = vunpack.c.l.b16 %v4116
        %v4358 = vunpack.c.h.b16 %v4116
        %v4359 = vunpack.c.l.b16 %v4117
        %v4360 = vunpack.c.h.b16 %v4117
        %v4361 = vunpack.c.l.b16 %v4118
        %v4362 = vunpack.c.h.b16 %v4118
        %v4363 = vunpack.c.l.b16 %v4119
        %v4364 = vunpack.c.h.b16 %v4119
        %v4365 = vunpack.c.l.b16 %v4120
        %v4366 = vunpack.c.h.b16 %v4120
        %v4367 = vunpack.c.l.b16 %v4121
        %v4368 = vunpack.c.h.b16 %v4121
        %v4369 = vunpack.c.l.b16 %v4122
        %v4370 = vunpack.c.h.b16 %v4122
        %v4371 = vunpack.c.l.b16 %v4123
        %v4372 = vunpack.c.h.b16 %v4123
        %v4373 = vunpack.c.l.b16 %v4124
        %v4374 = vunpack.c.h.b16 %v4124
        %v4375 = vunpack.c.l.b16 %v4125
        %v4376 = vunpack.c.h.b16 %v4125
        %v4377 = vunpack.c.l.b16 %v4126
        %v4378 = vunpack.c.h.b16 %v4126
        %v4379 = vunpack.c.l.b16 %v4127
        %v4380 = vunpack.c.h.b16 %v4127
        %v4381 = vunpack.c.l.b16 %v4128
        %v4382 = vunpack.c.h.b16 %v4128
        %v4383 = vunpack.c.l.b16 %v4129
        %v4384 = vunpack.c.h.b16 %v4129
        %v4385 = vunpack.c.l.b16 %v4130
        %v4386 = vunpack.c.h.b16 %v4130
        %v4387 = vunpack.c.l.b16 %v4131
        %v4388 = vunpack.c.h.b16 %v4131
        %v4389 = vunpack.c.l.b16 %v4132
        %v4390 = vunpack.c.h.b16 %v4132
        %v4391 = vunpack.c.l.b16 %v4133
        %v4392 = vunpack.c.h.b16 %v4133
        %v4393 = vunpack.c.l.b16 %v4134
        %v4394 = vunpack.c.h.b16 %v4134
        %v4395 = vunpack.c.l.b16 %v4135
        %v4396 = vunpack.c.h.b16 %v4135
        %v4397 = vunpack.c.l.b16 %v4136
        %v4398 = vunpack.c.h.b16 %v4136
        %v4399 = vunpack.c.l.b16 %v4137
        %v4400 = vunpack.c.h.b16 %v4137
        %v4401 = vunpack.c.l.b16 %v4138
        %v4402 = vunpack.c.h.b16 %v4138
        %v4403 = vunpack.c.l.b16 %v4139
        %v4404 = vunpack.c.h.b16 %v4139
        %v4405 = vunpack.c.l.b16 %v4140
        %v4406 = vunpack.c.h.b16 %v4140
        %v4407 = vunpack.c.l.b16 %v4141
        %v4408 = vunpack.c.h.b16 %v4141
        %v4409 = vunpack.c.l.b16 %v4142
        %v4410 = vunpack.c.h.b16 %v4142
        %v4411 = vunpack.c.l.b16 %v4143
        %v4412 = vunpack.c.h.b16 %v4143
        %v4413 = vunpack.c.l.b16 %v4144
        %v4414 = vunpack.c.h.b16 %v4144
        %v4415 = vunpack.c.l.b16 %v4145
        %v4416 = vunpack.c.h.b16 %v4145
        %v4417 = vunpack.c.l.b16 %v4146
        %v4418 = vunpack.c.h.b16 %v4146
        %v4419 = vunpack.c.l.b16 %v4147
        %v4420 = vunpack.c.h.b16 %v4147
        %v4421 = vunpack.c.l.b16 %v4148
        %v4422 = vunpack.c.h.b16 %v4148
        %v4423 = vunpack.c.l.b16 %v4149
        %v4424 = vunpack.c.h.b16 %v4149
        %v4425 = vunpack.c.l.b16 %v4150
        %v4426 = vunpack.c.h.b16 %v4150
        %v4427 = vunpack.c.l.b16 %v4151
        %v4428 = vunpack.c.h.b16 %v4151
        %v4429 = vunpack.c.l.b16 %v4152
        %v4430 = vunpack.c.h.b16 %v4152
        %v4431 = vunpack.c.l.b16 %v4153
        %v4432 = vunpack.c.h.b16 %v4153
        %v4433 = vunpack.c.l.b16 %v4154
        %v4434 = vunpack.c.h.b16 %v4154
        %v4435 = vunpack.c.l.b16 %v4155
        %v4436 = vunpack.c.h.b16 %v4155
        %v4437 = vunpack.c.l.b16 %v4156
        %v4438 = vunpack.c.h.b16 %v4156
        %v4439 = vunpack.c.l.b16 %v4157
        %v4440 = vunpack.c.h.b16 %v4157
        %v4441 = vunpack.c.l.b16 %v4158
        %v4442 = vunpack.c.h.b16 %v4158
        %v4443 = vunpack.c.l.b16 %v4159
        %v4444 = vunpack.c.h.b16 %v4159
        %v4445 = vunpack.c.l.b16 %v4160
        %v4446 = vunpack.c.h.b16 %v4160
        %v4447 = vunpack.c.l.b16 %v4161
        %v4448 = vunpack.c.h.b16 %v4161
        %v4449 = vunpack.c.l.b16 %v4162
        %v4450 = vunpack.c.h.b16 %v4162
        %v4451 = vunpack.c.l.b16 %v4163
        %v4452 = vunpack.c.h.b16 %v4163
        %v4453 = vunpack.c.l.b16 %v4164
        %v4454 = vunpack.c.h.b16 %v4164
        %v4455 = vunpack.c.l.b16 %v4165
        %v4456 = vunpack.c.h.b16 %v4165
        %v4457 = vunpack.c.l.b16 %v4166
        %v4458 = vunpack.c.h.b16 %v4166
        %v4459 = vunpack.c.l.b16 %v4167
        %v4460 = vunpack.c.h.b16 %v4167
        %v4461 = vunpack.c.l.b16 %v4168
        %v4462 = vunpack.c.h.b16 %v4168
        %v4463 = vunpack.c.l.b16 %v4169
        %v4464 = vunpack.c.h.b16 %v4169
        %v4465 = vunpack.c.l.b16 %v4170
        %v4466 = vunpack.c.h.b16 %v4170
        %v4467 = vunpack.c.l.b16 %v4171
        %v4468 = vunpack.c.h.b16 %v4171
        %v4469 = vunpack.c.l.b16 %v4172
        %v4470 = vunpack.c.h.b16 %v4172
        %v4471 = vunpack.c.l.b16 %v4173
        %v4472 = vunpack.c.h.b16 %v4173
        %v4473 = vunpack.c.l.b16 %v4174
        %v4474 = vunpack.c.h.b16 %v4174
        %v4475 = vunpack.c.l.b16 %v4175
        %v4476 = vunpack.c.h.b16 %v4175
        %v4477 = vunpack.c.l.b16 %v4176
        %v4478 = vunpack.c.h.b16 %v4176
        %v4479 = vunpack.c.l.b16 %v4177
        %v4480 = vunpack.c.h.b16 %v4177
        %v4481 = vunpack.c.l.b16 %v4178
        %v4482 = vunpack.c.h.b16 %v4178
        %v4483 = vunpack.c.l.b16 %v4179
        %v4484 = vunpack.c.h.b16 %v4179
        %v4485 = vunpack.c.l.b16 %v4180
        %v4486 = vunpack.c.h.b16 %v4180
        %v4487 = vunpack.c.l.b16 %v4181
        %v4488 = vunpack.c.h.b16 %v4181
        %v4489 = vunpack.c.l.b16 %v4182
        %v4490 = vunpack.c.h.b16 %v4182
        %v4491 = vunpack.c.l.b16 %v4183
        %v4492 = vunpack.c.h.b16 %v4183
        %v4493 = vunpack.c.l.b16 %v4184
        %v4494 = vunpack.c.h.b16 %v4184
        %v4495 = vunpack.c.l.b16 %v4185
        %v4496 = vunpack.c.h.b16 %v4185
        %v4497 = vunpack.c.l.b16 %v4186
        %v4498 = vunpack.c.h.b16 %v4186
        %v4499 = vunpack.c.l.b16 %v4187
        %v4500 = vunpack.c.h.b16 %v4187
        %v4501 = vunpack.c.l.b16 %v4188
        %v4502 = vunpack.c.h.b16 %v4188
        %v4503 = vunpack.c.l.b16 %v4189
        %v4504 = vunpack.c.h.b16 %v4189
        %v4505 = vunpack.c.l.b16 %v4190
        %v4506 = vunpack.c.h.b16 %v4190
        %v4507 = vunpack.c.l.b16 %v4191
        %v4508 = vunpack.c.h.b16 %v4191
        %v4509 = vunpack.c.l.b16 %v4192
        %v4510 = vunpack.c.h.b16 %v4192
        %v4511 = vunpack.c.l.b16 %v4193
        %v4512 = vunpack.c.h.b16 %v4193
        %v4513 = vunpack.c.l.b16 %v4194
        %v4514 = vunpack.c.h.b16 %v4194
        %v4515 = vunpack.c.l.b16 %v4195
        %v4516 = vunpack.c.h.b16 %v4195
        %v4517 = vunpack.c.l.b16 %v4196
        %v4518 = vunpack.c.h.b16 %v4196
        %v4519 = vunpack.c.l.b16 %v4197
        %v4520 = vunpack.c.h.b16 %v4197
        %v4521 = vunpack.c.l.b16 %v4198
        %v4522 = vunpack.c.h.b16 %v4198
        %v4523 = vunpack.c.l.b16 %v4199
        %v4524 = vunpack.c.h.b16 %v4199
        %v4525 = vunpack.c.l.b16 %v4200
        %v4526 = vunpack.c.h.b16 %v4200
        %v4527 = vunpack.c.l.b16 %v4201
        %v4528 = vunpack.c.h.b16 %v4201
        %v4529 = vunpack.c.l.b16 %v4202
        %v4530 = vunpack.c.h.b16 %v4202
        %v4531 = vunpack.c.l.b16 %v4203
        %v4532 = vunpack.c.h.b16 %v4203
        %v4533 = vunpack.c.l.b16 %v4204
        %v4534 = vunpack.c.h.b16 %v4204
        %v4535 = vpack.c.b16 %v4327, %v4319
        %v4536 = vpack.c.b16 %v4328, %v4320
        %v4537 = vpack.c.b16 %v4329, %v4321
        %v4538 = vpack.c.b16 %v4330, %v4322
        %v4539 = vpack.c.b16 %v4331, %v4323
        %v4540 = vpack.c.b16 %v4332, %v4324
        %v4541 = vpack.c.b16 %v4333, %v4325
        %v4542 = vpack.c.b16 %v4334, %v4326
        %v4543 = vpack.c.b16 %v4343, %v4335
        %v4544 = vpack.c.b16 %v4344, %v4336
        %v4545 = vpack.c.b16 %v4345, %v4337
        %v4546 = vpack.c.b16 %v4346, %v4338
        %v4547 = vpack.c.b16 %v4347, %v4339
        %v4548 = vpack.c.b16 %v4348, %v4340
        %v4549 = vpack.c.b16 %v4349, %v4341
        %v4550 = vpack.c.b16 %v4350, %v4342
        %v4551 = vpack.c.b16 %v4359, %v4351
        %v4552 = vpack.c.b16 %v4360, %v4352
        %v4553 = vpack.c.b16 %v4361, %v4353
        %v4554 = vpack.c.b16 %v4362, %v4354
        %v4555 = vpack.c.b16 %v4363, %v4355
        %v4556 = vpack.c.b16 %v4364, %v4356
        %v4557 = vpack.c.b16 %v4365, %v4357
        %v4558 = vpack.c.b16 %v4366, %v4358
        %v4559 = vpack.c.b16 %v4375, %v4367
        %v4560 = vpack.c.b16 %v4376, %v4368
        %v4561 = vpack.c.b16 %v4377, %v4369
        %v4562 = vpack.c.b16 %v4378, %v4370
        %v4563 = vpack.c.b16 %v4379, %v4371
        %v4564 = vpack.c.b16 %v4380, %v4372
        %v4565 = vpack.c.b16 %v4381, %v4373
        %v4566 = vpack.c.b16 %v4382, %v4374
        %v4567 = vpack.c.b16 %v4391, %v4383
        %v4568 = vpack.c.b16 %v4392, %v4384
        %v4569 = vpack.c.b16 %v4393, %v4385
        %v4570 = vpack.c.b16 %v4394, %v4386
        %v4571 = vpack.c.b16 %v4395, %v4387
        %v4572 = vpack.c.b16 %v4396, %v4388
        %v4573 = vpack.c.b16 %v4397, %v4389
        %v4574 = vpack.c.b16 %v4398, %v4390
        %v4575 = vpack.c.b16 %v4407, %v4399
        %v4576 = vpack.c.b16 %v4408, %v4400
        %v4577 = vpack.c.b16 %v4409, %v4401
        %v4578 = vpack.c.b16 %v4410, %v4402
        %v4579 = vpack.c.b16 %v4411, %v4403
        %v4580 = vpack.c.b16 %v4412, %v4404
        %v4581 = vpack.c.b16 %v4413, %v4405
        %v4582 = vpack.c.b16 %v4414, %v4406
        %v4583 = vpack.c.b16 %v4423, %v4415
        %v4584 = vpack.c.b16 %v4424, %v4416
        %v4585 = vpack.c.b16 %v4425, %v4417
        %v4586 = vpack.c.b16 %v4426, %v4418
        %v4587 = vpack.c.b16 %v4427, %v4419
        %v4588 = vpack.c.b16 %v4428, %v4420
        %v4589 = vpack.c.b16 %v4429, %v4421
        %v4590 = vpack.c.b16 %v4430, %v4422
        %v4591 = vpack.c.b16 %v4439, %v4431
        %v4592 = vpack.c.b16 %v4440, %v4432
        %v4593 = vpack.c.b16 %v4441, %v4433
        %v4594 = vpack.c.b16 %v4442, %v4434
        %v4595 = vpack.c.b16 %v4443, %v4435
        %v4596 = vpack.c.b16 %v4444, %v4436
        %v4597 = vpack.c.b16 %v4445, %v4437
        %v4598 = vpack.c.b16 %v4446, %v4438
        %v4599 = vpack.c.b16 %v4455, %v4447
        %v4600 = vpack.c.b16 %v4456, %v4448
        %v4601 = vpack.c.b16 %v4457, %v4449
        %v4602 = vpack.c.b16 %v4458, %v4450
        %v4603 = vpack.c.b16 %v4459, %v4451
        %v4604 = vpack.c.b16 %v4460, %v4452
        %v4605 = vpack.c.b16 %v4461, %v4453
        %v4606 = vpack.c.b16 %v4462, %v4454
        %v4607 = vpack.c.b16 %v4471, %v4463
        %v4608 = vpack.c.b16 %v4472, %v4464
        %v4609 = vpack.c.b16 %v4473, %v4465
        %v4610 = vpack.c.b16 %v4474, %v4466
        %v4611 = vpack.c.b16 %v4475, %v4467
        %v4612 = vpack.c.b16 %v4476, %v4468
        %v4613 = vpack.c.b16 %v4477, %v4469
        %v4614 = vpack.c.b16 %v4478, %v4470
        %v4615 = vpack.c.b16 %v4487, %v4479
        %v4616 = vpack.c.b16 %v4488, %v4480
        %v4617 = vpack.c.b16 %v4489, %v4481
        %v4618 = vpack.c.b16 %v4490, %v4482
        %v4619 = vpack.c.b16 %v4491, %v4483
        %v4620 = vpack.c.b16 %v4492, %v4484
        %v4621 = vpack.c.b16 %v4493, %v4485
        %v4622 = vpack.c.b16 %v4494, %v4486
        %v4623 = vpack.c.b16 %v4503, %v4495
        %v4624 = vpack.c.b16 %v4504, %v4496
        %v4625 = vpack.c.b16 %v4505, %v4497
        %v4626 = vpack.c.b16 %v4506, %v4498
        %v4627 = vpack.c.b16 %v4507, %v4499
        %v4628 = vpack.c.b16 %v4508, %v4500
        %v4629 = vpack.c.b16 %v4509, %v4501
        %v4630 = vpack.c.b16 %v4510, %v4502
        %v4631 = vpack.c.b16 %v4519, %v4511
        %v4632 = vpack.c.b16 %v4520, %v4512
        %v4633 = vpack.c.b16 %v4521, %v4513
        %v4634 = vpack.c.b16 %v4522, %v4514
        %v4635 = vpack.c.b16 %v4523, %v4515
        %v4636 = vpack.c.b16 %v4524, %v4516
        %v4637 = vpack.c.b16 %v4525, %v4517
        %v4638 = vpack.c.b16 %v4526, %v4518
        %v4639 = vpack.c.b16 %v4527, %v4527
        %v4640 = vpack.c.b16 %v4528, %v4528
        %v4641 = vpack.c.b16 %v4529, %v4529
        %v4642 = vpack.c.b16 %v4530, %v4530
        %v4643 = vpack.c.b16 %v4531, %v4531
        %v4644 = vpack.c.b16 %v4532, %v4532
        %v4645 = vpack.c.b16 %v4533, %v4533
        %v4646 = vpack.c.b16 %v4534, %v4534
        %vm4751 = vcmask 719872
        %v4753 = vsel %vm4751, %v4209, 0
        %vm4755 = vcmask 1043456
        %v4757 = vsel %vm4755, %v4639, 0
        %v4760 = vsel %vm4755, %v4640, 0
        %v4763 = vsel %vm4755, %v4641, 0
        %v4766 = vsel %vm4755, %v4642, 0
        %v4769 = vsel %vm4755, %v4643, 0
        %v4772 = vsel %vm4755, %v4644, 0
        %v4775 = vsel %vm4755, %v4645, 0
        %v4778 = vsel %vm4755, %v4646, 0
        %4780 = vmatprep.subr.bf16.mxu0 %v4592
        %4781 = vmatpush1.bf16.msra.mxu0 %v4591
        %4782 = vmatprep.subr.bf16.mxu0 %v4584
        %4783 = vmatpush1.bf16.msra.mxu0 %v4583
        %4784 = vmatprep.subr.bf16.mxu0 %v4576
        %4785 = vmatpush1.bf16.msra.mxu0 %v4575
        %4786 = vmatprep.subr.bf16.mxu0 %v4568
        %4787 = vmatpush1.bf16.msra.mxu0 %v4567
        %4788 = vmatprep.subr.bf16.mxu0 %v4560
        %4789 = vmatpush1.bf16.msra.mxu0 %v4559
        %4790 = vmatprep.subr.bf16.mxu0 %v4552
        %4791 = vmatpush1.bf16.msra.mxu0 %v4551
        %4792 = vmatprep.subr.bf16.mxu0 %v4544
        %4793 = vmatpush1.bf16.msra.mxu0 %v4543
        %4794 = vmatprep.subr.bf16.mxu0 %v4536
        %4795 = vmatpush1.bf16.msra.mxu0 %v4535
        %4796 = vmatprep.subr.bf16.mxu0 0
        %4797 = vmatpush2.bf16.msra.mxu0 0
        %4798 = vmatprep.subr.bf16.mxu0 0
        %4799 = vmatpush2.bf16.msra.mxu0 0
        %4800 = vmatprep.subr.bf16.mxu0 %v4760
        %4801 = vmatpush2.bf16.msra.mxu0 %v4757
        %4802 = vmatprep.subr.bf16.mxu0 %v4632
        %4803 = vmatpush2.bf16.msra.mxu0 %v4631
        %4804 = vmatprep.subr.bf16.mxu0 %v4624
        %4805 = vmatpush2.bf16.msra.mxu0 %v4623
        %4806 = vmatprep.subr.bf16.mxu0 %v4616
        %4807 = vmatpush2.bf16.msra.mxu0 %v4615
        %4808 = vmatprep.subr.bf16.mxu0 %v4608
        %4809 = vmatpush2.bf16.msra.mxu0 %v4607
        %4810 = vmatprep.subr.bf16.mxu0 %v4600
        %4811 = vmatpush2.bf16.msra.mxu0 %v4599
        %4812 = vmatprep.mubr.bf16.mxu0 %v4753
        %4813 = vmatmul.mubr.bf16.gmra.mxu0 %v4208
        %v4814 = vpop.f32.mrf.mxu0
        %v4815 = vadd.f32 0.0, %v4814
        %v4816 = vpop.f32.mrf.mxu0
        %v4817 = vadd.f32 0.0, %v4816
        %v4818 = vpop.f32.mrf.mxu0
        %v4819 = vpop.f32.mrf.mxu0
        %4820 = vdwg.mxu0
        %4821 = vmatprep.subr.bf16.mxu0 %v4594
        %4822 = vmatpush1.bf16.msra.mxu0 %v4593
        %4823 = vmatprep.subr.bf16.mxu0 %v4586
        %4824 = vmatpush1.bf16.msra.mxu0 %v4585
        %4825 = vmatprep.subr.bf16.mxu0 %v4578
        %4826 = vmatpush1.bf16.msra.mxu0 %v4577
        %4827 = vmatprep.subr.bf16.mxu0 %v4570
        %4828 = vmatpush1.bf16.msra.mxu0 %v4569
        %4829 = vmatprep.subr.bf16.mxu0 %v4562
        %4830 = vmatpush1.bf16.msra.mxu0 %v4561
        %4831 = vmatprep.subr.bf16.mxu0 %v4554
        %4832 = vmatpush1.bf16.msra.mxu0 %v4553
        %4833 = vmatprep.subr.bf16.mxu0 %v4546
        %4834 = vmatpush1.bf16.msra.mxu0 %v4545
        %4835 = vmatprep.subr.bf16.mxu0 %v4538
        %4836 = vmatpush1.bf16.msra.mxu0 %v4537
        %4837 = vmatprep.subr.bf16.mxu0 0
        %4838 = vmatpush2.bf16.msra.mxu0 0
        %4839 = vmatprep.subr.bf16.mxu0 0
        %4840 = vmatpush2.bf16.msra.mxu0 0
        %4841 = vmatprep.subr.bf16.mxu0 %v4766
        %4842 = vmatpush2.bf16.msra.mxu0 %v4763
        %4843 = vmatprep.subr.bf16.mxu0 %v4634
        %4844 = vmatpush2.bf16.msra.mxu0 %v4633
        %4845 = vmatprep.subr.bf16.mxu0 %v4626
        %4846 = vmatpush2.bf16.msra.mxu0 %v4625
        %4847 = vmatprep.subr.bf16.mxu0 %v4618
        %4848 = vmatpush2.bf16.msra.mxu0 %v4617
        %4849 = vmatprep.subr.bf16.mxu0 %v4610
        %4850 = vmatpush2.bf16.msra.mxu0 %v4609
        %4851 = vmatprep.subr.bf16.mxu0 %v4602
        %4852 = vmatpush2.bf16.msra.mxu0 %v4601
        %4853 = vmatprep.mubr.bf16.mxu0 %v4753
        %4854 = vmatmul.mubr.bf16.gmra.mxu0 %v4208
        %v4855 = vpop.f32.mrf.mxu0
        %v4856 = vadd.f32 0.0, %v4855
        %v4857 = vpop.f32.mrf.mxu0
        %v4858 = vadd.f32 0.0, %v4857
        %v4859 = vpop.f32.mrf.mxu0
        %v4860 = vpop.f32.mrf.mxu0
        %4861 = vdwg.mxu0
        %4862 = vmatprep.subr.bf16.mxu0 %v4596
        %4863 = vmatpush1.bf16.msra.mxu0 %v4595
        %4864 = vmatprep.subr.bf16.mxu0 %v4588
        %4865 = vmatpush1.bf16.msra.mxu0 %v4587
        %4866 = vmatprep.subr.bf16.mxu0 %v4580
        %4867 = vmatpush1.bf16.msra.mxu0 %v4579
        %4868 = vmatprep.subr.bf16.mxu0 %v4572
        %4869 = vmatpush1.bf16.msra.mxu0 %v4571
        %4870 = vmatprep.subr.bf16.mxu0 %v4564
        %4871 = vmatpush1.bf16.msra.mxu0 %v4563
        %4872 = vmatprep.subr.bf16.mxu0 %v4556
        %4873 = vmatpush1.bf16.msra.mxu0 %v4555
        %4874 = vmatprep.subr.bf16.mxu0 %v4548
        %4875 = vmatpush1.bf16.msra.mxu0 %v4547
        %4876 = vmatprep.subr.bf16.mxu0 %v4540
        %4877 = vmatpush1.bf16.msra.mxu0 %v4539
        %4878 = vmatprep.subr.bf16.mxu0 0
        %4879 = vmatpush2.bf16.msra.mxu0 0
        %4880 = vmatprep.subr.bf16.mxu0 0
        %4881 = vmatpush2.bf16.msra.mxu0 0
        %4882 = vmatprep.subr.bf16.mxu0 %v4772
        %4883 = vmatpush2.bf16.msra.mxu0 %v4769
        %4884 = vmatprep.subr.bf16.mxu0 %v4636
        %4885 = vmatpush2.bf16.msra.mxu0 %v4635
        %4886 = vmatprep.subr.bf16.mxu0 %v4628
        %4887 = vmatpush2.bf16.msra.mxu0 %v4627
        %4888 = vmatprep.subr.bf16.mxu0 %v4620
        %4889 = vmatpush2.bf16.msra.mxu0 %v4619
        %4890 = vmatprep.subr.bf16.mxu0 %v4612
        %4891 = vmatpush2.bf16.msra.mxu0 %v4611
        %4892 = vmatprep.subr.bf16.mxu0 %v4604
        %4893 = vmatpush2.bf16.msra.mxu0 %v4603
        %4894 = vmatprep.mubr.bf16.mxu0 %v4753
        %4895 = vmatmul.mubr.bf16.gmra.mxu0 %v4208
        %v4896 = vpop.f32.mrf.mxu0
        %v4897 = vadd.f32 0.0, %v4896
        %v4898 = vpop.f32.mrf.mxu0
        %v4899 = vadd.f32 0.0, %v4898
        %v4900 = vpop.f32.mrf.mxu0
        %v4901 = vpop.f32.mrf.mxu0
        %4902 = vdwg.mxu0
        %4903 = vmatprep.subr.bf16.mxu0 %v4598
        %4904 = vmatpush1.bf16.msra.mxu0 %v4597
        %4905 = vmatprep.subr.bf16.mxu0 %v4590
        %4906 = vmatpush1.bf16.msra.mxu0 %v4589
        %4907 = vmatprep.subr.bf16.mxu0 %v4582
        %4908 = vmatpush1.bf16.msra.mxu0 %v4581
        %4909 = vmatprep.subr.bf16.mxu0 %v4574
        %4910 = vmatpush1.bf16.msra.mxu0 %v4573
        %4911 = vmatprep.subr.bf16.mxu0 %v4566
        %4912 = vmatpush1.bf16.msra.mxu0 %v4565
        %4913 = vmatprep.subr.bf16.mxu0 %v4558
        %4914 = vmatpush1.bf16.msra.mxu0 %v4557
        %4915 = vmatprep.subr.bf16.mxu0 %v4550
        %4916 = vmatpush1.bf16.msra.mxu0 %v4549
        %4917 = vmatprep.subr.bf16.mxu0 %v4542
        %4918 = vmatpush1.bf16.msra.mxu0 %v4541
        %4919 = vmatprep.subr.bf16.mxu0 0
        %4920 = vmatpush2.bf16.msra.mxu0 0
        %4921 = vmatprep.subr.bf16.mxu0 0
        %4922 = vmatpush2.bf16.msra.mxu0 0
        %4923 = vmatprep.subr.bf16.mxu0 %v4778
        %4924 = vmatpush2.bf16.msra.mxu0 %v4775
        %4925 = vmatprep.subr.bf16.mxu0 %v4638
        %4926 = vmatpush2.bf16.msra.mxu0 %v4637
        %4927 = vmatprep.subr.bf16.mxu0 %v4630
        %4928 = vmatpush2.bf16.msra.mxu0 %v4629
        %4929 = vmatprep.subr.bf16.mxu0 %v4622
        %4930 = vmatpush2.bf16.msra.mxu0 %v4621
        %4931 = vmatprep.subr.bf16.mxu0 %v4614
        %4932 = vmatpush2.bf16.msra.mxu0 %v4613
        %4933 = vmatprep.subr.bf16.mxu0 %v4606
        %4934 = vmatpush2.bf16.msra.mxu0 %v4605
        %4935 = vmatprep.mubr.bf16.mxu0 %v4753
        %4936 = vmatmul.mubr.bf16.gmra.mxu0 %v4208
        %v4937 = vpop.f32.mrf.mxu0
        %v4938 = vadd.f32 0.0, %v4937
        %v4939 = vpop.f32.mrf.mxu0
        %v4940 = vadd.f32 0.0, %v4939
        %v4941 = vpop.f32.mrf.mxu0
        %v4942 = vpop.f32.mrf.mxu0
        %4943 = vdwg.mxu0
        %v4944 = vmul.f32 %v4815, %v2803
        %v4945 = vmul.f32 %v4817, %v2807
        %v4946 = vmul.f32 %v4856, %v2811
        %v4947 = vmul.f32 %v4858, %v2815
        %v4948 = vmul.f32 %v4897, %v2819
        %v4949 = vmul.f32 %v4899, %v2823
        %v4950 = vmul.f32 %v4938, %v2827
        %v4951 = vmul.f32 %v4940, %v2831
        %v4952 = vadd.f32 %v4944, %v4945
        %v4953 = vadd.f32 %v4952, %v4946
        %v4954 = vadd.f32 %v4953, %v4947
        %v4955 = vadd.f32 %v4954, %v4948
        %v4956 = vadd.f32 %v4955, %v4949
        %v4957 = vadd.f32 %v4956, %v4950
        %v4958 = vadd.f32 %v4957, %v4951
        %4959 = vadd.xlane.f32.xlu0 %v4958
        %v4960 = vpop.xlane.xlu0 %4959
        %v4961 = vmul.f32 %v4944, %v4815
        %v4962 = vmul.f32 %v4945, %v4817
        %v4963 = vmul.f32 %v4946, %v4856
        %v4964 = vmul.f32 %v4947, %v4858
        %v4965 = vmul.f32 %v4948, %v4897
        %v4966 = vmul.f32 %v4949, %v4899
        %v4967 = vmul.f32 %v4950, %v4938
        %v4968 = vmul.f32 %v4951, %v4940
        %v4969 = vadd.f32 %v4961, %v4962
        %v4970 = vadd.f32 %v4969, %v4963
        %v4971 = vadd.f32 %v4970, %v4964
        %v4972 = vadd.f32 %v4971, %v4965
        %v4973 = vadd.f32 %v4972, %v4966
        %v4974 = vadd.f32 %v4973, %v4967
        %v4975 = vadd.f32 %v4974, %v4968
        %4976 = vadd.xlane.f32.xlu0 %v4975
        %v4977 = vpop.xlane.xlu0 %4976
        %v4978 = vmul.f32 %v4960, 0.001953125
        %v4979 = vmul.f32 %v4977, 0.001953125
        %v4980 = vmul.f32 %v4978, %v4978
        %v4981 = vsub.f32 %v4979, %v4980
        %v4982 = vmax.f32 %v4981, 0.0
        %v4983 = vadd.f32 %v4982, 1e-05
        %v4984 = vrsqrt.pop %v4983
        %v4985 = vsub.f32 %v4815, %v4978
        %v4986 = vsub.f32 %v4817, %v4978
        %v4987 = vsub.f32 %v4856, %v4978
        %v4988 = vsub.f32 %v4858, %v4978
        %v4989 = vsub.f32 %v4897, %v4978
        %v4990 = vsub.f32 %v4899, %v4978
        %v4991 = vsub.f32 %v4938, %v4978
        %v4992 = vsub.f32 %v4940, %v4978
        %v4993 = vmul.f32 %v4985, %v4984
        %v4994 = vmul.f32 %v4986, %v4984
        %v4995 = vmul.f32 %v4987, %v4984
        %v4996 = vmul.f32 %v4988, %v4984
        %v4997 = vmul.f32 %v4989, %v4984
        %v4998 = vmul.f32 %v4990, %v4984
        %v4999 = vmul.f32 %v4991, %v4984
        %v5000 = vmul.f32 %v4992, %v4984
        %v5001 = vmax.f32 %v4993, 0.0
        %v5002 = vmax.f32 %v4994, 0.0
        %v5003 = vmax.f32 %v4995, 0.0
        %v5004 = vmax.f32 %v4996, 0.0
        %v5005 = vmax.f32 %v4997, 0.0
        %v5006 = vmax.f32 %v4998, 0.0
        %v5007 = vmax.f32 %v4999, 0.0
        %v5008 = vmax.f32 %v5000, 0.0
        %v5009 = vmul.f32 %v5001, %v2803
        %v5010 = vmul.f32 %v5002, %v2807
        %v5011 = vmul.f32 %v5003, %v2811
        %v5012 = vmul.f32 %v5004, %v2815
        %v5013 = vmul.f32 %v5005, %v2819
        %v5014 = vmul.f32 %v5006, %v2823
        %v5015 = vmul.f32 %v5007, %v2827
        %v5016 = vmul.f32 %v5008, %v2831
        %v5017 = vadd.f32 %v5009, %v2978
        %v5018 = vadd.f32 %v5010, %v2979
        %v5019 = vadd.f32 %v5011, %v2980
        %v5020 = vadd.f32 %v5012, %v2981
        %v5021 = vadd.f32 %v5013, %v2982
        %v5022 = vadd.f32 %v5014, %v2983
        %v5023 = vadd.f32 %v5015, %v2984
        %v5024 = vadd.f32 %v5016, %v2985
        %5025 = vst [vmem:[%s253] sm:$0xff] %v5017
        %5026 = vst [vmem:[%s253 + $0x8] sm:$0xff] %v5018
        %5027 = vst [vmem:[%s253 + $0x10] sm:$0xff] %v5019
        %5028 = vst [vmem:[%s253 + $0x18] sm:$0xff] %v5020
        %5029 = vst [vmem:[%s253 + $0x20] sm:$0xff] %v5021
        %5030 = vst [vmem:[%s253 + $0x28] sm:$0xff] %v5022
        %5031 = vst [vmem:[%s253 + $0x30] sm:$0xff] %v5023
        %5032 = vst [vmem:[%s253 + $0x38] sm:$0xff] %v5024
        %s5033 = sand.u32 %s120, 1
        %s5034 = scalar_lea.sflag [#allocation7], %s5033
        %s5035 = sand.u32 %s120, 1
        %s5036 = smul.addr %s5035, 64
        %s5037 = scalar_lea.vmem [#allocation13], %s5036
        // Predicated region
        $region53: #{tpu_custom_call.1} parent=35 // pred_check
          %p5038 = pneg %p130
        $region54: #{tpu_custom_call.1} parent=35 // pred_check_branch
          %5040 = sbr.rel (%p5038) target = $region56
        $region55: #{tpu_custom_call.1} parent=35 // pred_region
          %s5042 = ssub.s32 1024, 1024
          %5043 = vsyncadd %s5034, %s5042
          %s5044 = smul.addr %s23, 8
          %s5045 = smul.addr %s5044, 128
          %s5046 = scalar_lea.hbm %s4, %s5045
          %s5048 = sshll.u32 %s5037, 4
          %s5049 = int_to_ptr.vmem [resolvable:$true] %s5048
          %5051 = dma.vmem_to_hbm [thread:$0]  %s5049, 1024, %s5046, %s5034
        $region56: #{tpu_custom_call.1} parent=35 // pred_fallthru
          _
      $region36: #{tpu_custom_call.1} parent=5 // pred_fallthru
        _
      %p5052 = scmp.le.s32.totalorder 2, %s18
      // Predicated region
      $region57: #{tpu_custom_call.1} parent=5 // pred_check
        %p5053 = pneg %p5052
      $region58: #{tpu_custom_call.1} parent=5 // pred_check_branch
        %5055 = sbr.rel (%p5053) target = $region60
      $region59: #{tpu_custom_call.1} parent=5 // pred_region
        %s5056 = ssub.s32 %s18, 2
        // Predicated region
        $region61: #{tpu_custom_call.1} parent=59 // pred_check
          %p5057 = pneg %p136
        $region62: #{tpu_custom_call.1} parent=59 // pred_check_branch
          %5059 = sbr.rel (%p5057) target = $region64
        $region63: #{tpu_custom_call.1} parent=59 // pred_region
          %s5060 = sand.u32 %s121, 1
          %s5061 = scalar_lea.sflag [#allocation7], %s5060
          %s5062 = sand.u32 %s121, 1
          %s5063 = smul.addr %s5062, 64
          %s5064 = scalar_lea.vmem [#allocation13], %s5063
          %5065 = dma.done %s5061, 1024
        $region64: #{tpu_custom_call.1} parent=59 // pred_fallthru
          _
      $region60: #{tpu_custom_call.1} parent=5 // pred_fallthru
        _
    $region6: #{tpu_custom_call.1} parent=1 // loop_footer
      %s22 = sadd.s32 1, %s18
    $region7: #{tpu_custom_call.1} parent=1 // loop_footer_branch
      %17 = sbr.rel target = $region3
    $region8: #{tpu_custom_call.1} parent=1 // loop_exit
      _
    %5066 = vsyncpa [#allocation6], 1
    %s5067 = scalar_lea.sflag [#allocation6], 1
    %5068 = vsyncpa %s5067, 1
    %5069 = vsyncpa [#allocation9], 1
    %s5070 = scalar_lea.sflag [#allocation9], 1
    %5071 = vsyncpa %s5070, 1
    %5072 = vsyncpa [#allocation12], 1
    %5073 = vsyncpa [#allocation7], 1
    %s5074 = scalar_lea.sflag [#allocation7], 1
    %5075 = vsyncpa %s5074, 1

</llo_original>
